<compile_context>
chip_gen: v7x
topology: tpu7x:2x2x1
jax: 0.10.0
libtpu: 0.0.40
codegen_flags: <defaults>
</compile_context>

<pallas_src>
import jax
import jax.numpy as jnp
from jax.experimental import pallas as pl
from jax.experimental.pallas import tpu as pltpu


# --------------------------------------------------------------------------
# Kernel
# --------------------------------------------------------------------------
def _make_transition_kernel(num_linear, out_dims, n_dis, n_cls, uniform,
                            hi_precision=True, eps=1e-3):
    """`num_linear` Linear layers with LayerNorm(eps=1e-3)+SiLU between them
    (none after the last), followed by a per-group (n_cls-wide) log-softmax
    and optional uniform mixing."""
    is_pow2 = (n_cls & (n_cls - 1)) == 0 and n_cls > 0
    shift = max(n_cls.bit_length() - 1, 0)
    prec = jax.lax.Precision.HIGHEST if hi_precision else None

    def kernel(h_ref, s_ref, st_ref, vecs_ref, *rest):
        out_ref = rest[-1]
        w_refs = rest[:-1]

        # ---- MLP: Linear [+ LayerNorm + SiLU] * (L-1), plain Linear last ----
        x = h_ref[...]                                      # (Bt, h_dim) f32
        for i in range(num_linear):
            w = w_refs[i][...]                              # (in, out) compute dtype
            width = out_dims[i]
            b = vecs_ref[i:i + 1, :width]                   # (1, out) f32
            x = jnp.dot(x.astype(w.dtype), w,
                        preferred_element_type=jnp.float32,
                        precision=prec) + b
            if i < num_linear - 1:
                gamma = vecs_ref[num_linear + i:num_linear + i + 1, :width]
                beta = vecs_ref[2 * num_linear - 1 + i:2 * num_linear + i, :width]
                mu = jnp.mean(x, axis=-1, keepdims=True)
                xc = x - mu                                 # centered -> stable var
                var = jnp.mean(xc * xc, axis=-1, keepdims=True)
                x = xc * jax.lax.rsqrt(var + eps) * gamma + beta
                x = x * jax.nn.sigmoid(x)                   # SiLU

        # ---- per-group (n_cls-wide) log-softmax on flat (Bt, W) logits ----
        z = x
        bt = z.shape[0]
        col = jax.lax.broadcasted_iota(jnp.int32, z.shape, dimension=1)
        group = (col >> shift) if is_pow2 else (col // n_cls)

        # Narrow (Bt, n_dis) per-group maxima: masked full-width max reductions
        # only — no full-width scatter-back (that was the VPU hotspot).
        gidx = jax.lax.broadcasted_iota(jnp.int32, (bt, n_dis), 1)
        gmax_g = jnp.zeros((bt, n_dis), jnp.float32)
        for g in range(n_dis):
            mg = jnp.max(jnp.where(group == g, z, -jnp.inf),
                         axis=-1, keepdims=True)            # (Bt, 1)
            gmax_g = jnp.where(gidx == g, mg, gmax_g)

        # Broadcast group maxima back to full width on the MXU (ST is 0/1).
        gmax = jnp.dot(gmax_g, st_ref[...],
                       preferred_element_type=jnp.float32, precision=prec)
        zm = z - gmax
        e = jnp.exp(zm)                                     # single EUP pass
        # Per-group sums via MXU segment-sum (S: (W, n_dis) 0/1 indicator).
        ssum = jnp.dot(e, s_ref[...],
                       preferred_element_type=jnp.float32, precision=prec)

        if uniform:
            # Reuse e and the group sums; EXACT reciprocal (the approx vrcp
            # previously biased probs before the log and failed the check).
            inv = 1.0 / ssum                                # (Bt, n_dis)
            probs = e * jnp.dot(inv, st_ref[...],
                                preferred_element_type=jnp.float32,
                                precision=prec)
            logp = jnp.log((1.0 - uniform) * probs + uniform / n_cls)
        else:
            lsb = jnp.dot(jnp.log(ssum), st_ref[...],
                          preferred_element_type=jnp.float32, precision=prec)
            logp = zm - lsb

        out_ref[...] = logp.astype(out_ref.dtype)

    return kernel


# --------------------------------------------------------------------------
# One-time parameter preprocessing (hoisted out of the per-call wrapper)
# --------------------------------------------------------------------------
def prepare_transition(params, *, ls, compute_dtype=jnp.bfloat16):
    """Cast weights once, pack all (1,N) vectors into one slab, and build the
    segment-sum / broadcast indicator matrices."""
    n_dis, n_cls = ls
    ws = [jnp.asarray(w) for w in params["ws"]]
    bs = [jnp.asarray(b) for b in params["bs"]]
    gammas = [jnp.asarray(g) for g in params["gammas"]]
    betas = [jnp.asarray(b) for b in params["betas"]]
    num_linear = len(ws)
    out_width = n_dis * n_cls
    assert ws[-1].shape[1] == out_width
    out_dims = tuple(int(w.shape[1]) for w in ws)
    h_dim = int(ws[0].shape[0])
    max_w = max(out_dims)

    # Pack biases, gammas, betas into one (n_vec, max_w) f32 slab (row order:
    # biases[0..L-1], gammas[0..L-2], betas[0..L-2]); zero-padded to max_w.
    rows = []
    for v in list(bs) + list(gammas) + list(betas):
        v = v.reshape(-1).astype(jnp.float32)
        rows.append(jnp.pad(v, (0, max_w - v.shape[0])))
    vecs = jnp.stack(rows, axis=0)

    # Exact 0/1 indicator matrices for segment-sum (S) and broadcast (ST).
    col = jnp.arange(out_width)
    S = (col[:, None] // n_cls == jnp.arange(n_dis)[None, :]).astype(jnp.float32)
    ST = jnp.asarray(S.T)

    return dict(
        ws=[w.astype(compute_dtype) for w in ws],
        vecs=vecs, S=S, ST=ST,
        n_dis=int(n_dis), n_cls=int(n_cls), num_linear=num_linear,
        out_dims=out_dims, h_dim=h_dim, max_w=max_w,
        compute_dtype=compute_dtype,
    )


# --------------------------------------------------------------------------
# Forward wrapper
# --------------------------------------------------------------------------
def transition_forward(h, prep, *, uniform=0.0, b_tile=None,
                       out_dtype=jnp.float32):
    """Pallas-backed Transition.forward.  h: (B, h_dim) f32.
    Returns (B, n_dis, n_cls) log-probabilities (out_dtype)."""
    n_dis, n_cls = prep["n_dis"], prep["n_cls"]
    num_linear, out_dims = prep["num_linear"], prep["out_dims"]
    h_dim, max_w = prep["h_dim"], prep["max_w"]
    out_width = n_dis * n_cls
    ws, vecs, S, ST = prep["ws"], prep["vecs"], prep["S"], prep["ST"]

    B = h.shape[0]
    assert h.shape[1] == h_dim
    h = h.astype(jnp.float32)

    def _r8(x):
        return ((x + 7) // 8) * 8

    # ---- batch tile: large (512-1024) to amortize per-step overhead, but
    # guarantee >= 2 grid steps when possible so both v7x TCs get work ----
    if b_tile is None:
        br = _r8(B)
        b_tile = min(1024, br)
        if br > 8 and b_tile >= br:
            b_tile = max(8, _r8((br + 1) // 2))
    B_pad = ((B + b_tile - 1) // b_tile) * b_tile
    if B_pad != B:
        h = jnp.pad(h, ((0, B_pad - B), (0, 0)))
    grid = (B_pad // b_tile,)

    # ---- VMEM budget: resident weights/vectors (2x slack), 2x-buffered
    # h/out tiles, live activation temps; capped below physical VMEM ----
    w_item = jnp.dtype(prep["compute_dtype"]).itemsize
    bytes_w = sum(int(w.size) * w_item for w in ws)
    bytes_v = 4 * (int(S.size) + int(ST.size) + int(vecs.size))
    bytes_tiles = 2 * 4 * b_tile * (h_dim + out_width)
    bytes_tmp = 8 * 4 * b_tile * max_w
    est = 2 * (bytes_w + bytes_v) + bytes_tiles + bytes_tmp
    try:
        phys = int(pltpu.get_tpu_info().vmem_capacity_bytes)
    except Exception:
        phys = 64 << 20                       # conservative: v7x per-TC VMEM
    vmem_limit = int(min(max(32 << 20, 2 * est), phys - (8 << 20)))

    args = [h, S, ST, vecs] + list(ws)

    def _attempt(single_buffer_invariants, hi_precision):
        kernel = _make_transition_kernel(num_linear, out_dims, n_dis, n_cls,
                                         float(uniform),
                                         hi_precision=hi_precision)
        inv_kw = ({"pipeline_mode": pl.Buffered(1)}
                  if single_buffer_invariants else {})
        in_specs = [
            pl.BlockSpec((b_tile, h_dim), lambda i: (i, 0)),
            pl.BlockSpec(S.shape, lambda i: (0, 0), **inv_kw),
            pl.BlockSpec(ST.shape, lambda i: (0, 0), **inv_kw),
            pl.BlockSpec(vecs.shape, lambda i: (0, 0), **inv_kw),
        ]
        in_specs += [pl.BlockSpec(w.shape, lambda i: (0, 0), **inv_kw)
                     for w in ws]
        out_specs = pl.BlockSpec((b_tile, out_width), lambda i: (i, 0))
        return pl.pallas_call(
            kernel,
            out_shape=jax.ShapeDtypeStruct((B_pad, out_width), out_dtype),
            grid_spec=pltpu.PrefetchScalarGridSpec(
                num_scalar_prefetch=0, grid=grid,
                in_specs=in_specs, out_specs=out_specs),
            compiler_params=pltpu.CompilerParams(
                dimension_semantics=("parallel",),   # megacore sharding on v7x
                vmem_limit_bytes=vmem_limit),
        )(*args)

    try:
        out_flat = _attempt(True, True)
    except Exception:
        # Fallback: default double-buffering / default matmul precision.
        out_flat = _attempt(False, False)

    if B_pad != B:
        out_flat = out_flat[:B]
    return out_flat.reshape(B, n_dis, n_cls)


# --------------------------------------------------------------------------
# Pure-JAX reference (matches the PyTorch module semantics, f32)
# --------------------------------------------------------------------------
def transition_reference(h, params, *, ls, uniform=0.0):
    n_dis, n_cls = ls
    ws, bs = params["ws"], params["bs"]
    gammas, betas = params["gammas"], params["betas"]
    x = h.astype(jnp.float32)
    for i, (w, b) in enumerate(zip(ws, bs)):
        x = x @ w + b
        if i < len(ws) - 1:
            mu = jnp.mean(x, axis=-1, keepdims=True)
            var = jnp.mean((x - mu) ** 2, axis=-1, keepdims=True)
            x = (x - mu) / jnp.sqrt(var + 1e-3) * gammas[i] + betas[i]
            x = x * jax.nn.sigmoid(x)
    z = x.reshape(x.shape[0], n_dis, n_cls)
    logp = jax.nn.log_softmax(z, axis=-1)
    if uniform:
        logp = jnp.log((1.0 - uniform) * jnp.exp(logp) + uniform / n_cls)
    return logp


def init_params(key, h_dim, n_dis, n_cls, mlp_features, mlp_layers):
    """PyTorch-default-like init (Linear: U(-k,k), k=1/sqrt(fan_in);
    LayerNorm: gamma=1, beta=0). Weights stored as [in, out]."""
    out_features = n_dis * n_cls
    sizes = [h_dim] + [mlp_features] * (mlp_layers - 1) + [out_features]
    ws, bs, gammas, betas = [], [], [], []
    for i, (f_in, f_out) in enumerate(zip(sizes[:-1], sizes[1:])):
        key, kw, kb = jax.random.split(key, 3)
        bound = 1.0 / jnp.sqrt(jnp.float32(f_in))
        ws.append(jax.random.uniform(kw, (f_in, f_out), jnp.float32, -bound, bound))
        bs.append(jax.random.uniform(kb, (f_out,), jnp.float32, -bound, bound))
        if i < len(sizes) - 2:
            gammas.append(jnp.ones((f_out,), jnp.float32))
            betas.append(jnp.zeros((f_out,), jnp.float32))
    return {"ws": ws, "bs": bs, "gammas": gammas, "betas": betas}


if __name__ == "__main__":
    # Small config consistent with the module: ls=(n_dis, n_cls)=(8, 16),
    # h_dim=32, mlp_features=128, mlp_layers=2.
    ls = (8, 16)
    h_dim = 32
    mlp_features = 128
    mlp_layers = 2
    B = 20      # exercises padding + a 2-step ("parallel") grid

    key = jax.random.PRNGKey(0)
    key, kh = jax.random.split(key)
    h = jax.random.normal(kh, (B, h_dim), jnp.float32)
    params = init_params(key, h_dim, ls[0], ls[1], mlp_features, mlp_layers)

    ref = transition_reference(h, params, ls=ls, uniform=0.0)
    ref_u = transition_reference(h, params, ls=ls, uniform=0.1)

    # f32 path: tight agreement with the reference semantics (auto b_tile).
    prep_f32 = prepare_transition(params, ls=ls, compute_dtype=jnp.float32)
    out_f32 = jax.block_until_ready(transition_forward(h, prep_f32, uniform=0.0))
    assert out_f32.shape == (B, ls[0], ls[1])
    assert jnp.allclose(out_f32, ref, rtol=1e-4, atol=1e-4), "f32 kernel mismatch vs reference"

    # Uniform-mixing branch (exact reciprocal now -> previously failing check).
    out_u = jax.block_until_ready(transition_forward(h, prep_f32, uniform=0.1))
    assert jnp.allclose(out_u, ref_u, rtol=1e-3, atol=1e-3), "uniform branch mismatch"

    # Default bf16 MXU path (tolerance loosened for weight rounding).
    prep_bf16 = prepare_transition(params, ls=ls)      # bf16 weights
    out_bf = jax.block_until_ready(
        transition_forward(h, prep_bf16, uniform=0.0, b_tile=16))
    assert jnp.allclose(out_bf, ref, rtol=3e-2, atol=3e-2), "bf16 kernel mismatch vs reference"
    # Log-probs must normalize over the class axis regardless of bf16 logit error.
    assert jnp.allclose(jnp.sum(jnp.exp(out_bf), axis=-1), 1.0, atol=5e-4)

    print("KERNEL_OK")
</pallas_src>

<mosaic_0001>
module attributes {stable_mosaic.version = 11 : i64} {
  func.func @kernel(%arg0: i32, %arg1: memref<16x32xf32, #tpu.memory_space<vmem>>, %arg2: memref<128x8xf32, #tpu.memory_space<vmem>>, %arg3: memref<8x128xf32, #tpu.memory_space<vmem>>, %arg4: memref<4x128xf32, #tpu.memory_space<vmem>>, %arg5: memref<32x128xf32, #tpu.memory_space<vmem>>, %arg6: memref<128x128xf32, #tpu.memory_space<vmem>>, %arg7: memref<16x128xf32, #tpu.memory_space<vmem>>) attributes {dimension_semantics = [#tpu.dimension_semantics<parallel>], iteration_bounds = array<i64: 2>, scalar_prefetch = 0 : i64, scratch_operands = 0 : i64, tpu.core_type = #tpu.core_type<tc>, window_params = [{transform_indices = @transform_0, window_bounds = array<i64: 16, 32>}, {pipeline_mode = #tpu.pipeline_mode<synchronous>, transform_indices = @transform_1, window_bounds = array<i64: 128, 8>}, {pipeline_mode = #tpu.pipeline_mode<synchronous>, transform_indices = @transform_2, window_bounds = array<i64: 8, 128>}, {pipeline_mode = #tpu.pipeline_mode<synchronous>, transform_indices = @transform_3, window_bounds = array<i64: 4, 128>}, {pipeline_mode = #tpu.pipeline_mode<synchronous>, transform_indices = @transform_4, window_bounds = array<i64: 32, 128>}, {pipeline_mode = #tpu.pipeline_mode<synchronous>, transform_indices = @transform_5, window_bounds = array<i64: 128, 128>}, {transform_indices = @transform_6, window_bounds = array<i64: 16, 128>}]} {
    %c0 = arith.constant 0 : index
    %c0_0 = arith.constant 0 : index
    %0 = vector.load %arg1[%c0, %c0_0] : memref<16x32xf32, #tpu.memory_space<vmem>>, vector<16x32xf32>
    %c0_1 = arith.constant 0 : index
    %c0_2 = arith.constant 0 : index
    %1 = vector.load %arg5[%c0_1, %c0_2] : memref<32x128xf32, #tpu.memory_space<vmem>>, vector<32x128xf32>
    %c0_3 = arith.constant 0 : index
    %c0_4 = arith.constant 0 : index
    %2 = vector.load %arg4[%c0_3, %c0_4] : memref<4x128xf32, #tpu.memory_space<vmem>>, vector<1x128xf32>
    %cst = arith.constant dense<0.000000e+00> : vector<16x128xf32>
    %3 = tpu.matmul %0, %1, %cst {dimension_numbers = #tpu.dot_dimension_numbers<[1], [0], [0], [1], [0, 0, 1, 1], [], []>, precision = #tpu.contract_precision<fp32>} : vector<16x32xf32>, vector<32x128xf32>, vector<16x128xf32> -> vector<16x128xf32>
    %4 = vector.broadcast %2 : vector<1x128xf32> to vector<16x128xf32>
    %5 = arith.addf %3, %4 : vector<16x128xf32>
    %c2 = arith.constant 2 : index
    %c0_5 = arith.constant 0 : index
    %6 = vector.load %arg4[%c2, %c0_5] : memref<4x128xf32, #tpu.memory_space<vmem>>, vector<1x128xf32>
    %c3 = arith.constant 3 : index
    %c0_6 = arith.constant 0 : index
    %7 = vector.load %arg4[%c3, %c0_6] : memref<4x128xf32, #tpu.memory_space<vmem>>, vector<1x128xf32>
    %cst_7 = arith.constant dense<0.000000e+00> : vector<16xf32>
    %8 = vector.multi_reduction <add>, %5, %cst_7 [1] : vector<16x128xf32> to vector<16xf32>
    %9 = vector.shape_cast %8 : vector<16xf32> to vector<16x1xf32>
    %cst_8 = arith.constant 1.280000e+02 : f32
    %10 = vector.broadcast %cst_8 : f32 to vector<16x1xf32>
    %11 = arith.divf %9, %10 : vector<16x1xf32>
    %12 = vector.broadcast %11 : vector<16x1xf32> to vector<16x128xf32>
    %13 = arith.subf %5, %12 : vector<16x128xf32>
    %14 = arith.mulf %13, %13 : vector<16x128xf32>
    %cst_9 = arith.constant dense<0.000000e+00> : vector<16xf32>
    %15 = vector.multi_reduction <add>, %14, %cst_9 [1] : vector<16x128xf32> to vector<16xf32>
    %16 = vector.shape_cast %15 : vector<16xf32> to vector<16x1xf32>
    %cst_10 = arith.constant 1.280000e+02 : f32
    %17 = vector.broadcast %cst_10 : f32 to vector<16x1xf32>
    %18 = arith.divf %16, %17 : vector<16x1xf32>
    %cst_11 = arith.constant 1.000000e-03 : f32
    %19 = vector.broadcast %cst_11 : f32 to vector<16x1xf32>
    %20 = arith.addf %18, %19 : vector<16x1xf32>
    %21 = math.rsqrt %20 : vector<16x1xf32>
    %22 = vector.broadcast %21 : vector<16x1xf32> to vector<16x128xf32>
    %23 = arith.mulf %13, %22 : vector<16x128xf32>
    %24 = vector.broadcast %6 : vector<1x128xf32> to vector<16x128xf32>
    %25 = arith.mulf %23, %24 : vector<16x128xf32>
    %26 = vector.broadcast %7 : vector<1x128xf32> to vector<16x128xf32>
    %27 = arith.addf %25, %26 : vector<16x128xf32>
    %28 = arith.negf %27 : vector<16x128xf32>
    %29 = math.exp %28 : vector<16x128xf32>
    %cst_12 = arith.constant 1.000000e+00 : f32
    %30 = vector.broadcast %cst_12 : f32 to vector<16x128xf32>
    %31 = arith.addf %30, %29 : vector<16x128xf32>
    %32 = arith.divf %30, %31 : vector<16x128xf32>
    %33 = arith.mulf %27, %32 : vector<16x128xf32>
    %c0_13 = arith.constant 0 : index
    %c0_14 = arith.constant 0 : index
    %34 = vector.load %arg6[%c0_13, %c0_14] : memref<128x128xf32, #tpu.memory_space<vmem>>, vector<128x128xf32>
    %c1 = arith.constant 1 : index
    %c0_15 = arith.constant 0 : index
    %35 = vector.load %arg4[%c1, %c0_15] : memref<4x128xf32, #tpu.memory_space<vmem>>, vector<1x128xf32>
    %cst_16 = arith.constant dense<0.000000e+00> : vector<16x128xf32>
    %36 = tpu.matmul %33, %34, %cst_16 {dimension_numbers = #tpu.dot_dimension_numbers<[1], [0], [0], [1], [0, 0, 1, 1], [], []>, precision = #tpu.contract_precision<fp32>} : vector<16x128xf32>, vector<128x128xf32>, vector<16x128xf32> -> vector<16x128xf32>
    %37 = vector.broadcast %35 : vector<1x128xf32> to vector<16x128xf32>
    %38 = arith.addf %36, %37 : vector<16x128xf32>
    %39 = tpu.iota {dimensions = array<i32: 1>} : vector<16x128xi32>
    %c4_i32 = arith.constant 4 : i32
    %40 = vector.broadcast %c4_i32 : i32 to vector<16x128xi32>
    %41 = arith.shrsi %39, %40 : vector<16x128xi32>
    %42 = tpu.iota {dimensions = array<i32: 1>} : vector<16x8xi32>
    %cst_17 = arith.constant 0.000000e+00 : f32
    %43 = vector.broadcast %cst_17 : f32 to vector<16x8xf32>
    %c0_i32 = arith.constant 0 : i32
    %44 = vector.broadcast %c0_i32 : i32 to vector<16x128xi32>
    %45 = arith.cmpi eq, %41, %44 : vector<16x128xi32>
    %cst_18 = arith.constant 0xFF800000 : f32
    %46 = vector.broadcast %cst_18 : f32 to vector<16x128xf32>
    %47 = arith.select %45, %38, %46 : vector<16x128xi1>, vector<16x128xf32>
    %cst_19 = arith.constant dense<0xFF800000> : vector<16xf32>
    %48 = vector.multi_reduction <maximumf>, %47, %cst_19 [1] : vector<16x128xf32> to vector<16xf32>
    %49 = vector.shape_cast %48 : vector<16xf32> to vector<16x1xf32>
    %c0_i32_20 = arith.constant 0 : i32
    %50 = vector.broadcast %c0_i32_20 : i32 to vector<16x8xi32>
    %51 = arith.cmpi eq, %42, %50 : vector<16x8xi32>
    %52 = vector.shape_cast %49 : vector<16x1xf32> to vector<16x1xf32>
    %53 = vector.broadcast %52 : vector<16x1xf32> to vector<16x8xf32>
    %54 = arith.select %51, %53, %43 : vector<16x8xi1>, vector<16x8xf32>
    %c1_i32 = arith.constant 1 : i32
    %55 = vector.broadcast %c1_i32 : i32 to vector<16x128xi32>
    %56 = arith.cmpi eq, %41, %55 : vector<16x128xi32>
    %cst_21 = arith.constant 0xFF800000 : f32
    %57 = vector.broadcast %cst_21 : f32 to vector<16x128xf32>
    %58 = arith.select %56, %38, %57 : vector<16x128xi1>, vector<16x128xf32>
    %cst_22 = arith.constant dense<0xFF800000> : vector<16xf32>
    %59 = vector.multi_reduction <maximumf>, %58, %cst_22 [1] : vector<16x128xf32> to vector<16xf32>
    %60 = vector.shape_cast %59 : vector<16xf32> to vector<16x1xf32>
    %c1_i32_23 = arith.constant 1 : i32
    %61 = vector.broadcast %c1_i32_23 : i32 to vector<16x8xi32>
    %62 = arith.cmpi eq, %42, %61 : vector<16x8xi32>
    %63 = vector.shape_cast %60 : vector<16x1xf32> to vector<16x1xf32>
    %64 = vector.broadcast %63 : vector<16x1xf32> to vector<16x8xf32>
    %65 = arith.select %62, %64, %54 : vector<16x8xi1>, vector<16x8xf32>
    %c2_i32 = arith.constant 2 : i32
    %66 = vector.broadcast %c2_i32 : i32 to vector<16x128xi32>
    %67 = arith.cmpi eq, %41, %66 : vector<16x128xi32>
    %cst_24 = arith.constant 0xFF800000 : f32
    %68 = vector.broadcast %cst_24 : f32 to vector<16x128xf32>
    %69 = arith.select %67, %38, %68 : vector<16x128xi1>, vector<16x128xf32>
    %cst_25 = arith.constant dense<0xFF800000> : vector<16xf32>
    %70 = vector.multi_reduction <maximumf>, %69, %cst_25 [1] : vector<16x128xf32> to vector<16xf32>
    %71 = vector.shape_cast %70 : vector<16xf32> to vector<16x1xf32>
    %c2_i32_26 = arith.constant 2 : i32
    %72 = vector.broadcast %c2_i32_26 : i32 to vector<16x8xi32>
    %73 = arith.cmpi eq, %42, %72 : vector<16x8xi32>
    %74 = vector.shape_cast %71 : vector<16x1xf32> to vector<16x1xf32>
    %75 = vector.broadcast %74 : vector<16x1xf32> to vector<16x8xf32>
    %76 = arith.select %73, %75, %65 : vector<16x8xi1>, vector<16x8xf32>
    %c3_i32 = arith.constant 3 : i32
    %77 = vector.broadcast %c3_i32 : i32 to vector<16x128xi32>
    %78 = arith.cmpi eq, %41, %77 : vector<16x128xi32>
    %cst_27 = arith.constant 0xFF800000 : f32
    %79 = vector.broadcast %cst_27 : f32 to vector<16x128xf32>
    %80 = arith.select %78, %38, %79 : vector<16x128xi1>, vector<16x128xf32>
    %cst_28 = arith.constant dense<0xFF800000> : vector<16xf32>
    %81 = vector.multi_reduction <maximumf>, %80, %cst_28 [1] : vector<16x128xf32> to vector<16xf32>
    %82 = vector.shape_cast %81 : vector<16xf32> to vector<16x1xf32>
    %c3_i32_29 = arith.constant 3 : i32
    %83 = vector.broadcast %c3_i32_29 : i32 to vector<16x8xi32>
    %84 = arith.cmpi eq, %42, %83 : vector<16x8xi32>
    %85 = vector.shape_cast %82 : vector<16x1xf32> to vector<16x1xf32>
    %86 = vector.broadcast %85 : vector<16x1xf32> to vector<16x8xf32>
    %87 = arith.select %84, %86, %76 : vector<16x8xi1>, vector<16x8xf32>
    %c4_i32_30 = arith.constant 4 : i32
    %88 = vector.broadcast %c4_i32_30 : i32 to vector<16x128xi32>
    %89 = arith.cmpi eq, %41, %88 : vector<16x128xi32>
    %cst_31 = arith.constant 0xFF800000 : f32
    %90 = vector.broadcast %cst_31 : f32 to vector<16x128xf32>
    %91 = arith.select %89, %38, %90 : vector<16x128xi1>, vector<16x128xf32>
    %cst_32 = arith.constant dense<0xFF800000> : vector<16xf32>
    %92 = vector.multi_reduction <maximumf>, %91, %cst_32 [1] : vector<16x128xf32> to vector<16xf32>
    %93 = vector.shape_cast %92 : vector<16xf32> to vector<16x1xf32>
    %c4_i32_33 = arith.constant 4 : i32
    %94 = vector.broadcast %c4_i32_33 : i32 to vector<16x8xi32>
    %95 = arith.cmpi eq, %42, %94 : vector<16x8xi32>
    %96 = vector.shape_cast %93 : vector<16x1xf32> to vector<16x1xf32>
    %97 = vector.broadcast %96 : vector<16x1xf32> to vector<16x8xf32>
    %98 = arith.select %95, %97, %87 : vector<16x8xi1>, vector<16x8xf32>
    %c5_i32 = arith.constant 5 : i32
    %99 = vector.broadcast %c5_i32 : i32 to vector<16x128xi32>
    %100 = arith.cmpi eq, %41, %99 : vector<16x128xi32>
    %cst_34 = arith.constant 0xFF800000 : f32
    %101 = vector.broadcast %cst_34 : f32 to vector<16x128xf32>
    %102 = arith.select %100, %38, %101 : vector<16x128xi1>, vector<16x128xf32>
    %cst_35 = arith.constant dense<0xFF800000> : vector<16xf32>
    %103 = vector.multi_reduction <maximumf>, %102, %cst_35 [1] : vector<16x128xf32> to vector<16xf32>
    %104 = vector.shape_cast %103 : vector<16xf32> to vector<16x1xf32>
    %c5_i32_36 = arith.constant 5 : i32
    %105 = vector.broadcast %c5_i32_36 : i32 to vector<16x8xi32>
    %106 = arith.cmpi eq, %42, %105 : vector<16x8xi32>
    %107 = vector.shape_cast %104 : vector<16x1xf32> to vector<16x1xf32>
    %108 = vector.broadcast %107 : vector<16x1xf32> to vector<16x8xf32>
    %109 = arith.select %106, %108, %98 : vector<16x8xi1>, vector<16x8xf32>
    %c6_i32 = arith.constant 6 : i32
    %110 = vector.broadcast %c6_i32 : i32 to vector<16x128xi32>
    %111 = arith.cmpi eq, %41, %110 : vector<16x128xi32>
    %cst_37 = arith.constant 0xFF800000 : f32
    %112 = vector.broadcast %cst_37 : f32 to vector<16x128xf32>
    %113 = arith.select %111, %38, %112 : vector<16x128xi1>, vector<16x128xf32>
    %cst_38 = arith.constant dense<0xFF800000> : vector<16xf32>
    %114 = vector.multi_reduction <maximumf>, %113, %cst_38 [1] : vector<16x128xf32> to vector<16xf32>
    %115 = vector.shape_cast %114 : vector<16xf32> to vector<16x1xf32>
    %c6_i32_39 = arith.constant 6 : i32
    %116 = vector.broadcast %c6_i32_39 : i32 to vector<16x8xi32>
    %117 = arith.cmpi eq, %42, %116 : vector<16x8xi32>
    %118 = vector.shape_cast %115 : vector<16x1xf32> to vector<16x1xf32>
    %119 = vector.broadcast %118 : vector<16x1xf32> to vector<16x8xf32>
    %120 = arith.select %117, %119, %109 : vector<16x8xi1>, vector<16x8xf32>
    %c7_i32 = arith.constant 7 : i32
    %121 = vector.broadcast %c7_i32 : i32 to vector<16x128xi32>
    %122 = arith.cmpi eq, %41, %121 : vector<16x128xi32>
    %cst_40 = arith.constant 0xFF800000 : f32
    %123 = vector.broadcast %cst_40 : f32 to vector<16x128xf32>
    %124 = arith.select %122, %38, %123 : vector<16x128xi1>, vector<16x128xf32>
    %cst_41 = arith.constant dense<0xFF800000> : vector<16xf32>
    %125 = vector.multi_reduction <maximumf>, %124, %cst_41 [1] : vector<16x128xf32> to vector<16xf32>
    %126 = vector.shape_cast %125 : vector<16xf32> to vector<16x1xf32>
    %c7_i32_42 = arith.constant 7 : i32
    %127 = vector.broadcast %c7_i32_42 : i32 to vector<16x8xi32>
    %128 = arith.cmpi eq, %42, %127 : vector<16x8xi32>
    %129 = vector.shape_cast %126 : vector<16x1xf32> to vector<16x1xf32>
    %130 = vector.broadcast %129 : vector<16x1xf32> to vector<16x8xf32>
    %131 = arith.select %128, %130, %120 : vector<16x8xi1>, vector<16x8xf32>
    %c0_43 = arith.constant 0 : index
    %c0_44 = arith.constant 0 : index
    %132 = vector.load %arg3[%c0_43, %c0_44] : memref<8x128xf32, #tpu.memory_space<vmem>>, vector<8x128xf32>
    %cst_45 = arith.constant dense<0.000000e+00> : vector<16x128xf32>
    %133 = tpu.matmul %131, %132, %cst_45 {dimension_numbers = #tpu.dot_dimension_numbers<[1], [0], [0], [1], [0, 0, 1, 1], [], []>, precision = #tpu.contract_precision<fp32>} : vector<16x8xf32>, vector<8x128xf32>, vector<16x128xf32> -> vector<16x128xf32>
    %134 = arith.subf %38, %133 : vector<16x128xf32>
    %135 = math.exp %134 : vector<16x128xf32>
    %c0_46 = arith.constant 0 : index
    %c0_47 = arith.constant 0 : index
    %136 = vector.load %arg2[%c0_46, %c0_47] : memref<128x8xf32, #tpu.memory_space<vmem>>, vector<128x8xf32>
    %cst_48 = arith.constant dense<0.000000e+00> : vector<16x8xf32>
    %137 = tpu.matmul %135, %136, %cst_48 {dimension_numbers = #tpu.dot_dimension_numbers<[1], [0], [0], [1], [0, 0, 1, 1], [], []>, precision = #tpu.contract_precision<fp32>} : vector<16x128xf32>, vector<128x8xf32>, vector<16x8xf32> -> vector<16x8xf32>
    %138 = math.log %137 : vector<16x8xf32>
    %c0_49 = arith.constant 0 : index
    %c0_50 = arith.constant 0 : index
    %139 = vector.load %arg3[%c0_49, %c0_50] : memref<8x128xf32, #tpu.memory_space<vmem>>, vector<8x128xf32>
    %cst_51 = arith.constant dense<0.000000e+00> : vector<16x128xf32>
    %140 = tpu.matmul %138, %139, %cst_51 {dimension_numbers = #tpu.dot_dimension_numbers<[1], [0], [0], [1], [0, 0, 1, 1], [], []>, precision = #tpu.contract_precision<fp32>} : vector<16x8xf32>, vector<8x128xf32>, vector<16x128xf32> -> vector<16x128xf32>
    %141 = arith.subf %134, %140 : vector<16x128xf32>
    %c0_52 = arith.constant 0 : index
    %c0_53 = arith.constant 0 : index
    %142 = vector.load %arg7[%c0_52, %c0_53] : memref<16x128xf32, #tpu.memory_space<vmem>>, vector<16x128xf32>
    tpu.vector_store %arg7[%c0_52, %c0_53], %141 {strides = array<i32>} : memref<16x128xf32, #tpu.memory_space<vmem>>, vector<16x128xf32>,
    return
  }
  func.func @transform_0(%arg0: i32) -> (i32, i32) {
    %c0_i32 = arith.constant 0 : i32
    %c0_i32_0 = arith.constant 0 : i32
    return %arg0, %c0_i32 : i32, i32
  }
  func.func @transform_1(%arg0: i32) -> (i32, i32) {
    %c0_i32 = arith.constant 0 : i32
    %c0_i32_0 = arith.constant 0 : i32
    %c0_i32_1 = arith.constant 0 : i32
    return %c0_i32, %c0_i32_0 : i32, i32
  }
  func.func @transform_2(%arg0: i32) -> (i32, i32) {
    %c0_i32 = arith.constant 0 : i32
    %c0_i32_0 = arith.constant 0 : i32
    %c0_i32_1 = arith.constant 0 : i32
    return %c0_i32, %c0_i32_0 : i32, i32
  }
  func.func @transform_3(%arg0: i32) -> (i32, i32) {
    %c0_i32 = arith.constant 0 : i32
    %c0_i32_0 = arith.constant 0 : i32
    %c0_i32_1 = arith.constant 0 : i32
    return %c0_i32, %c0_i32_0 : i32, i32
  }
  func.func @transform_4(%arg0: i32) -> (i32, i32) {
    %c0_i32 = arith.constant 0 : i32
    %c0_i32_0 = arith.constant 0 : i32
    %c0_i32_1 = arith.constant 0 : i32
    return %c0_i32, %c0_i32_0 : i32, i32
  }
  func.func @transform_5(%arg0: i32) -> (i32, i32) {
    %c0_i32 = arith.constant 0 : i32
    %c0_i32_0 = arith.constant 0 : i32
    %c0_i32_1 = arith.constant 0 : i32
    return %c0_i32, %c0_i32_0 : i32, i32
  }
  func.func @transform_6(%arg0: i32) -> (i32, i32) {
    %c0_i32 = arith.constant 0 : i32
    %c0_i32_0 = arith.constant 0 : i32
    return %arg0, %c0_i32 : i32, i32
  }
}

module attributes {stable_mosaic.version = 11 : i64} {
  func.func @kernel(%arg0: i32, %arg1: memref<16x32xf32, #tpu.memory_space<vmem>>, %arg2: memref<128x8xf32, #tpu.memory_space<vmem>>, %arg3: memref<8x128xf32, #tpu.memory_space<vmem>>, %arg4: memref<4x128xf32, #tpu.memory_space<vmem>>, %arg5: memref<32x128xf32, #tpu.memory_space<vmem>>, %arg6: memref<128x128xf32, #tpu.memory_space<vmem>>, %arg7: memref<16x128xf32, #tpu.memory_space<vmem>>) attributes {dimension_semantics = [#tpu.dimension_semantics<parallel>], iteration_bounds = array<i64: 2>, scalar_prefetch = 0 : i64, scratch_operands = 0 : i64, tpu.core_type = #tpu.core_type<tc>, window_params = [{transform_indices = @transform_0, window_bounds = array<i64: 16, 32>}, {pipeline_mode = #tpu.pipeline_mode<synchronous>, transform_indices = @transform_1, window_bounds = array<i64: 128, 8>}, {pipeline_mode = #tpu.pipeline_mode<synchronous>, transform_indices = @transform_2, window_bounds = array<i64: 8, 128>}, {pipeline_mode = #tpu.pipeline_mode<synchronous>, transform_indices = @transform_3, window_bounds = array<i64: 4, 128>}, {pipeline_mode = #tpu.pipeline_mode<synchronous>, transform_indices = @transform_4, window_bounds = array<i64: 32, 128>}, {pipeline_mode = #tpu.pipeline_mode<synchronous>, transform_indices = @transform_5, window_bounds = array<i64: 128, 128>}, {transform_indices = @transform_6, window_bounds = array<i64: 16, 128>}]} {
    %c0 = arith.constant 0 : index
    %c0_0 = arith.constant 0 : index
    %0 = vector.load %arg1[%c0, %c0_0] : memref<16x32xf32, #tpu.memory_space<vmem>>, vector<16x32xf32>
    %c0_1 = arith.constant 0 : index
    %c0_2 = arith.constant 0 : index
    %1 = vector.load %arg5[%c0_1, %c0_2] : memref<32x128xf32, #tpu.memory_space<vmem>>, vector<32x128xf32>
    %c0_3 = arith.constant 0 : index
    %c0_4 = arith.constant 0 : index
    %2 = vector.load %arg4[%c0_3, %c0_4] : memref<4x128xf32, #tpu.memory_space<vmem>>, vector<1x128xf32>
    %cst = arith.constant dense<0.000000e+00> : vector<16x128xf32>
    %3 = tpu.matmul %0, %1, %cst {dimension_numbers = #tpu.dot_dimension_numbers<[1], [0], [0], [1], [0, 0, 1, 1], [], []>} : vector<16x32xf32>, vector<32x128xf32>, vector<16x128xf32> -> vector<16x128xf32>
    %4 = vector.broadcast %2 : vector<1x128xf32> to vector<16x128xf32>
    %5 = arith.addf %3, %4 : vector<16x128xf32>
    %c2 = arith.constant 2 : index
    %c0_5 = arith.constant 0 : index
    %6 = vector.load %arg4[%c2, %c0_5] : memref<4x128xf32, #tpu.memory_space<vmem>>, vector<1x128xf32>
    %c3 = arith.constant 3 : index
    %c0_6 = arith.constant 0 : index
    %7 = vector.load %arg4[%c3, %c0_6] : memref<4x128xf32, #tpu.memory_space<vmem>>, vector<1x128xf32>
    %cst_7 = arith.constant dense<0.000000e+00> : vector<16xf32>
    %8 = vector.multi_reduction <add>, %5, %cst_7 [1] : vector<16x128xf32> to vector<16xf32>
    %9 = vector.shape_cast %8 : vector<16xf32> to vector<16x1xf32>
    %cst_8 = arith.constant 1.280000e+02 : f32
    %10 = vector.broadcast %cst_8 : f32 to vector<16x1xf32>
    %11 = arith.divf %9, %10 : vector<16x1xf32>
    %12 = vector.broadcast %11 : vector<16x1xf32> to vector<16x128xf32>
    %13 = arith.subf %5, %12 : vector<16x128xf32>
    %14 = arith.mulf %13, %13 : vector<16x128xf32>
    %cst_9 = arith.constant dense<0.000000e+00> : vector<16xf32>
    %15 = vector.multi_reduction <add>, %14, %cst_9 [1] : vector<16x128xf32> to vector<16xf32>
    %16 = vector.shape_cast %15 : vector<16xf32> to vector<16x1xf32>
    %cst_10 = arith.constant 1.280000e+02 : f32
    %17 = vector.broadcast %cst_10 : f32 to vector<16x1xf32>
    %18 = arith.divf %16, %17 : vector<16x1xf32>
    %cst_11 = arith.constant 1.000000e-03 : f32
    %19 = vector.broadcast %cst_11 : f32 to vector<16x1xf32>
    %20 = arith.addf %18, %19 : vector<16x1xf32>
    %21 = math.rsqrt %20 : vector<16x1xf32>
    %22 = vector.broadcast %21 : vector<16x1xf32> to vector<16x128xf32>
    %23 = arith.mulf %13, %22 : vector<16x128xf32>
    %24 = vector.broadcast %6 : vector<1x128xf32> to vector<16x128xf32>
    %25 = arith.mulf %23, %24 : vector<16x128xf32>
    %26 = vector.broadcast %7 : vector<1x128xf32> to vector<16x128xf32>
    %27 = arith.addf %25, %26 : vector<16x128xf32>
    %28 = arith.negf %27 : vector<16x128xf32>
    %29 = math.exp %28 : vector<16x128xf32>
    %cst_12 = arith.constant 1.000000e+00 : f32
    %30 = vector.broadcast %cst_12 : f32 to vector<16x128xf32>
    %31 = arith.addf %30, %29 : vector<16x128xf32>
    %32 = arith.divf %30, %31 : vector<16x128xf32>
    %33 = arith.mulf %27, %32 : vector<16x128xf32>
    %c0_13 = arith.constant 0 : index
    %c0_14 = arith.constant 0 : index
    %34 = vector.load %arg6[%c0_13, %c0_14] : memref<128x128xf32, #tpu.memory_space<vmem>>, vector<128x128xf32>
    %c1 = arith.constant 1 : index
    %c0_15 = arith.constant 0 : index
    %35 = vector.load %arg4[%c1, %c0_15] : memref<4x128xf32, #tpu.memory_space<vmem>>, vector<1x128xf32>
    %cst_16 = arith.constant dense<0.000000e+00> : vector<16x128xf32>
    %36 = tpu.matmul %33, %34, %cst_16 {dimension_numbers = #tpu.dot_dimension_numbers<[1], [0], [0], [1], [0, 0, 1, 1], [], []>} : vector<16x128xf32>, vector<128x128xf32>, vector<16x128xf32> -> vector<16x128xf32>
    %37 = vector.broadcast %35 : vector<1x128xf32> to vector<16x128xf32>
    %38 = arith.addf %36, %37 : vector<16x128xf32>
    %39 = tpu.iota {dimensions = array<i32: 1>} : vector<16x128xi32>
    %c4_i32 = arith.constant 4 : i32
    %40 = vector.broadcast %c4_i32 : i32 to vector<16x128xi32>
    %41 = arith.shrsi %39, %40 : vector<16x128xi32>
    %42 = tpu.iota {dimensions = array<i32: 1>} : vector<16x8xi32>
    %cst_17 = arith.constant 0.000000e+00 : f32
    %43 = vector.broadcast %cst_17 : f32 to vector<16x8xf32>
    %c0_i32 = arith.constant 0 : i32
    %44 = vector.broadcast %c0_i32 : i32 to vector<16x128xi32>
    %45 = arith.cmpi eq, %41, %44 : vector<16x128xi32>
    %cst_18 = arith.constant 0xFF800000 : f32
    %46 = vector.broadcast %cst_18 : f32 to vector<16x128xf32>
    %47 = arith.select %45, %38, %46 : vector<16x128xi1>, vector<16x128xf32>
    %cst_19 = arith.constant dense<0xFF800000> : vector<16xf32>
    %48 = vector.multi_reduction <maximumf>, %47, %cst_19 [1] : vector<16x128xf32> to vector<16xf32>
    %49 = vector.shape_cast %48 : vector<16xf32> to vector<16x1xf32>
    %c0_i32_20 = arith.constant 0 : i32
    %50 = vector.broadcast %c0_i32_20 : i32 to vector<16x8xi32>
    %51 = arith.cmpi eq, %42, %50 : vector<16x8xi32>
    %52 = vector.shape_cast %49 : vector<16x1xf32> to vector<16x1xf32>
    %53 = vector.broadcast %52 : vector<16x1xf32> to vector<16x8xf32>
    %54 = arith.select %51, %53, %43 : vector<16x8xi1>, vector<16x8xf32>
    %c1_i32 = arith.constant 1 : i32
    %55 = vector.broadcast %c1_i32 : i32 to vector<16x128xi32>
    %56 = arith.cmpi eq, %41, %55 : vector<16x128xi32>
    %cst_21 = arith.constant 0xFF800000 : f32
    %57 = vector.broadcast %cst_21 : f32 to vector<16x128xf32>
    %58 = arith.select %56, %38, %57 : vector<16x128xi1>, vector<16x128xf32>
    %cst_22 = arith.constant dense<0xFF800000> : vector<16xf32>
    %59 = vector.multi_reduction <maximumf>, %58, %cst_22 [1] : vector<16x128xf32> to vector<16xf32>
    %60 = vector.shape_cast %59 : vector<16xf32> to vector<16x1xf32>
    %c1_i32_23 = arith.constant 1 : i32
    %61 = vector.broadcast %c1_i32_23 : i32 to vector<16x8xi32>
    %62 = arith.cmpi eq, %42, %61 : vector<16x8xi32>
    %63 = vector.shape_cast %60 : vector<16x1xf32> to vector<16x1xf32>
    %64 = vector.broadcast %63 : vector<16x1xf32> to vector<16x8xf32>
    %65 = arith.select %62, %64, %54 : vector<16x8xi1>, vector<16x8xf32>
    %c2_i32 = arith.constant 2 : i32
    %66 = vector.broadcast %c2_i32 : i32 to vector<16x128xi32>
    %67 = arith.cmpi eq, %41, %66 : vector<16x128xi32>
    %cst_24 = arith.constant 0xFF800000 : f32
    %68 = vector.broadcast %cst_24 : f32 to vector<16x128xf32>
    %69 = arith.select %67, %38, %68 : vector<16x128xi1>, vector<16x128xf32>
    %cst_25 = arith.constant dense<0xFF800000> : vector<16xf32>
    %70 = vector.multi_reduction <maximumf>, %69, %cst_25 [1] : vector<16x128xf32> to vector<16xf32>
    %71 = vector.shape_cast %70 : vector<16xf32> to vector<16x1xf32>
    %c2_i32_26 = arith.constant 2 : i32
    %72 = vector.broadcast %c2_i32_26 : i32 to vector<16x8xi32>
    %73 = arith.cmpi eq, %42, %72 : vector<16x8xi32>
    %74 = vector.shape_cast %71 : vector<16x1xf32> to vector<16x1xf32>
    %75 = vector.broadcast %74 : vector<16x1xf32> to vector<16x8xf32>
    %76 = arith.select %73, %75, %65 : vector<16x8xi1>, vector<16x8xf32>
    %c3_i32 = arith.constant 3 : i32
    %77 = vector.broadcast %c3_i32 : i32 to vector<16x128xi32>
    %78 = arith.cmpi eq, %41, %77 : vector<16x128xi32>
    %cst_27 = arith.constant 0xFF800000 : f32
    %79 = vector.broadcast %cst_27 : f32 to vector<16x128xf32>
    %80 = arith.select %78, %38, %79 : vector<16x128xi1>, vector<16x128xf32>
    %cst_28 = arith.constant dense<0xFF800000> : vector<16xf32>
    %81 = vector.multi_reduction <maximumf>, %80, %cst_28 [1] : vector<16x128xf32> to vector<16xf32>
    %82 = vector.shape_cast %81 : vector<16xf32> to vector<16x1xf32>
    %c3_i32_29 = arith.constant 3 : i32
    %83 = vector.broadcast %c3_i32_29 : i32 to vector<16x8xi32>
    %84 = arith.cmpi eq, %42, %83 : vector<16x8xi32>
    %85 = vector.shape_cast %82 : vector<16x1xf32> to vector<16x1xf32>
    %86 = vector.broadcast %85 : vector<16x1xf32> to vector<16x8xf32>
    %87 = arith.select %84, %86, %76 : vector<16x8xi1>, vector<16x8xf32>
    %c4_i32_30 = arith.constant 4 : i32
    %88 = vector.broadcast %c4_i32_30 : i32 to vector<16x128xi32>
    %89 = arith.cmpi eq, %41, %88 : vector<16x128xi32>
    %cst_31 = arith.constant 0xFF800000 : f32
    %90 = vector.broadcast %cst_31 : f32 to vector<16x128xf32>
    %91 = arith.select %89, %38, %90 : vector<16x128xi1>, vector<16x128xf32>
    %cst_32 = arith.constant dense<0xFF800000> : vector<16xf32>
    %92 = vector.multi_reduction <maximumf>, %91, %cst_32 [1] : vector<16x128xf32> to vector<16xf32>
    %93 = vector.shape_cast %92 : vector<16xf32> to vector<16x1xf32>
    %c4_i32_33 = arith.constant 4 : i32
    %94 = vector.broadcast %c4_i32_33 : i32 to vector<16x8xi32>
    %95 = arith.cmpi eq, %42, %94 : vector<16x8xi32>
    %96 = vector.shape_cast %93 : vector<16x1xf32> to vector<16x1xf32>
    %97 = vector.broadcast %96 : vector<16x1xf32> to vector<16x8xf32>
    %98 = arith.select %95, %97, %87 : vector<16x8xi1>, vector<16x8xf32>
    %c5_i32 = arith.constant 5 : i32
    %99 = vector.broadcast %c5_i32 : i32 to vector<16x128xi32>
    %100 = arith.cmpi eq, %41, %99 : vector<16x128xi32>
    %cst_34 = arith.constant 0xFF800000 : f32
    %101 = vector.broadcast %cst_34 : f32 to vector<16x128xf32>
    %102 = arith.select %100, %38, %101 : vector<16x128xi1>, vector<16x128xf32>
    %cst_35 = arith.constant dense<0xFF800000> : vector<16xf32>
    %103 = vector.multi_reduction <maximumf>, %102, %cst_35 [1] : vector<16x128xf32> to vector<16xf32>
    %104 = vector.shape_cast %103 : vector<16xf32> to vector<16x1xf32>
    %c5_i32_36 = arith.constant 5 : i32
    %105 = vector.broadcast %c5_i32_36 : i32 to vector<16x8xi32>
    %106 = arith.cmpi eq, %42, %105 : vector<16x8xi32>
    %107 = vector.shape_cast %104 : vector<16x1xf32> to vector<16x1xf32>
    %108 = vector.broadcast %107 : vector<16x1xf32> to vector<16x8xf32>
    %109 = arith.select %106, %108, %98 : vector<16x8xi1>, vector<16x8xf32>
    %c6_i32 = arith.constant 6 : i32
    %110 = vector.broadcast %c6_i32 : i32 to vector<16x128xi32>
    %111 = arith.cmpi eq, %41, %110 : vector<16x128xi32>
    %cst_37 = arith.constant 0xFF800000 : f32
    %112 = vector.broadcast %cst_37 : f32 to vector<16x128xf32>
    %113 = arith.select %111, %38, %112 : vector<16x128xi1>, vector<16x128xf32>
    %cst_38 = arith.constant dense<0xFF800000> : vector<16xf32>
    %114 = vector.multi_reduction <maximumf>, %113, %cst_38 [1] : vector<16x128xf32> to vector<16xf32>
    %115 = vector.shape_cast %114 : vector<16xf32> to vector<16x1xf32>
    %c6_i32_39 = arith.constant 6 : i32
    %116 = vector.broadcast %c6_i32_39 : i32 to vector<16x8xi32>
    %117 = arith.cmpi eq, %42, %116 : vector<16x8xi32>
    %118 = vector.shape_cast %115 : vector<16x1xf32> to vector<16x1xf32>
    %119 = vector.broadcast %118 : vector<16x1xf32> to vector<16x8xf32>
    %120 = arith.select %117, %119, %109 : vector<16x8xi1>, vector<16x8xf32>
    %c7_i32 = arith.constant 7 : i32
    %121 = vector.broadcast %c7_i32 : i32 to vector<16x128xi32>
    %122 = arith.cmpi eq, %41, %121 : vector<16x128xi32>
    %cst_40 = arith.constant 0xFF800000 : f32
    %123 = vector.broadcast %cst_40 : f32 to vector<16x128xf32>
    %124 = arith.select %122, %38, %123 : vector<16x128xi1>, vector<16x128xf32>
    %cst_41 = arith.constant dense<0xFF800000> : vector<16xf32>
    %125 = vector.multi_reduction <maximumf>, %124, %cst_41 [1] : vector<16x128xf32> to vector<16xf32>
    %126 = vector.shape_cast %125 : vector<16xf32> to vector<16x1xf32>
    %c7_i32_42 = arith.constant 7 : i32
    %127 = vector.broadcast %c7_i32_42 : i32 to vector<16x8xi32>
    %128 = arith.cmpi eq, %42, %127 : vector<16x8xi32>
    %129 = vector.shape_cast %126 : vector<16x1xf32> to vector<16x1xf32>
    %130 = vector.broadcast %129 : vector<16x1xf32> to vector<16x8xf32>
    %131 = arith.select %128, %130, %120 : vector<16x8xi1>, vector<16x8xf32>
    %c0_43 = arith.constant 0 : index
    %c0_44 = arith.constant 0 : index
    %132 = vector.load %arg3[%c0_43, %c0_44] : memref<8x128xf32, #tpu.memory_space<vmem>>, vector<8x128xf32>
    %cst_45 = arith.constant dense<0.000000e+00> : vector<16x128xf32>
    %133 = tpu.matmul %131, %132, %cst_45 {dimension_numbers = #tpu.dot_dimension_numbers<[1], [0], [0], [1], [0, 0, 1, 1], [], []>} : vector<16x8xf32>, vector<8x128xf32>, vector<16x128xf32> -> vector<16x128xf32>
    %134 = arith.subf %38, %133 : vector<16x128xf32>
    %135 = math.exp %134 : vector<16x128xf32>
    %c0_46 = arith.constant 0 : index
    %c0_47 = arith.constant 0 : index
    %136 = vector.load %arg2[%c0_46, %c0_47] : memref<128x8xf32, #tpu.memory_space<vmem>>, vector<128x8xf32>
    %cst_48 = arith.constant dense<0.000000e+00> : vector<16x8xf32>
    %137 = tpu.matmul %135, %136, %cst_48 {dimension_numbers = #tpu.dot_dimension_numbers<[1], [0], [0], [1], [0, 0, 1, 1], [], []>} : vector<16x128xf32>, vector<128x8xf32>, vector<16x8xf32> -> vector<16x8xf32>
    %138 = math.log %137 : vector<16x8xf32>
    %c0_49 = arith.constant 0 : index
    %c0_50 = arith.constant 0 : index
    %139 = vector.load %arg3[%c0_49, %c0_50] : memref<8x128xf32, #tpu.memory_space<vmem>>, vector<8x128xf32>
    %cst_51 = arith.constant dense<0.000000e+00> : vector<16x128xf32>
    %140 = tpu.matmul %138, %139, %cst_51 {dimension_numbers = #tpu.dot_dimension_numbers<[1], [0], [0], [1], [0, 0, 1, 1], [], []>} : vector<16x8xf32>, vector<8x128xf32>, vector<16x128xf32> -> vector<16x128xf32>
    %141 = arith.subf %134, %140 : vector<16x128xf32>
    %c0_52 = arith.constant 0 : index
    %c0_53 = arith.constant 0 : index
    %142 = vector.load %arg7[%c0_52, %c0_53] : memref<16x128xf32, #tpu.memory_space<vmem>>, vector<16x128xf32>
    tpu.vector_store %arg7[%c0_52, %c0_53], %141 {strides = array<i32>} : memref<16x128xf32, #tpu.memory_space<vmem>>, vector<16x128xf32>,
    return
  }
  func.func @transform_0(%arg0: i32) -> (i32, i32) {
    %c0_i32 = arith.constant 0 : i32
    %c0_i32_0 = arith.constant 0 : i32
    return %arg0, %c0_i32 : i32, i32
  }
  func.func @transform_1(%arg0: i32) -> (i32, i32) {
    %c0_i32 = arith.constant 0 : i32
    %c0_i32_0 = arith.constant 0 : i32
    %c0_i32_1 = arith.constant 0 : i32
    return %c0_i32, %c0_i32_0 : i32, i32
  }
  func.func @transform_2(%arg0: i32) -> (i32, i32) {
    %c0_i32 = arith.constant 0 : i32
    %c0_i32_0 = arith.constant 0 : i32
    %c0_i32_1 = arith.constant 0 : i32
    return %c0_i32, %c0_i32_0 : i32, i32
  }
  func.func @transform_3(%arg0: i32) -> (i32, i32) {
    %c0_i32 = arith.constant 0 : i32
    %c0_i32_0 = arith.constant 0 : i32
    %c0_i32_1 = arith.constant 0 : i32
    return %c0_i32, %c0_i32_0 : i32, i32
  }
  func.func @transform_4(%arg0: i32) -> (i32, i32) {
    %c0_i32 = arith.constant 0 : i32
    %c0_i32_0 = arith.constant 0 : i32
    %c0_i32_1 = arith.constant 0 : i32
    return %c0_i32, %c0_i32_0 : i32, i32
  }
  func.func @transform_5(%arg0: i32) -> (i32, i32) {
    %c0_i32 = arith.constant 0 : i32
    %c0_i32_0 = arith.constant 0 : i32
    %c0_i32_1 = arith.constant 0 : i32
    return %c0_i32, %c0_i32_0 : i32, i32
  }
  func.func @transform_6(%arg0: i32) -> (i32, i32) {
    %c0_i32 = arith.constant 0 : i32
    %c0_i32_0 = arith.constant 0 : i32
    return %arg0, %c0_i32 : i32, i32
  }
}

</mosaic_0001>

<llo_original>
// kernel: tpu_custom_call.1
$region0: #{tpu_custom_call.1}
  #allocation0 [shape = 'u32[]', space=smem, size = 0x4, offset = 0x4, fixed_abs, tag = 'smem constant byte address 0x4 - core index']
  #allocation1 [shape = 'u32[144,128]{1,0:T(1,128)}', space=vmem, size = 0x12000, scoped, tag = 'internal scratch']
  %s0 = inlined_call_operand.hbm [shape: f32[32,32], index: 0, kind: input, shape index: {}]
  %s1 = inlined_call_operand.vmem [shape: f32[128,8], index: 1, kind: input, shape index: {}]
  %s2 = inlined_call_operand.vmem [shape: f32[8,128], index: 2, kind: input, shape index: {}]
  %s3 = inlined_call_operand.vmem [shape: f32[4,128], index: 3, kind: input, shape index: {}]
  %s4 = inlined_call_operand.hbm [shape: f32[32,128], index: 4, kind: input, shape index: {}]
  %s5 = inlined_call_operand.vmem [shape: f32[128,128], index: 5, kind: input, shape index: {}]
  %s6 = inlined_call_operand.hbm [shape: f32[32,128], index: 6, kind: output, shape index: {}]
  %s7 = sld [smem:[#allocation0]]
  $region65: #{tpu_custom_call.1} parent=0
    _
  %s9 = ssub.s32 1, %s7
  %s10 = scalar_select 0, %s9, %s7
  $region1: #{tpu_custom_call.1} parent=0
    #allocation2 [shape = 'u8[16384]{0}', space=vmem, size = 0x4000, scoped, tag = 'input window, operand 0']
    #allocation3 [shape = 's32[2]{0}', space=sflag, size = 0x8, scoped, tag = 'scoped memory for tpu_custom_call.1']
    #allocation4 [shape = 's32[2]{0}', space=sflag, size = 0x8, scoped, tag = 'scoped memory for tpu_custom_call.1']
    #allocation5 [shape = 'u8[16384]{0}', space=vmem, size = 0x4000, scoped, tag = 'input window, operand 4, single buffered']
    #allocation6 [shape = 's32[1]{0}', space=sflag, size = 0x4, scoped, tag = 'scoped memory for tpu_custom_call.1']
    #allocation7 [shape = 'u8[16384]{0}', space=vmem, size = 0x4000, scoped, tag = 'output window, operand 0']
    %11 = vsyncpa [#allocation3], 0
    %s12 = scalar_lea.sflag [#allocation3], 1
    %13 = vsyncpa %s12, 0
    %14 = vsyncpa [#allocation6], 0
    %15 = vsyncpa [#allocation4], 0
    %s16 = scalar_lea.sflag [#allocation4], 1
    %17 = vsyncpa %s16, 0
    loop: start=0, step=1, limit=4
    $region2: #{tpu_custom_call.1} parent=1 // loop_pre_header
      _
    $region3: #{tpu_custom_call.1} parent=1 // loop_header
      %s19 = sphi 0, %s23
      %p20 = scmp.ge.s32.totalorder %s19, 4
      %s29 = sphi 0, %s31
      %s32 = sphi 0, %s29
      %s33 = sphi 0, %s32
      %s49 = sphi 0, %s33
      %s53 = sphi 0, %s53
      %s55 = sphi 0, %s53
      %s56 = sphi 0, %s55
      %s70 = sphi 0, %s56
      %s74 = sphi 0, %s74
      %s76 = sphi 0, %s74
      %s77 = sphi 0, %s76
      %s91 = sphi 0, %s77
      %s95 = sphi 0, %s95
      %s97 = sphi 0, %s95
      %s98 = sphi 0, %s97
      %s112 = sphi 0, %s98
      %s116 = sphi 0, %s116
      %s118 = sphi 0, %s116
      %s119 = sphi 0, %s118
      %s133 = sphi 0, %s119
      %s137 = sphi 0, %s137
      %s139 = sphi 0, %s137
      %s140 = sphi 0, %s139
      %s154 = sphi 0, %s140
      %s160 = sphi 0, %s162
      %s163 = sphi 0, %s160
      %s164 = sphi 0, %s163
      %s180 = sphi 0, %s164
    $region4: #{tpu_custom_call.1} parent=1 // loop_header_branch
      %22 = sbr.rel (%p20) target = $region8
    $region5: #{tpu_custom_call.1} parent=1 // loop_body
      %s24 = ssub.s32 %s19, 1
      %s25 = ssub.s32 %s19, 2
      %s26 = sadd.s32 %s19, 1
      %s27 = ssub.s32 %s19, %s26
      %p28 = scmp.eq.s32.totalorder %s27, 0
      %s30 = sadd.s32 %s29, 1
      %s31 = scalar_select %p28, %s29, %s30
      %p34 = pneg %p28
      %p35 = scmp.eq.s32.totalorder %s19, 1
      %p36 = por %p34, %p35
      %p37 = scmp.ne.s32.totalorder %s29, %s32
      %p38 = scmp.eq.s32.totalorder %s19, 0
      %p39 = por %p37, %p38
      %p40 = scmp.ne.s32.totalorder %s29, %s32
      %p41 = scmp.eq.s32.totalorder %s24, 1
      %p42 = por %p40, %p41
      %p43 = scmp.ne.s32.totalorder %s32, %s33
      %p44 = scmp.eq.s32.totalorder %s24, 0
      %p45 = por %p43, %p44
      %p46 = scmp.ne.s32.totalorder %s32, %s33
      %p47 = scmp.eq.s32.totalorder %s25, 1
      %p48 = por %p46, %p47
      %p50 = scmp.ne.s32.totalorder %s33, %s49
      %p51 = scmp.eq.s32.totalorder %s25, 0
      %p52 = por %p50, %p51
      %s54 = sadd.s32 %s53, 1
      %p57 = scmp.eq.s32.totalorder %s19, 1
      %p58 = scmp.ne.s32.totalorder %s53, %s55
      %p59 = scmp.eq.s32.totalorder %s19, 0
      %p60 = por %p58, %p59
      %p61 = scmp.ne.s32.totalorder %s53, %s55
      %p62 = scmp.eq.s32.totalorder %s24, 1
      %p63 = por %p61, %p62
      %p64 = scmp.ne.s32.totalorder %s55, %s56
      %p65 = scmp.eq.s32.totalorder %s24, 0
      %p66 = por %p64, %p65
      %p67 = scmp.ne.s32.totalorder %s55, %s56
      %p68 = scmp.eq.s32.totalorder %s25, 1
      %p69 = por %p67, %p68
      %p71 = scmp.ne.s32.totalorder %s56, %s70
      %p72 = scmp.eq.s32.totalorder %s25, 0
      %p73 = por %p71, %p72
      %s75 = sadd.s32 %s74, 1
      %p78 = scmp.eq.s32.totalorder %s19, 1
      %p79 = scmp.ne.s32.totalorder %s74, %s76
      %p80 = scmp.eq.s32.totalorder %s19, 0
      %p81 = por %p79, %p80
      %p82 = scmp.ne.s32.totalorder %s74, %s76
      %p83 = scmp.eq.s32.totalorder %s24, 1
      %p84 = por %p82, %p83
      %p85 = scmp.ne.s32.totalorder %s76, %s77
      %p86 = scmp.eq.s32.totalorder %s24, 0
      %p87 = por %p85, %p86
      %p88 = scmp.ne.s32.totalorder %s76, %s77
      %p89 = scmp.eq.s32.totalorder %s25, 1
      %p90 = por %p88, %p89
      %p92 = scmp.ne.s32.totalorder %s77, %s91
      %p93 = scmp.eq.s32.totalorder %s25, 0
      %p94 = por %p92, %p93
      %s96 = sadd.s32 %s95, 1
      %p99 = scmp.eq.s32.totalorder %s19, 1
      %p100 = scmp.ne.s32.totalorder %s95, %s97
      %p101 = scmp.eq.s32.totalorder %s19, 0
      %p102 = por %p100, %p101
      %p103 = scmp.ne.s32.totalorder %s95, %s97
      %p104 = scmp.eq.s32.totalorder %s24, 1
      %p105 = por %p103, %p104
      %p106 = scmp.ne.s32.totalorder %s97, %s98
      %p107 = scmp.eq.s32.totalorder %s24, 0
      %p108 = por %p106, %p107
      %p109 = scmp.ne.s32.totalorder %s97, %s98
      %p110 = scmp.eq.s32.totalorder %s25, 1
      %p111 = por %p109, %p110
      %p113 = scmp.ne.s32.totalorder %s98, %s112
      %p114 = scmp.eq.s32.totalorder %s25, 0
      %p115 = por %p113, %p114
      %s117 = sadd.s32 %s116, 1
      %p120 = scmp.eq.s32.totalorder %s19, 1
      %p121 = scmp.ne.s32.totalorder %s116, %s118
      %p122 = scmp.eq.s32.totalorder %s19, 0
      %p123 = por %p121, %p122
      %p124 = scmp.ne.s32.totalorder %s116, %s118
      %p125 = scmp.eq.s32.totalorder %s24, 1
      %p126 = por %p124, %p125
      %p127 = scmp.ne.s32.totalorder %s118, %s119
      %p128 = scmp.eq.s32.totalorder %s24, 0
      %p129 = por %p127, %p128
      %p130 = scmp.ne.s32.totalorder %s118, %s119
      %p131 = scmp.eq.s32.totalorder %s25, 1
      %p132 = por %p130, %p131
      %p134 = scmp.ne.s32.totalorder %s119, %s133
      %p135 = scmp.eq.s32.totalorder %s25, 0
      %p136 = por %p134, %p135
      %s138 = sadd.s32 %s137, 1
      %p141 = scmp.eq.s32.totalorder %s19, 1
      %p142 = scmp.ne.s32.totalorder %s137, %s139
      %p143 = scmp.eq.s32.totalorder %s19, 0
      %p144 = por %p142, %p143
      %p145 = scmp.ne.s32.totalorder %s137, %s139
      %p146 = scmp.eq.s32.totalorder %s24, 1
      %p147 = por %p145, %p146
      %p148 = scmp.ne.s32.totalorder %s139, %s140
      %p149 = scmp.eq.s32.totalorder %s24, 0
      %p150 = por %p148, %p149
      %p151 = scmp.ne.s32.totalorder %s139, %s140
      %p152 = scmp.eq.s32.totalorder %s25, 1
      %p153 = por %p151, %p152
      %p155 = scmp.ne.s32.totalorder %s140, %s154
      %p156 = scmp.eq.s32.totalorder %s25, 0
      %p157 = por %p155, %p156
      %s158 = ssub.s32 %s19, %s26
      %p159 = scmp.eq.s32.totalorder %s158, 0
      %s161 = sadd.s32 %s160, 1
      %s162 = scalar_select %p159, %s160, %s161
      %p165 = pneg %p159
      %p166 = scmp.eq.s32.totalorder %s19, 1
      %p167 = por %p165, %p166
      %p168 = scmp.ne.s32.totalorder %s160, %s163
      %p169 = scmp.eq.s32.totalorder %s19, 0
      %p170 = por %p168, %p169
      %p171 = scmp.ne.s32.totalorder %s160, %s163
      %p172 = scmp.eq.s32.totalorder %s24, 1
      %p173 = por %p171, %p172
      %p174 = scmp.ne.s32.totalorder %s163, %s164
      %p175 = scmp.eq.s32.totalorder %s24, 0
      %p176 = por %p174, %p175
      %p177 = scmp.ne.s32.totalorder %s163, %s164
      %p178 = scmp.eq.s32.totalorder %s25, 1
      %p179 = por %p177, %p178
      %p181 = scmp.ne.s32.totalorder %s164, %s180
      %p182 = scmp.eq.s32.totalorder %s25, 0
      %p183 = por %p181, %p182
      %p184 = scmp.le.s32.totalorder 1, %s19
      %p185 = scmp.lt.s32.totalorder %s19, 3
      %p186 = pnand %p184, %p185
      %p187 = pneg %p186
      // Predicated region
      $region9: #{tpu_custom_call.1} parent=5 // pred_check
        _
      $region10: #{tpu_custom_call.1} parent=5 // pred_check_branch
        %189 = sbr.rel (%p186) target = $region12
      $region11: #{tpu_custom_call.1} parent=5 // pred_region
        %s190 = ssub.s32 %s19, 1
        // Predicated region
        $region13: #{tpu_custom_call.1} parent=11 // pred_check
          %p191 = pneg %p66
        $region14: #{tpu_custom_call.1} parent=11 // pred_check_branch
          %193 = sbr.rel (%p191) target = $region16
        $region15: #{tpu_custom_call.1} parent=11 // pred_region
          _
        $region16: #{tpu_custom_call.1} parent=11 // pred_fallthru
          _
        // Predicated region
        $region17: #{tpu_custom_call.1} parent=11 // pred_check
          %p194 = pneg %p87
        $region18: #{tpu_custom_call.1} parent=11 // pred_check_branch
          %196 = sbr.rel (%p194) target = $region20
        $region19: #{tpu_custom_call.1} parent=11 // pred_region
          _
        $region20: #{tpu_custom_call.1} parent=11 // pred_fallthru
          _
        // Predicated region
        $region21: #{tpu_custom_call.1} parent=11 // pred_check
          %p197 = pneg %p108
        $region22: #{tpu_custom_call.1} parent=11 // pred_check_branch
          %199 = sbr.rel (%p197) target = $region24
        $region23: #{tpu_custom_call.1} parent=11 // pred_region
          _
        $region24: #{tpu_custom_call.1} parent=11 // pred_fallthru
          _
        // Predicated region
        $region25: #{tpu_custom_call.1} parent=11 // pred_check
          %p200 = pneg %p129
        $region26: #{tpu_custom_call.1} parent=11 // pred_check_branch
          %202 = sbr.rel (%p200) target = $region28
        $region27: #{tpu_custom_call.1} parent=11 // pred_region
          %s204 = ssub.s32 512, 512
          %205 = vsyncadd [#allocation6], %s204
          %s206 = sshll.u32 [#allocation5], 4
          %s207 = int_to_ptr.vmem [resolvable:$true] %s206
          %212 = dma.hbm_to_vmem [thread:$0]  %s4, 512, %s207, [#allocation6], 128, 128, 8
        $region28: #{tpu_custom_call.1} parent=11 // pred_fallthru
          _
        // Predicated region
        $region29: #{tpu_custom_call.1} parent=11 // pred_check
          %p213 = pneg %p150
        $region30: #{tpu_custom_call.1} parent=11 // pred_check_branch
          %215 = sbr.rel (%p213) target = $region32
        $region31: #{tpu_custom_call.1} parent=11 // pred_region
          _
        $region32: #{tpu_custom_call.1} parent=11 // pred_fallthru
          _
      $region12: #{tpu_custom_call.1} parent=5 // pred_fallthru
        _
      %p216 = scmp.lt.s32.totalorder %s19, 2
      // Predicated region
      $region33: #{tpu_custom_call.1} parent=5 // pred_check
        %p217 = pneg %p216
      $region34: #{tpu_custom_call.1} parent=5 // pred_check_branch
        %219 = sbr.rel (%p217) target = $region36
      $region35: #{tpu_custom_call.1} parent=5 // pred_region
        // Predicated region
        $region37: #{tpu_custom_call.1} parent=35 // pred_check
          %p220 = pneg %p39
        $region38: #{tpu_custom_call.1} parent=35 // pred_check_branch
          %222 = sbr.rel (%p220) target = $region40
        $region39: #{tpu_custom_call.1} parent=35 // pred_region
          %s223 = sand.u32 %s29, 1
          %s224 = scalar_lea.sflag [#allocation3], %s223
          %s225 = sand.u32 %s29, 1
          %s226 = smul.addr %s225, 16
          %s227 = scalar_lea.vmem [#allocation2], %s226
          %s228 = smul.u32 2, %s19
          %s230 = ssub.s32 256, 256
          %231 = vsyncadd %s224, %s230
          %s232 = smul.addr %s228, 128
          %s233 = scalar_lea.hbm %s0, %s232
          %s234 = sshll.u32 %s227, 4
          %s235 = int_to_ptr.vmem [resolvable:$true] %s234
          %240 = dma.hbm_to_vmem [thread:$0]  %s233, 256, %s235, %s224, 128, 128, 8
        $region40: #{tpu_custom_call.1} parent=35 // pred_fallthru
          _
      $region36: #{tpu_custom_call.1} parent=5 // pred_fallthru
        _
      %p241 = scmp.le.s32.totalorder 1, %s19
      %p242 = scmp.lt.s32.totalorder %s19, 3
      %p243 = pnand %p241, %p242
      %p244 = pneg %p243
      // Predicated region
      $region41: #{tpu_custom_call.1} parent=5 // pred_check
        _
      $region42: #{tpu_custom_call.1} parent=5 // pred_check_branch
        %246 = sbr.rel (%p243) target = $region44
      $region43: #{tpu_custom_call.1} parent=5 // pred_region
        %s247 = ssub.s32 %s19, 1
        %s248 = sand.u32 %s32, 1
        %s249 = scalar_lea.sflag [#allocation3], %s248
        %s250 = sand.u32 %s32, 1
        %s251 = smul.addr %s250, 16
        %s252 = scalar_lea.vmem [#allocation2], %s251
        // Predicated region
        $region45: #{tpu_custom_call.1} parent=43 // pred_check
          %p253 = pneg %p45
        $region46: #{tpu_custom_call.1} parent=43 // pred_check_branch
          %255 = sbr.rel (%p253) target = $region48
        $region47: #{tpu_custom_call.1} parent=43 // pred_region
          %256 = dma.done %s249, 256
        $region48: #{tpu_custom_call.1} parent=43 // pred_fallthru
          _
        // Predicated region
        $region49: #{tpu_custom_call.1} parent=43 // pred_check
          %p257 = pneg %p129
        $region50: #{tpu_custom_call.1} parent=43 // pred_check_branch
          %259 = sbr.rel (%p257) target = $region52
        $region51: #{tpu_custom_call.1} parent=43 // pred_region
          %260 = dma.done [#allocation6], 512
        $region52: #{tpu_custom_call.1} parent=43 // pred_fallthru
          _
        %s261 = sand.u32 %s32, 1
        %s262 = scalar_lea.sflag [#allocation3], %s261
        %s263 = sand.u32 %s32, 1
        %s264 = smul.addr %s263, 16
        %s265 = scalar_lea.vmem [#allocation2], %s264
        %p266 = pneg %p45
        %p267 = pneg %p42
        %p268 = pneg %p66
        %p269 = pneg %p63
        %p270 = pneg %p87
        %p271 = pneg %p84
        %p272 = pneg %p108
        %p273 = pneg %p105
        %p274 = pneg %p129
        %p275 = pneg %p126
        %p276 = pneg %p150
        %p277 = pneg %p147
        %p278 = pneg %p176
        %p279 = pneg %p173
        %s280 = sand.u32 %s163, 1
        %s281 = scalar_lea.sflag [#allocation4], %s280
        %s282 = sand.u32 %s163, 1
        %s283 = smul.addr %s282, 16
        %s284 = scalar_lea.vmem [#allocation7], %s283
        %s285 = smul.u32 2, %s24
        %s286 = smul.u32 2, %s24
        %v287 = vld [vmem:[%s252] sm:$0xff]
        %v288 = vld [vmem:[%s252 + $0x8] sm:$0xff]
        %v289 = vld [vmem:[#allocation5] sm:$0xff]
        %v290 = vld [vmem:[#allocation5 + $0x8] sm:$0xff]
        %v291 = vld [vmem:[#allocation5 + $0x10] sm:$0xff]
        %v292 = vld [vmem:[#allocation5 + $0x18] sm:$0xff]
        %v293 = vld [vmem:[%s3] sm:$0x1]
        %v294 = vlaneseq
        %v295 = vshrl.u32 %v294, 7
        %v296 = vsub.s32 0, %v295
        %v297 = vrot.slane %v293, %v296
        %vm298 = vcmask 261120
        %v300 = vsel %vm298, %v287, 0
        %v303 = vsel %vm298, %v288, 0
        %305 = vmatprep.subr.mxu0 0.0
        %v306 = vand.u32 %v289, 4294901760
        %307 = vmatpush1.msra.mxu0 %v306
        %308 = vmatprep.subr.mxu0 0.0
        %v309 = vand.u32 %v290, 4294901760
        %310 = vmatpush1.msra.mxu0 %v309
        %311 = vmatprep.subr.mxu0 0.0
        %v312 = vand.u32 %v291, 4294901760
        %313 = vmatpush1.msra.mxu0 %v312
        %314 = vmatprep.subr.mxu0 0.0
        %v315 = vand.u32 %v292, 4294901760
        %316 = vmatpush1.msra.mxu0 %v315
        %317 = vmatprep.subr.mxu0 0.0
        %318 = vmatpush1.msra.mxu0 0.0
        %319 = vmatprep.subr.mxu0 0.0
        %320 = vmatpush1.msra.mxu0 0.0
        %321 = vmatprep.subr.mxu0 0.0
        %322 = vmatpush1.msra.mxu0 0.0
        %323 = vmatprep.subr.mxu0 0.0
        %324 = vmatpush1.msra.mxu0 0.0
        %325 = vmatprep.subr.mxu0 0.0
        %326 = vmatpush1.msra.mxu0 0.0
        %327 = vmatprep.subr.mxu0 0.0
        %328 = vmatpush1.msra.mxu0 0.0
        %329 = vmatprep.subr.mxu0 0.0
        %330 = vmatpush1.msra.mxu0 0.0
        %331 = vmatprep.subr.mxu0 0.0
        %332 = vmatpush1.msra.mxu0 0.0
        %333 = vmatprep.subr.mxu0 0.0
        %334 = vmatpush1.msra.mxu0 0.0
        %335 = vmatprep.subr.mxu0 0.0
        %336 = vmatpush1.msra.mxu0 0.0
        %337 = vmatprep.subr.mxu0 0.0
        %338 = vmatpush1.msra.mxu0 0.0
        %339 = vmatprep.subr.mxu0 0.0
        %340 = vmatpush1.msra.mxu0 0.0
        %341 = vmatprep.subr.mxu0 0.0
        %342 = vmatpush1.msra.mxu0 0.0
        %343 = vmatprep.subr.mxu0 0.0
        %344 = vmatpush1.msra.mxu0 0.0
        %345 = vmatprep.subr.mxu0 0.0
        %346 = vmatpush1.msra.mxu0 0.0
        %347 = vmatprep.subr.mxu0 0.0
        %348 = vmatpush1.msra.mxu0 0.0
        %349 = vmatprep.subr.mxu0 0.0
        %350 = vmatpush1.msra.mxu0 0.0
        %351 = vmatprep.subr.mxu0 0.0
        %352 = vmatpush1.msra.mxu0 0.0
        %353 = vmatprep.subr.mxu0 0.0
        %354 = vmatpush1.msra.mxu0 0.0
        %355 = vmatprep.subr.mxu0 0.0
        %356 = vmatpush1.msra.mxu0 0.0
        %357 = vmatprep.subr.mxu0 0.0
        %358 = vmatpush1.msra.mxu0 0.0
        %359 = vmatprep.subr.mxu0 0.0
        %360 = vmatpush1.msra.mxu0 0.0
        %361 = vmatprep.subr.mxu0 0.0
        %362 = vmatpush1.msra.mxu0 0.0
        %363 = vmatprep.subr.mxu0 0.0
        %364 = vmatpush1.msra.mxu0 0.0
        %365 = vmatprep.subr.mxu0 0.0
        %366 = vmatpush1.msra.mxu0 0.0
        %367 = vmatprep.subr.mxu0 0.0
        %368 = vmatpush1.msra.mxu0 0.0
        %369 = vmatprep.subr.mxu0 0.0
        %370 = vmatpush1.msra.mxu0 0.0
        %371 = vmatprep.subr.mxu0 0.0
        %372 = vmatpush1.msra.mxu0 0.0
        %373 = vmatprep.mubr.f32.mxu0 0.0
        %v374 = vand.u32 %v300, 4294901760
        %v375 = vsub.f32 %v300, %v374
        %v376 = vand.u32 %v375, 4294901760
        %v377 = vsub.f32 %v375, %v376
        %v378 = vand.u32 %v377, 4294901760
        %379 = vmatmul.mubr.f32.gmra.mrb[0].mxu0 %v378
        %v380 = vpop.f32.mrb[0].mxu0
        %v381 = vadd.f32 %v297, %v380
        %v382 = vpop.f32.mrb[0].mxu0
        %383 = vmatprep.mubr.f32.mxu0 0.0
        %v384 = vand.u32 %v303, 4294901760
        %v385 = vsub.f32 %v303, %v384
        %v386 = vand.u32 %v385, 4294901760
        %v387 = vsub.f32 %v385, %v386
        %v388 = vand.u32 %v387, 4294901760
        %389 = vmatmul.mubr.f32.gmra.mrb[0].mxu0 %v388
        %v390 = vpop.f32.mrb[0].mxu0
        %v391 = vadd.f32 %v297, %v390
        %v392 = vpop.f32.mrb[0].mxu0
        %393 = vdwg.mxu0
        %394 = vmatprep.subr.mxu0 0.0
        %v395 = vand.u32 %v289, 4294901760
        %v396 = vsub.f32 %v289, %v395
        %v397 = vand.u32 %v396, 4294901760
        %v398 = vsub.f32 %v396, %v397
        %v399 = vand.u32 %v398, 4294901760
        %400 = vmatpush1.msra.mxu0 %v399
        %401 = vmatprep.subr.mxu0 0.0
        %v402 = vand.u32 %v290, 4294901760
        %v403 = vsub.f32 %v290, %v402
        %v404 = vand.u32 %v403, 4294901760
        %v405 = vsub.f32 %v403, %v404
        %v406 = vand.u32 %v405, 4294901760
        %407 = vmatpush1.msra.mxu0 %v406
        %408 = vmatprep.subr.mxu0 0.0
        %v409 = vand.u32 %v291, 4294901760
        %v410 = vsub.f32 %v291, %v409
        %v411 = vand.u32 %v410, 4294901760
        %v412 = vsub.f32 %v410, %v411
        %v413 = vand.u32 %v412, 4294901760
        %414 = vmatpush1.msra.mxu0 %v413
        %415 = vmatprep.subr.mxu0 0.0
        %v416 = vand.u32 %v292, 4294901760
        %v417 = vsub.f32 %v292, %v416
        %v418 = vand.u32 %v417, 4294901760
        %v419 = vsub.f32 %v417, %v418
        %v420 = vand.u32 %v419, 4294901760
        %421 = vmatpush1.msra.mxu0 %v420
        %422 = vmatprep.subr.mxu0 0.0
        %423 = vmatpush1.msra.mxu0 0.0
        %424 = vmatprep.subr.mxu0 0.0
        %425 = vmatpush1.msra.mxu0 0.0
        %426 = vmatprep.subr.mxu0 0.0
        %427 = vmatpush1.msra.mxu0 0.0
        %428 = vmatprep.subr.mxu0 0.0
        %429 = vmatpush1.msra.mxu0 0.0
        %430 = vmatprep.subr.mxu0 0.0
        %431 = vmatpush1.msra.mxu0 0.0
        %432 = vmatprep.subr.mxu0 0.0
        %433 = vmatpush1.msra.mxu0 0.0
        %434 = vmatprep.subr.mxu0 0.0
        %435 = vmatpush1.msra.mxu0 0.0
        %436 = vmatprep.subr.mxu0 0.0
        %437 = vmatpush1.msra.mxu0 0.0
        %438 = vmatprep.subr.mxu0 0.0
        %439 = vmatpush1.msra.mxu0 0.0
        %440 = vmatprep.subr.mxu0 0.0
        %441 = vmatpush1.msra.mxu0 0.0
        %442 = vmatprep.subr.mxu0 0.0
        %443 = vmatpush1.msra.mxu0 0.0
        %444 = vmatprep.subr.mxu0 0.0
        %445 = vmatpush1.msra.mxu0 0.0
        %446 = vmatprep.subr.mxu0 0.0
        %447 = vmatpush1.msra.mxu0 0.0
        %448 = vmatprep.subr.mxu0 0.0
        %449 = vmatpush1.msra.mxu0 0.0
        %450 = vmatprep.subr.mxu0 0.0
        %451 = vmatpush1.msra.mxu0 0.0
        %452 = vmatprep.subr.mxu0 0.0
        %453 = vmatpush1.msra.mxu0 0.0
        %454 = vmatprep.subr.mxu0 0.0
        %455 = vmatpush1.msra.mxu0 0.0
        %456 = vmatprep.subr.mxu0 0.0
        %457 = vmatpush1.msra.mxu0 0.0
        %458 = vmatprep.subr.mxu0 0.0
        %459 = vmatpush1.msra.mxu0 0.0
        %460 = vmatprep.subr.mxu0 0.0
        %461 = vmatpush1.msra.mxu0 0.0
        %462 = vmatprep.subr.mxu0 0.0
        %463 = vmatpush1.msra.mxu0 0.0
        %464 = vmatprep.subr.mxu0 0.0
        %465 = vmatpush1.msra.mxu0 0.0
        %466 = vmatprep.subr.mxu0 0.0
        %467 = vmatpush1.msra.mxu0 0.0
        %468 = vmatprep.subr.mxu0 0.0
        %469 = vmatpush1.msra.mxu0 0.0
        %470 = vmatprep.subr.mxu0 0.0
        %471 = vmatpush1.msra.mxu0 0.0
        %472 = vmatprep.subr.mxu0 0.0
        %473 = vmatpush1.msra.mxu0 0.0
        %474 = vmatprep.subr.mxu0 0.0
        %475 = vmatpush1.msra.mxu0 0.0
        %476 = vmatprep.subr.mxu0 0.0
        %477 = vmatpush1.msra.mxu0 0.0
        %478 = vmatprep.mubr.f32.mxu0 0.0
        %v479 = vand.u32 %v300, 4294901760
        %480 = vmatmul.mubr.f32.gmra.mrb[0].mxu0 %v479
        %v481 = vpop.f32.mrb[0].mxu0
        %v482 = vadd.f32 %v381, %v481
        %v483 = vpop.f32.mrb[0].mxu0
        %484 = vmatprep.mubr.f32.mxu0 0.0
        %v485 = vand.u32 %v303, 4294901760
        %486 = vmatmul.mubr.f32.gmra.mrb[0].mxu0 %v485
        %v487 = vpop.f32.mrb[0].mxu0
        %v488 = vadd.f32 %v391, %v487
        %v489 = vpop.f32.mrb[0].mxu0
        %490 = vdwg.mxu0
        %491 = vmatprep.subr.mxu0 0.0
        %v492 = vand.u32 %v289, 4294901760
        %v493 = vsub.f32 %v289, %v492
        %494 = vmatpush1.msra.mxu0 %v493
        %495 = vmatprep.subr.mxu0 0.0
        %v496 = vand.u32 %v290, 4294901760
        %v497 = vsub.f32 %v290, %v496
        %498 = vmatpush1.msra.mxu0 %v497
        %499 = vmatprep.subr.mxu0 0.0
        %v500 = vand.u32 %v291, 4294901760
        %v501 = vsub.f32 %v291, %v500
        %502 = vmatpush1.msra.mxu0 %v501
        %503 = vmatprep.subr.mxu0 0.0
        %v504 = vand.u32 %v292, 4294901760
        %v505 = vsub.f32 %v292, %v504
        %506 = vmatpush1.msra.mxu0 %v505
        %507 = vmatprep.subr.mxu0 0.0
        %508 = vmatpush1.msra.mxu0 0.0
        %509 = vmatprep.subr.mxu0 0.0
        %510 = vmatpush1.msra.mxu0 0.0
        %511 = vmatprep.subr.mxu0 0.0
        %512 = vmatpush1.msra.mxu0 0.0
        %513 = vmatprep.subr.mxu0 0.0
        %514 = vmatpush1.msra.mxu0 0.0
        %515 = vmatprep.subr.mxu0 0.0
        %516 = vmatpush1.msra.mxu0 0.0
        %517 = vmatprep.subr.mxu0 0.0
        %518 = vmatpush1.msra.mxu0 0.0
        %519 = vmatprep.subr.mxu0 0.0
        %520 = vmatpush1.msra.mxu0 0.0
        %521 = vmatprep.subr.mxu0 0.0
        %522 = vmatpush1.msra.mxu0 0.0
        %523 = vmatprep.subr.mxu0 0.0
        %524 = vmatpush1.msra.mxu0 0.0
        %525 = vmatprep.subr.mxu0 0.0
        %526 = vmatpush1.msra.mxu0 0.0
        %527 = vmatprep.subr.mxu0 0.0
        %528 = vmatpush1.msra.mxu0 0.0
        %529 = vmatprep.subr.mxu0 0.0
        %530 = vmatpush1.msra.mxu0 0.0
        %531 = vmatprep.subr.mxu0 0.0
        %532 = vmatpush1.msra.mxu0 0.0
        %533 = vmatprep.subr.mxu0 0.0
        %534 = vmatpush1.msra.mxu0 0.0
        %535 = vmatprep.subr.mxu0 0.0
        %536 = vmatpush1.msra.mxu0 0.0
        %537 = vmatprep.subr.mxu0 0.0
        %538 = vmatpush1.msra.mxu0 0.0
        %539 = vmatprep.subr.mxu0 0.0
        %540 = vmatpush1.msra.mxu0 0.0
        %541 = vmatprep.subr.mxu0 0.0
        %542 = vmatpush1.msra.mxu0 0.0
        %543 = vmatprep.subr.mxu0 0.0
        %544 = vmatpush1.msra.mxu0 0.0
        %545 = vmatprep.subr.mxu0 0.0
        %546 = vmatpush1.msra.mxu0 0.0
        %547 = vmatprep.subr.mxu0 0.0
        %548 = vmatpush1.msra.mxu0 0.0
        %549 = vmatprep.subr.mxu0 0.0
        %550 = vmatpush1.msra.mxu0 0.0
        %551 = vmatprep.subr.mxu0 0.0
        %552 = vmatpush1.msra.mxu0 0.0
        %553 = vmatprep.subr.mxu0 0.0
        %554 = vmatpush1.msra.mxu0 0.0
        %555 = vmatprep.subr.mxu0 0.0
        %556 = vmatpush1.msra.mxu0 0.0
        %557 = vmatprep.subr.mxu0 0.0
        %558 = vmatpush1.msra.mxu0 0.0
        %559 = vmatprep.subr.mxu0 0.0
        %560 = vmatpush1.msra.mxu0 0.0
        %561 = vmatprep.subr.mxu0 0.0
        %562 = vmatpush1.msra.mxu0 0.0
        %563 = vmatprep.mubr.f32.mxu0 0.0
        %v564 = vand.u32 %v300, 4294901760
        %v565 = vsub.f32 %v300, %v564
        %566 = vmatmul.mubr.f32.gmra.mrb[0].mxu0 %v565
        %v567 = vpop.f32.mrb[0].mxu0
        %v568 = vadd.f32 %v482, %v567
        %v569 = vpop.f32.mrb[0].mxu0
        %570 = vmatprep.mubr.f32.mxu0 0.0
        %v571 = vand.u32 %v303, 4294901760
        %v572 = vsub.f32 %v303, %v571
        %573 = vmatmul.mubr.f32.gmra.mrb[0].mxu0 %v572
        %v574 = vpop.f32.mrb[0].mxu0
        %v575 = vadd.f32 %v488, %v574
        %v576 = vpop.f32.mrb[0].mxu0
        %577 = vdwg.mxu0
        %578 = vmatprep.subr.mxu0 0.0
        %v579 = vand.u32 %v289, 4294901760
        %580 = vmatpush1.msra.mxu0 %v579
        %581 = vmatprep.subr.mxu0 0.0
        %v582 = vand.u32 %v290, 4294901760
        %583 = vmatpush1.msra.mxu0 %v582
        %584 = vmatprep.subr.mxu0 0.0
        %v585 = vand.u32 %v291, 4294901760
        %586 = vmatpush1.msra.mxu0 %v585
        %587 = vmatprep.subr.mxu0 0.0
        %v588 = vand.u32 %v292, 4294901760
        %589 = vmatpush1.msra.mxu0 %v588
        %590 = vmatprep.subr.mxu0 0.0
        %591 = vmatpush1.msra.mxu0 0.0
        %592 = vmatprep.subr.mxu0 0.0
        %593 = vmatpush1.msra.mxu0 0.0
        %594 = vmatprep.subr.mxu0 0.0
        %595 = vmatpush1.msra.mxu0 0.0
        %596 = vmatprep.subr.mxu0 0.0
        %597 = vmatpush1.msra.mxu0 0.0
        %598 = vmatprep.subr.mxu0 0.0
        %599 = vmatpush1.msra.mxu0 0.0
        %600 = vmatprep.subr.mxu0 0.0
        %601 = vmatpush1.msra.mxu0 0.0
        %602 = vmatprep.subr.mxu0 0.0
        %603 = vmatpush1.msra.mxu0 0.0
        %604 = vmatprep.subr.mxu0 0.0
        %605 = vmatpush1.msra.mxu0 0.0
        %606 = vmatprep.subr.mxu0 0.0
        %607 = vmatpush1.msra.mxu0 0.0
        %608 = vmatprep.subr.mxu0 0.0
        %609 = vmatpush1.msra.mxu0 0.0
        %610 = vmatprep.subr.mxu0 0.0
        %611 = vmatpush1.msra.mxu0 0.0
        %612 = vmatprep.subr.mxu0 0.0
        %613 = vmatpush1.msra.mxu0 0.0
        %614 = vmatprep.subr.mxu0 0.0
        %615 = vmatpush1.msra.mxu0 0.0
        %616 = vmatprep.subr.mxu0 0.0
        %617 = vmatpush1.msra.mxu0 0.0
        %618 = vmatprep.subr.mxu0 0.0
        %619 = vmatpush1.msra.mxu0 0.0
        %620 = vmatprep.subr.mxu0 0.0
        %621 = vmatpush1.msra.mxu0 0.0
        %622 = vmatprep.subr.mxu0 0.0
        %623 = vmatpush1.msra.mxu0 0.0
        %624 = vmatprep.subr.mxu0 0.0
        %625 = vmatpush1.msra.mxu0 0.0
        %626 = vmatprep.subr.mxu0 0.0
        %627 = vmatpush1.msra.mxu0 0.0
        %628 = vmatprep.subr.mxu0 0.0
        %629 = vmatpush1.msra.mxu0 0.0
        %630 = vmatprep.subr.mxu0 0.0
        %631 = vmatpush1.msra.mxu0 0.0
        %632 = vmatprep.subr.mxu0 0.0
        %633 = vmatpush1.msra.mxu0 0.0
        %634 = vmatprep.subr.mxu0 0.0
        %635 = vmatpush1.msra.mxu0 0.0
        %636 = vmatprep.subr.mxu0 0.0
        %637 = vmatpush1.msra.mxu0 0.0
        %638 = vmatprep.subr.mxu0 0.0
        %639 = vmatpush1.msra.mxu0 0.0
        %640 = vmatprep.subr.mxu0 0.0
        %641 = vmatpush1.msra.mxu0 0.0
        %642 = vmatprep.subr.mxu0 0.0
        %643 = vmatpush1.msra.mxu0 0.0
        %644 = vmatprep.subr.mxu0 0.0
        %645 = vmatpush1.msra.mxu0 0.0
        %646 = vmatprep.mubr.f32.mxu0 0.0
        %v647 = vand.u32 %v300, 4294901760
        %v648 = vsub.f32 %v300, %v647
        %v649 = vand.u32 %v648, 4294901760
        %650 = vmatmul.mubr.f32.gmra.mrb[0].mxu0 %v649
        %v651 = vpop.f32.mrb[0].mxu0
        %v652 = vadd.f32 %v568, %v651
        %v653 = vpop.f32.mrb[0].mxu0
        %654 = vmatprep.mubr.f32.mxu0 0.0
        %v655 = vand.u32 %v303, 4294901760
        %v656 = vsub.f32 %v303, %v655
        %v657 = vand.u32 %v656, 4294901760
        %658 = vmatmul.mubr.f32.gmra.mrb[0].mxu0 %v657
        %v659 = vpop.f32.mrb[0].mxu0
        %v660 = vadd.f32 %v575, %v659
        %v661 = vpop.f32.mrb[0].mxu0
        %662 = vdwg.mxu0
        %663 = vmatprep.subr.mxu0 0.0
        %v664 = vand.u32 %v289, 4294901760
        %v665 = vsub.f32 %v289, %v664
        %v666 = vand.u32 %v665, 4294901760
        %667 = vmatpush1.msra.mxu0 %v666
        %668 = vmatprep.subr.mxu0 0.0
        %v669 = vand.u32 %v290, 4294901760
        %v670 = vsub.f32 %v290, %v669
        %v671 = vand.u32 %v670, 4294901760
        %672 = vmatpush1.msra.mxu0 %v671
        %673 = vmatprep.subr.mxu0 0.0
        %v674 = vand.u32 %v291, 4294901760
        %v675 = vsub.f32 %v291, %v674
        %v676 = vand.u32 %v675, 4294901760
        %677 = vmatpush1.msra.mxu0 %v676
        %678 = vmatprep.subr.mxu0 0.0
        %v679 = vand.u32 %v292, 4294901760
        %v680 = vsub.f32 %v292, %v679
        %v681 = vand.u32 %v680, 4294901760
        %682 = vmatpush1.msra.mxu0 %v681
        %683 = vmatprep.subr.mxu0 0.0
        %684 = vmatpush1.msra.mxu0 0.0
        %685 = vmatprep.subr.mxu0 0.0
        %686 = vmatpush1.msra.mxu0 0.0
        %687 = vmatprep.subr.mxu0 0.0
        %688 = vmatpush1.msra.mxu0 0.0
        %689 = vmatprep.subr.mxu0 0.0
        %690 = vmatpush1.msra.mxu0 0.0
        %691 = vmatprep.subr.mxu0 0.0
        %692 = vmatpush1.msra.mxu0 0.0
        %693 = vmatprep.subr.mxu0 0.0
        %694 = vmatpush1.msra.mxu0 0.0
        %695 = vmatprep.subr.mxu0 0.0
        %696 = vmatpush1.msra.mxu0 0.0
        %697 = vmatprep.subr.mxu0 0.0
        %698 = vmatpush1.msra.mxu0 0.0
        %699 = vmatprep.subr.mxu0 0.0
        %700 = vmatpush1.msra.mxu0 0.0
        %701 = vmatprep.subr.mxu0 0.0
        %702 = vmatpush1.msra.mxu0 0.0
        %703 = vmatprep.subr.mxu0 0.0
        %704 = vmatpush1.msra.mxu0 0.0
        %705 = vmatprep.subr.mxu0 0.0
        %706 = vmatpush1.msra.mxu0 0.0
        %707 = vmatprep.subr.mxu0 0.0
        %708 = vmatpush1.msra.mxu0 0.0
        %709 = vmatprep.subr.mxu0 0.0
        %710 = vmatpush1.msra.mxu0 0.0
        %711 = vmatprep.subr.mxu0 0.0
        %712 = vmatpush1.msra.mxu0 0.0
        %713 = vmatprep.subr.mxu0 0.0
        %714 = vmatpush1.msra.mxu0 0.0
        %715 = vmatprep.subr.mxu0 0.0
        %716 = vmatpush1.msra.mxu0 0.0
        %717 = vmatprep.subr.mxu0 0.0
        %718 = vmatpush1.msra.mxu0 0.0
        %719 = vmatprep.subr.mxu0 0.0
        %720 = vmatpush1.msra.mxu0 0.0
        %721 = vmatprep.subr.mxu0 0.0
        %722 = vmatpush1.msra.mxu0 0.0
        %723 = vmatprep.subr.mxu0 0.0
        %724 = vmatpush1.msra.mxu0 0.0
        %725 = vmatprep.subr.mxu0 0.0
        %726 = vmatpush1.msra.mxu0 0.0
        %727 = vmatprep.subr.mxu0 0.0
        %728 = vmatpush1.msra.mxu0 0.0
        %729 = vmatprep.subr.mxu0 0.0
        %730 = vmatpush1.msra.mxu0 0.0
        %731 = vmatprep.subr.mxu0 0.0
        %732 = vmatpush1.msra.mxu0 0.0
        %733 = vmatprep.subr.mxu0 0.0
        %734 = vmatpush1.msra.mxu0 0.0
        %735 = vmatprep.subr.mxu0 0.0
        %736 = vmatpush1.msra.mxu0 0.0
        %737 = vmatprep.subr.mxu0 0.0
        %738 = vmatpush1.msra.mxu0 0.0
        %739 = vmatprep.mubr.f32.mxu0 0.0
        %v740 = vand.u32 %v300, 4294901760
        %741 = vmatmul.mubr.f32.gmra.mrb[0].mxu0 %v740
        %v742 = vpop.f32.mrb[0].mxu0
        %v743 = vadd.f32 %v652, %v742
        %v744 = vpop.f32.mrb[0].mxu0
        %745 = vmatprep.mubr.f32.mxu0 0.0
        %v746 = vand.u32 %v303, 4294901760
        %747 = vmatmul.mubr.f32.gmra.mrb[0].mxu0 %v746
        %v748 = vpop.f32.mrb[0].mxu0
        %v749 = vadd.f32 %v660, %v748
        %v750 = vpop.f32.mrb[0].mxu0
        %751 = vdwg.mxu0
        %752 = vmatprep.subr.mxu0 0.0
        %v753 = vand.u32 %v289, 4294901760
        %754 = vmatpush1.msra.mxu0 %v753
        %755 = vmatprep.subr.mxu0 0.0
        %v756 = vand.u32 %v290, 4294901760
        %757 = vmatpush1.msra.mxu0 %v756
        %758 = vmatprep.subr.mxu0 0.0
        %v759 = vand.u32 %v291, 4294901760
        %760 = vmatpush1.msra.mxu0 %v759
        %761 = vmatprep.subr.mxu0 0.0
        %v762 = vand.u32 %v292, 4294901760
        %763 = vmatpush1.msra.mxu0 %v762
        %764 = vmatprep.subr.mxu0 0.0
        %765 = vmatpush1.msra.mxu0 0.0
        %766 = vmatprep.subr.mxu0 0.0
        %767 = vmatpush1.msra.mxu0 0.0
        %768 = vmatprep.subr.mxu0 0.0
        %769 = vmatpush1.msra.mxu0 0.0
        %770 = vmatprep.subr.mxu0 0.0
        %771 = vmatpush1.msra.mxu0 0.0
        %772 = vmatprep.subr.mxu0 0.0
        %773 = vmatpush1.msra.mxu0 0.0
        %774 = vmatprep.subr.mxu0 0.0
        %775 = vmatpush1.msra.mxu0 0.0
        %776 = vmatprep.subr.mxu0 0.0
        %777 = vmatpush1.msra.mxu0 0.0
        %778 = vmatprep.subr.mxu0 0.0
        %779 = vmatpush1.msra.mxu0 0.0
        %780 = vmatprep.subr.mxu0 0.0
        %781 = vmatpush1.msra.mxu0 0.0
        %782 = vmatprep.subr.mxu0 0.0
        %783 = vmatpush1.msra.mxu0 0.0
        %784 = vmatprep.subr.mxu0 0.0
        %785 = vmatpush1.msra.mxu0 0.0
        %786 = vmatprep.subr.mxu0 0.0
        %787 = vmatpush1.msra.mxu0 0.0
        %788 = vmatprep.subr.mxu0 0.0
        %789 = vmatpush1.msra.mxu0 0.0
        %790 = vmatprep.subr.mxu0 0.0
        %791 = vmatpush1.msra.mxu0 0.0
        %792 = vmatprep.subr.mxu0 0.0
        %793 = vmatpush1.msra.mxu0 0.0
        %794 = vmatprep.subr.mxu0 0.0
        %795 = vmatpush1.msra.mxu0 0.0
        %796 = vmatprep.subr.mxu0 0.0
        %797 = vmatpush1.msra.mxu0 0.0
        %798 = vmatprep.subr.mxu0 0.0
        %799 = vmatpush1.msra.mxu0 0.0
        %800 = vmatprep.subr.mxu0 0.0
        %801 = vmatpush1.msra.mxu0 0.0
        %802 = vmatprep.subr.mxu0 0.0
        %803 = vmatpush1.msra.mxu0 0.0
        %804 = vmatprep.subr.mxu0 0.0
        %805 = vmatpush1.msra.mxu0 0.0
        %806 = vmatprep.subr.mxu0 0.0
        %807 = vmatpush1.msra.mxu0 0.0
        %808 = vmatprep.subr.mxu0 0.0
        %809 = vmatpush1.msra.mxu0 0.0
        %810 = vmatprep.subr.mxu0 0.0
        %811 = vmatpush1.msra.mxu0 0.0
        %812 = vmatprep.subr.mxu0 0.0
        %813 = vmatpush1.msra.mxu0 0.0
        %814 = vmatprep.subr.mxu0 0.0
        %815 = vmatpush1.msra.mxu0 0.0
        %816 = vmatprep.subr.mxu0 0.0
        %817 = vmatpush1.msra.mxu0 0.0
        %818 = vmatprep.subr.mxu0 0.0
        %819 = vmatpush1.msra.mxu0 0.0
        %820 = vmatprep.mubr.f32.mxu0 0.0
        %v821 = vand.u32 %v300, 4294901760
        %822 = vmatmul.mubr.f32.gmra.mrb[0].mxu0 %v821
        %v823 = vpop.f32.mrb[0].mxu0
        %v824 = vadd.f32 %v743, %v823
        %v825 = vpop.f32.mrb[0].mxu0
        %826 = vmatprep.mubr.f32.mxu0 0.0
        %v827 = vand.u32 %v303, 4294901760
        %828 = vmatmul.mubr.f32.gmra.mrb[0].mxu0 %v827
        %v829 = vpop.f32.mrb[0].mxu0
        %v830 = vadd.f32 %v749, %v829
        %v831 = vpop.f32.mrb[0].mxu0
        %832 = vdwg.mxu0
        %v833 = vld [vmem:[%s3 + $0x2] sm:$0x1]
        %v834 = vld [vmem:[%s3 + $0x3] sm:$0x1]
        %835 = vadd.xlane.f32.xlu0 %v824
        %v836 = vpop.xlane.xlu0 %835
        %837 = vadd.xlane.f32.xlu0 %v830
        %v838 = vpop.xlane.xlu0 %837
        %v839 = vrcp.pop 128.0
        %v840 = vmul.f32 %v836, %v839
        %v841 = vmul.f32 %v838, %v839
        %v842 = vsub.f32 %v824, %v840
        %v843 = vsub.f32 %v830, %v841
        %v844 = vmul.f32 %v842, %v842
        %v845 = vmul.f32 %v843, %v843
        %846 = vadd.xlane.f32.xlu0 %v844
        %v847 = vpop.xlane.xlu0 %846
        %848 = vadd.xlane.f32.xlu0 %v845
        %v849 = vpop.xlane.xlu0 %848
        %v850 = vmul.f32 %v847, %v839
        %v851 = vmul.f32 %v849, %v839
        %v852 = vadd.f32 %v850, 0.001
        %v853 = vadd.f32 %v851, 0.001
        %v854 = vrsqrt.pop %v852
        %v855 = vrsqrt.pop %v853
        %v856 = vmul.f32 %v842, %v854
        %v857 = vmul.f32 %v843, %v855
        %v858 = vlaneseq
        %v859 = vshrl.u32 %v858, 7
        %v860 = vsub.s32 0, %v859
        %v861 = vrot.slane %v833, %v860
        %v862 = vmul.f32 %v856, %v861
        %v863 = vmul.f32 %v857, %v861
        %v864 = vlaneseq
        %v865 = vshrl.u32 %v864, 7
        %v866 = vsub.s32 0, %v865
        %v867 = vrot.slane %v834, %v866
        %v868 = vadd.f32 %v862, %v867
        %v869 = vadd.f32 %v863, %v867
        %v870 = vxor.u32 %v868, 2147483648
        %v871 = vxor.u32 %v869, 2147483648
        %v872 = vmul.f32 %v870, 1.442695
        %v873 = vpow.pop %v872
        %v874 = vmul.f32 %v871, 1.442695
        %v875 = vpow.pop %v874
        %v876 = vadd.f32 %v873, 1.0
        %v877 = vadd.f32 %v875, 1.0
        %v878 = vrcp.pop %v876
        %v879 = vmul.f32 1.0, %v878
        %v880 = vrcp.pop %v877
        %v881 = vmul.f32 1.0, %v880
        %v882 = vmul.f32 %v868, %v879
        %v883 = vmul.f32 %v869, %v881
        %v884 = vld [vmem:[%s5] sm:$0xff]
        %v885 = vld [vmem:[%s5 + $0x8] sm:$0xff]
        %v886 = vld [vmem:[%s5 + $0x10] sm:$0xff]
        %v887 = vld [vmem:[%s5 + $0x18] sm:$0xff]
        %v888 = vld [vmem:[%s5 + $0x20] sm:$0xff]
        %v889 = vld [vmem:[%s5 + $0x28] sm:$0xff]
        %v890 = vld [vmem:[%s5 + $0x30] sm:$0xff]
        %v891 = vld [vmem:[%s5 + $0x38] sm:$0xff]
        %v892 = vld [vmem:[%s5 + $0x40] sm:$0xff]
        %v893 = vld [vmem:[%s5 + $0x48] sm:$0xff]
        %v894 = vld [vmem:[%s5 + $0x50] sm:$0xff]
        %v895 = vld [vmem:[%s5 + $0x58] sm:$0xff]
        %v896 = vld [vmem:[%s5 + $0x60] sm:$0xff]
        %v897 = vld [vmem:[%s5 + $0x68] sm:$0xff]
        %v898 = vld [vmem:[%s5 + $0x70] sm:$0xff]
        %v899 = vld [vmem:[%s5 + $0x78] sm:$0xff]
        %v900 = vld [vmem:[%s3 + $0x1] sm:$0x1]
        %v901 = vlaneseq
        %v902 = vshrl.u32 %v901, 7
        %v903 = vsub.s32 0, %v902
        %v904 = vrot.slane %v900, %v903
        %905 = vmatprep.subr.mxu0 0.0
        %v906 = vand.u32 %v884, 4294901760
        %907 = vmatpush1.msra.mxu0 %v906
        %908 = vmatprep.subr.mxu0 0.0
        %v909 = vand.u32 %v885, 4294901760
        %910 = vmatpush1.msra.mxu0 %v909
        %911 = vmatprep.subr.mxu0 0.0
        %v912 = vand.u32 %v886, 4294901760
        %913 = vmatpush1.msra.mxu0 %v912
        %914 = vmatprep.subr.mxu0 0.0
        %v915 = vand.u32 %v887, 4294901760
        %916 = vmatpush1.msra.mxu0 %v915
        %917 = vmatprep.subr.mxu0 0.0
        %v918 = vand.u32 %v888, 4294901760
        %919 = vmatpush1.msra.mxu0 %v918
        %920 = vmatprep.subr.mxu0 0.0
        %v921 = vand.u32 %v889, 4294901760
        %922 = vmatpush1.msra.mxu0 %v921
        %923 = vmatprep.subr.mxu0 0.0
        %v924 = vand.u32 %v890, 4294901760
        %925 = vmatpush1.msra.mxu0 %v924
        %926 = vmatprep.subr.mxu0 0.0
        %v927 = vand.u32 %v891, 4294901760
        %928 = vmatpush1.msra.mxu0 %v927
        %929 = vmatprep.subr.mxu0 0.0
        %v930 = vand.u32 %v892, 4294901760
        %931 = vmatpush1.msra.mxu0 %v930
        %932 = vmatprep.subr.mxu0 0.0
        %v933 = vand.u32 %v893, 4294901760
        %934 = vmatpush1.msra.mxu0 %v933
        %935 = vmatprep.subr.mxu0 0.0
        %v936 = vand.u32 %v894, 4294901760
        %937 = vmatpush1.msra.mxu0 %v936
        %938 = vmatprep.subr.mxu0 0.0
        %v939 = vand.u32 %v895, 4294901760
        %940 = vmatpush1.msra.mxu0 %v939
        %941 = vmatprep.subr.mxu0 0.0
        %v942 = vand.u32 %v896, 4294901760
        %943 = vmatpush1.msra.mxu0 %v942
        %944 = vmatprep.subr.mxu0 0.0
        %v945 = vand.u32 %v897, 4294901760
        %946 = vmatpush1.msra.mxu0 %v945
        %947 = vmatprep.subr.mxu0 0.0
        %v948 = vand.u32 %v898, 4294901760
        %949 = vmatpush1.msra.mxu0 %v948
        %950 = vmatprep.subr.mxu0 0.0
        %v951 = vand.u32 %v899, 4294901760
        %952 = vmatpush1.msra.mxu0 %v951
        %953 = vmatprep.subr.mxu0 0.0
        %954 = vmatpush1.msra.mxu0 0.0
        %955 = vmatprep.subr.mxu0 0.0
        %956 = vmatpush1.msra.mxu0 0.0
        %957 = vmatprep.subr.mxu0 0.0
        %958 = vmatpush1.msra.mxu0 0.0
        %959 = vmatprep.subr.mxu0 0.0
        %960 = vmatpush1.msra.mxu0 0.0
        %961 = vmatprep.subr.mxu0 0.0
        %962 = vmatpush1.msra.mxu0 0.0
        %963 = vmatprep.subr.mxu0 0.0
        %964 = vmatpush1.msra.mxu0 0.0
        %965 = vmatprep.subr.mxu0 0.0
        %966 = vmatpush1.msra.mxu0 0.0
        %967 = vmatprep.subr.mxu0 0.0
        %968 = vmatpush1.msra.mxu0 0.0
        %969 = vmatprep.subr.mxu0 0.0
        %970 = vmatpush1.msra.mxu0 0.0
        %971 = vmatprep.subr.mxu0 0.0
        %972 = vmatpush1.msra.mxu0 0.0
        %973 = vmatprep.subr.mxu0 0.0
        %974 = vmatpush1.msra.mxu0 0.0
        %975 = vmatprep.subr.mxu0 0.0
        %976 = vmatpush1.msra.mxu0 0.0
        %977 = vmatprep.subr.mxu0 0.0
        %978 = vmatpush1.msra.mxu0 0.0
        %979 = vmatprep.subr.mxu0 0.0
        %980 = vmatpush1.msra.mxu0 0.0
        %981 = vmatprep.subr.mxu0 0.0
        %982 = vmatpush1.msra.mxu0 0.0
        %983 = vmatprep.subr.mxu0 0.0
        %984 = vmatpush1.msra.mxu0 0.0
        %985 = vmatprep.mubr.f32.mxu0 0.0
        %v986 = vand.u32 %v882, 4294901760
        %v987 = vsub.f32 %v882, %v986
        %v988 = vand.u32 %v987, 4294901760
        %v989 = vsub.f32 %v987, %v988
        %v990 = vand.u32 %v989, 4294901760
        %991 = vmatmul.mubr.f32.gmra.mrb[0].mxu0 %v990
        %v992 = vpop.f32.mrb[0].mxu0
        %v993 = vadd.f32 %v904, %v992
        %v994 = vpop.f32.mrb[0].mxu0
        %995 = vmatprep.mubr.f32.mxu0 0.0
        %v996 = vand.u32 %v883, 4294901760
        %v997 = vsub.f32 %v883, %v996
        %v998 = vand.u32 %v997, 4294901760
        %v999 = vsub.f32 %v997, %v998
        %v1000 = vand.u32 %v999, 4294901760
        %1001 = vmatmul.mubr.f32.gmra.mrb[0].mxu0 %v1000
        %v1002 = vpop.f32.mrb[0].mxu0
        %v1003 = vadd.f32 %v904, %v1002
        %v1004 = vpop.f32.mrb[0].mxu0
        %1005 = vdwg.mxu0
        %1006 = vmatprep.subr.mxu0 0.0
        %v1007 = vand.u32 %v884, 4294901760
        %v1008 = vsub.f32 %v884, %v1007
        %v1009 = vand.u32 %v1008, 4294901760
        %v1010 = vsub.f32 %v1008, %v1009
        %v1011 = vand.u32 %v1010, 4294901760
        %1012 = vmatpush1.msra.mxu0 %v1011
        %1013 = vmatprep.subr.mxu0 0.0
        %v1014 = vand.u32 %v885, 4294901760
        %v1015 = vsub.f32 %v885, %v1014
        %v1016 = vand.u32 %v1015, 4294901760
        %v1017 = vsub.f32 %v1015, %v1016
        %v1018 = vand.u32 %v1017, 4294901760
        %1019 = vmatpush1.msra.mxu0 %v1018
        %1020 = vmatprep.subr.mxu0 0.0
        %v1021 = vand.u32 %v886, 4294901760
        %v1022 = vsub.f32 %v886, %v1021
        %v1023 = vand.u32 %v1022, 4294901760
        %v1024 = vsub.f32 %v1022, %v1023
        %v1025 = vand.u32 %v1024, 4294901760
        %1026 = vmatpush1.msra.mxu0 %v1025
        %1027 = vmatprep.subr.mxu0 0.0
        %v1028 = vand.u32 %v887, 4294901760
        %v1029 = vsub.f32 %v887, %v1028
        %v1030 = vand.u32 %v1029, 4294901760
        %v1031 = vsub.f32 %v1029, %v1030
        %v1032 = vand.u32 %v1031, 4294901760
        %1033 = vmatpush1.msra.mxu0 %v1032
        %1034 = vmatprep.subr.mxu0 0.0
        %v1035 = vand.u32 %v888, 4294901760
        %v1036 = vsub.f32 %v888, %v1035
        %v1037 = vand.u32 %v1036, 4294901760
        %v1038 = vsub.f32 %v1036, %v1037
        %v1039 = vand.u32 %v1038, 4294901760
        %1040 = vmatpush1.msra.mxu0 %v1039
        %1041 = vmatprep.subr.mxu0 0.0
        %v1042 = vand.u32 %v889, 4294901760
        %v1043 = vsub.f32 %v889, %v1042
        %v1044 = vand.u32 %v1043, 4294901760
        %v1045 = vsub.f32 %v1043, %v1044
        %v1046 = vand.u32 %v1045, 4294901760
        %1047 = vmatpush1.msra.mxu0 %v1046
        %1048 = vmatprep.subr.mxu0 0.0
        %v1049 = vand.u32 %v890, 4294901760
        %v1050 = vsub.f32 %v890, %v1049
        %v1051 = vand.u32 %v1050, 4294901760
        %v1052 = vsub.f32 %v1050, %v1051
        %v1053 = vand.u32 %v1052, 4294901760
        %1054 = vmatpush1.msra.mxu0 %v1053
        %1055 = vmatprep.subr.mxu0 0.0
        %v1056 = vand.u32 %v891, 4294901760
        %v1057 = vsub.f32 %v891, %v1056
        %v1058 = vand.u32 %v1057, 4294901760
        %v1059 = vsub.f32 %v1057, %v1058
        %v1060 = vand.u32 %v1059, 4294901760
        %1061 = vmatpush1.msra.mxu0 %v1060
        %1062 = vmatprep.subr.mxu0 0.0
        %v1063 = vand.u32 %v892, 4294901760
        %v1064 = vsub.f32 %v892, %v1063
        %v1065 = vand.u32 %v1064, 4294901760
        %v1066 = vsub.f32 %v1064, %v1065
        %v1067 = vand.u32 %v1066, 4294901760
        %1068 = vmatpush1.msra.mxu0 %v1067
        %1069 = vmatprep.subr.mxu0 0.0
        %v1070 = vand.u32 %v893, 4294901760
        %v1071 = vsub.f32 %v893, %v1070
        %v1072 = vand.u32 %v1071, 4294901760
        %v1073 = vsub.f32 %v1071, %v1072
        %v1074 = vand.u32 %v1073, 4294901760
        %1075 = vmatpush1.msra.mxu0 %v1074
        %1076 = vmatprep.subr.mxu0 0.0
        %v1077 = vand.u32 %v894, 4294901760
        %v1078 = vsub.f32 %v894, %v1077
        %v1079 = vand.u32 %v1078, 4294901760
        %v1080 = vsub.f32 %v1078, %v1079
        %v1081 = vand.u32 %v1080, 4294901760
        %1082 = vmatpush1.msra.mxu0 %v1081
        %1083 = vmatprep.subr.mxu0 0.0
        %v1084 = vand.u32 %v895, 4294901760
        %v1085 = vsub.f32 %v895, %v1084
        %v1086 = vand.u32 %v1085, 4294901760
        %v1087 = vsub.f32 %v1085, %v1086
        %v1088 = vand.u32 %v1087, 4294901760
        %1089 = vmatpush1.msra.mxu0 %v1088
        %1090 = vmatprep.subr.mxu0 0.0
        %v1091 = vand.u32 %v896, 4294901760
        %v1092 = vsub.f32 %v896, %v1091
        %v1093 = vand.u32 %v1092, 4294901760
        %v1094 = vsub.f32 %v1092, %v1093
        %v1095 = vand.u32 %v1094, 4294901760
        %1096 = vmatpush1.msra.mxu0 %v1095
        %1097 = vmatprep.subr.mxu0 0.0
        %v1098 = vand.u32 %v897, 4294901760
        %v1099 = vsub.f32 %v897, %v1098
        %v1100 = vand.u32 %v1099, 4294901760
        %v1101 = vsub.f32 %v1099, %v1100
        %v1102 = vand.u32 %v1101, 4294901760
        %1103 = vmatpush1.msra.mxu0 %v1102
        %1104 = vmatprep.subr.mxu0 0.0
        %v1105 = vand.u32 %v898, 4294901760
        %v1106 = vsub.f32 %v898, %v1105
        %v1107 = vand.u32 %v1106, 4294901760
        %v1108 = vsub.f32 %v1106, %v1107
        %v1109 = vand.u32 %v1108, 4294901760
        %1110 = vmatpush1.msra.mxu0 %v1109
        %1111 = vmatprep.subr.mxu0 0.0
        %v1112 = vand.u32 %v899, 4294901760
        %v1113 = vsub.f32 %v899, %v1112
        %v1114 = vand.u32 %v1113, 4294901760
        %v1115 = vsub.f32 %v1113, %v1114
        %v1116 = vand.u32 %v1115, 4294901760
        %1117 = vmatpush1.msra.mxu0 %v1116
        %1118 = vmatprep.subr.mxu0 0.0
        %1119 = vmatpush1.msra.mxu0 0.0
        %1120 = vmatprep.subr.mxu0 0.0
        %1121 = vmatpush1.msra.mxu0 0.0
        %1122 = vmatprep.subr.mxu0 0.0
        %1123 = vmatpush1.msra.mxu0 0.0
        %1124 = vmatprep.subr.mxu0 0.0
        %1125 = vmatpush1.msra.mxu0 0.0
        %1126 = vmatprep.subr.mxu0 0.0
        %1127 = vmatpush1.msra.mxu0 0.0
        %1128 = vmatprep.subr.mxu0 0.0
        %1129 = vmatpush1.msra.mxu0 0.0
        %1130 = vmatprep.subr.mxu0 0.0
        %1131 = vmatpush1.msra.mxu0 0.0
        %1132 = vmatprep.subr.mxu0 0.0
        %1133 = vmatpush1.msra.mxu0 0.0
        %1134 = vmatprep.subr.mxu0 0.0
        %1135 = vmatpush1.msra.mxu0 0.0
        %1136 = vmatprep.subr.mxu0 0.0
        %1137 = vmatpush1.msra.mxu0 0.0
        %1138 = vmatprep.subr.mxu0 0.0
        %1139 = vmatpush1.msra.mxu0 0.0
        %1140 = vmatprep.subr.mxu0 0.0
        %1141 = vmatpush1.msra.mxu0 0.0
        %1142 = vmatprep.subr.mxu0 0.0
        %1143 = vmatpush1.msra.mxu0 0.0
        %1144 = vmatprep.subr.mxu0 0.0
        %1145 = vmatpush1.msra.mxu0 0.0
        %1146 = vmatprep.subr.mxu0 0.0
        %1147 = vmatpush1.msra.mxu0 0.0
        %1148 = vmatprep.subr.mxu0 0.0
        %1149 = vmatpush1.msra.mxu0 0.0
        %1150 = vmatprep.mubr.f32.mxu0 0.0
        %v1151 = vand.u32 %v882, 4294901760
        %1152 = vmatmul.mubr.f32.gmra.mrb[0].mxu0 %v1151
        %v1153 = vpop.f32.mrb[0].mxu0
        %v1154 = vadd.f32 %v993, %v1153
        %v1155 = vpop.f32.mrb[0].mxu0
        %1156 = vmatprep.mubr.f32.mxu0 0.0
        %v1157 = vand.u32 %v883, 4294901760
        %1158 = vmatmul.mubr.f32.gmra.mrb[0].mxu0 %v1157
        %v1159 = vpop.f32.mrb[0].mxu0
        %v1160 = vadd.f32 %v1003, %v1159
        %v1161 = vpop.f32.mrb[0].mxu0
        %1162 = vdwg.mxu0
        %1163 = vmatprep.subr.mxu0 0.0
        %v1164 = vand.u32 %v884, 4294901760
        %v1165 = vsub.f32 %v884, %v1164
        %1166 = vmatpush1.msra.mxu0 %v1165
        %1167 = vmatprep.subr.mxu0 0.0
        %v1168 = vand.u32 %v885, 4294901760
        %v1169 = vsub.f32 %v885, %v1168
        %1170 = vmatpush1.msra.mxu0 %v1169
        %1171 = vmatprep.subr.mxu0 0.0
        %v1172 = vand.u32 %v886, 4294901760
        %v1173 = vsub.f32 %v886, %v1172
        %1174 = vmatpush1.msra.mxu0 %v1173
        %1175 = vmatprep.subr.mxu0 0.0
        %v1176 = vand.u32 %v887, 4294901760
        %v1177 = vsub.f32 %v887, %v1176
        %1178 = vmatpush1.msra.mxu0 %v1177
        %1179 = vmatprep.subr.mxu0 0.0
        %v1180 = vand.u32 %v888, 4294901760
        %v1181 = vsub.f32 %v888, %v1180
        %1182 = vmatpush1.msra.mxu0 %v1181
        %1183 = vmatprep.subr.mxu0 0.0
        %v1184 = vand.u32 %v889, 4294901760
        %v1185 = vsub.f32 %v889, %v1184
        %1186 = vmatpush1.msra.mxu0 %v1185
        %1187 = vmatprep.subr.mxu0 0.0
        %v1188 = vand.u32 %v890, 4294901760
        %v1189 = vsub.f32 %v890, %v1188
        %1190 = vmatpush1.msra.mxu0 %v1189
        %1191 = vmatprep.subr.mxu0 0.0
        %v1192 = vand.u32 %v891, 4294901760
        %v1193 = vsub.f32 %v891, %v1192
        %1194 = vmatpush1.msra.mxu0 %v1193
        %1195 = vmatprep.subr.mxu0 0.0
        %v1196 = vand.u32 %v892, 4294901760
        %v1197 = vsub.f32 %v892, %v1196
        %1198 = vmatpush1.msra.mxu0 %v1197
        %1199 = vmatprep.subr.mxu0 0.0
        %v1200 = vand.u32 %v893, 4294901760
        %v1201 = vsub.f32 %v893, %v1200
        %1202 = vmatpush1.msra.mxu0 %v1201
        %1203 = vmatprep.subr.mxu0 0.0
        %v1204 = vand.u32 %v894, 4294901760
        %v1205 = vsub.f32 %v894, %v1204
        %1206 = vmatpush1.msra.mxu0 %v1205
        %1207 = vmatprep.subr.mxu0 0.0
        %v1208 = vand.u32 %v895, 4294901760
        %v1209 = vsub.f32 %v895, %v1208
        %1210 = vmatpush1.msra.mxu0 %v1209
        %1211 = vmatprep.subr.mxu0 0.0
        %v1212 = vand.u32 %v896, 4294901760
        %v1213 = vsub.f32 %v896, %v1212
        %1214 = vmatpush1.msra.mxu0 %v1213
        %1215 = vmatprep.subr.mxu0 0.0
        %v1216 = vand.u32 %v897, 4294901760
        %v1217 = vsub.f32 %v897, %v1216
        %1218 = vmatpush1.msra.mxu0 %v1217
        %1219 = vmatprep.subr.mxu0 0.0
        %v1220 = vand.u32 %v898, 4294901760
        %v1221 = vsub.f32 %v898, %v1220
        %1222 = vmatpush1.msra.mxu0 %v1221
        %1223 = vmatprep.subr.mxu0 0.0
        %v1224 = vand.u32 %v899, 4294901760
        %v1225 = vsub.f32 %v899, %v1224
        %1226 = vmatpush1.msra.mxu0 %v1225
        %1227 = vmatprep.subr.mxu0 0.0
        %1228 = vmatpush1.msra.mxu0 0.0
        %1229 = vmatprep.subr.mxu0 0.0
        %1230 = vmatpush1.msra.mxu0 0.0
        %1231 = vmatprep.subr.mxu0 0.0
        %1232 = vmatpush1.msra.mxu0 0.0
        %1233 = vmatprep.subr.mxu0 0.0
        %1234 = vmatpush1.msra.mxu0 0.0
        %1235 = vmatprep.subr.mxu0 0.0
        %1236 = vmatpush1.msra.mxu0 0.0
        %1237 = vmatprep.subr.mxu0 0.0
        %1238 = vmatpush1.msra.mxu0 0.0
        %1239 = vmatprep.subr.mxu0 0.0
        %1240 = vmatpush1.msra.mxu0 0.0
        %1241 = vmatprep.subr.mxu0 0.0
        %1242 = vmatpush1.msra.mxu0 0.0
        %1243 = vmatprep.subr.mxu0 0.0
        %1244 = vmatpush1.msra.mxu0 0.0
        %1245 = vmatprep.subr.mxu0 0.0
        %1246 = vmatpush1.msra.mxu0 0.0
        %1247 = vmatprep.subr.mxu0 0.0
        %1248 = vmatpush1.msra.mxu0 0.0
        %1249 = vmatprep.subr.mxu0 0.0
        %1250 = vmatpush1.msra.mxu0 0.0
        %1251 = vmatprep.subr.mxu0 0.0
        %1252 = vmatpush1.msra.mxu0 0.0
        %1253 = vmatprep.subr.mxu0 0.0
        %1254 = vmatpush1.msra.mxu0 0.0
        %1255 = vmatprep.subr.mxu0 0.0
        %1256 = vmatpush1.msra.mxu0 0.0
        %1257 = vmatprep.subr.mxu0 0.0
        %1258 = vmatpush1.msra.mxu0 0.0
        %1259 = vmatprep.mubr.f32.mxu0 0.0
        %v1260 = vand.u32 %v882, 4294901760
        %v1261 = vsub.f32 %v882, %v1260
        %1262 = vmatmul.mubr.f32.gmra.mrb[0].mxu0 %v1261
        %v1263 = vpop.f32.mrb[0].mxu0
        %v1264 = vadd.f32 %v1154, %v1263
        %v1265 = vpop.f32.mrb[0].mxu0
        %1266 = vmatprep.mubr.f32.mxu0 0.0
        %v1267 = vand.u32 %v883, 4294901760
        %v1268 = vsub.f32 %v883, %v1267
        %1269 = vmatmul.mubr.f32.gmra.mrb[0].mxu0 %v1268
        %v1270 = vpop.f32.mrb[0].mxu0
        %v1271 = vadd.f32 %v1160, %v1270
        %v1272 = vpop.f32.mrb[0].mxu0
        %1273 = vdwg.mxu0
        %1274 = vmatprep.subr.mxu0 0.0
        %v1275 = vand.u32 %v884, 4294901760
        %1276 = vmatpush1.msra.mxu0 %v1275
        %1277 = vmatprep.subr.mxu0 0.0
        %v1278 = vand.u32 %v885, 4294901760
        %1279 = vmatpush1.msra.mxu0 %v1278
        %1280 = vmatprep.subr.mxu0 0.0
        %v1281 = vand.u32 %v886, 4294901760
        %1282 = vmatpush1.msra.mxu0 %v1281
        %1283 = vmatprep.subr.mxu0 0.0
        %v1284 = vand.u32 %v887, 4294901760
        %1285 = vmatpush1.msra.mxu0 %v1284
        %1286 = vmatprep.subr.mxu0 0.0
        %v1287 = vand.u32 %v888, 4294901760
        %1288 = vmatpush1.msra.mxu0 %v1287
        %1289 = vmatprep.subr.mxu0 0.0
        %v1290 = vand.u32 %v889, 4294901760
        %1291 = vmatpush1.msra.mxu0 %v1290
        %1292 = vmatprep.subr.mxu0 0.0
        %v1293 = vand.u32 %v890, 4294901760
        %1294 = vmatpush1.msra.mxu0 %v1293
        %1295 = vmatprep.subr.mxu0 0.0
        %v1296 = vand.u32 %v891, 4294901760
        %1297 = vmatpush1.msra.mxu0 %v1296
        %1298 = vmatprep.subr.mxu0 0.0
        %v1299 = vand.u32 %v892, 4294901760
        %1300 = vmatpush1.msra.mxu0 %v1299
        %1301 = vmatprep.subr.mxu0 0.0
        %v1302 = vand.u32 %v893, 4294901760
        %1303 = vmatpush1.msra.mxu0 %v1302
        %1304 = vmatprep.subr.mxu0 0.0
        %v1305 = vand.u32 %v894, 4294901760
        %1306 = vmatpush1.msra.mxu0 %v1305
        %1307 = vmatprep.subr.mxu0 0.0
        %v1308 = vand.u32 %v895, 4294901760
        %1309 = vmatpush1.msra.mxu0 %v1308
        %1310 = vmatprep.subr.mxu0 0.0
        %v1311 = vand.u32 %v896, 4294901760
        %1312 = vmatpush1.msra.mxu0 %v1311
        %1313 = vmatprep.subr.mxu0 0.0
        %v1314 = vand.u32 %v897, 4294901760
        %1315 = vmatpush1.msra.mxu0 %v1314
        %1316 = vmatprep.subr.mxu0 0.0
        %v1317 = vand.u32 %v898, 4294901760
        %1318 = vmatpush1.msra.mxu0 %v1317
        %1319 = vmatprep.subr.mxu0 0.0
        %v1320 = vand.u32 %v899, 4294901760
        %1321 = vmatpush1.msra.mxu0 %v1320
        %1322 = vmatprep.subr.mxu0 0.0
        %1323 = vmatpush1.msra.mxu0 0.0
        %1324 = vmatprep.subr.mxu0 0.0
        %1325 = vmatpush1.msra.mxu0 0.0
        %1326 = vmatprep.subr.mxu0 0.0
        %1327 = vmatpush1.msra.mxu0 0.0
        %1328 = vmatprep.subr.mxu0 0.0
        %1329 = vmatpush1.msra.mxu0 0.0
        %1330 = vmatprep.subr.mxu0 0.0
        %1331 = vmatpush1.msra.mxu0 0.0
        %1332 = vmatprep.subr.mxu0 0.0
        %1333 = vmatpush1.msra.mxu0 0.0
        %1334 = vmatprep.subr.mxu0 0.0
        %1335 = vmatpush1.msra.mxu0 0.0
        %1336 = vmatprep.subr.mxu0 0.0
        %1337 = vmatpush1.msra.mxu0 0.0
        %1338 = vmatprep.subr.mxu0 0.0
        %1339 = vmatpush1.msra.mxu0 0.0
        %1340 = vmatprep.subr.mxu0 0.0
        %1341 = vmatpush1.msra.mxu0 0.0
        %1342 = vmatprep.subr.mxu0 0.0
        %1343 = vmatpush1.msra.mxu0 0.0
        %1344 = vmatprep.subr.mxu0 0.0
        %1345 = vmatpush1.msra.mxu0 0.0
        %1346 = vmatprep.subr.mxu0 0.0
        %1347 = vmatpush1.msra.mxu0 0.0
        %1348 = vmatprep.subr.mxu0 0.0
        %1349 = vmatpush1.msra.mxu0 0.0
        %1350 = vmatprep.subr.mxu0 0.0
        %1351 = vmatpush1.msra.mxu0 0.0
        %1352 = vmatprep.subr.mxu0 0.0
        %1353 = vmatpush1.msra.mxu0 0.0
        %1354 = vmatprep.mubr.f32.mxu0 0.0
        %v1355 = vand.u32 %v882, 4294901760
        %v1356 = vsub.f32 %v882, %v1355
        %v1357 = vand.u32 %v1356, 4294901760
        %1358 = vmatmul.mubr.f32.gmra.mrb[0].mxu0 %v1357
        %v1359 = vpop.f32.mrb[0].mxu0
        %v1360 = vadd.f32 %v1264, %v1359
        %v1361 = vpop.f32.mrb[0].mxu0
        %1362 = vmatprep.mubr.f32.mxu0 0.0
        %v1363 = vand.u32 %v883, 4294901760
        %v1364 = vsub.f32 %v883, %v1363
        %v1365 = vand.u32 %v1364, 4294901760
        %1366 = vmatmul.mubr.f32.gmra.mrb[0].mxu0 %v1365
        %v1367 = vpop.f32.mrb[0].mxu0
        %v1368 = vadd.f32 %v1271, %v1367
        %v1369 = vpop.f32.mrb[0].mxu0
        %1370 = vdwg.mxu0
        %1371 = vmatprep.subr.mxu0 0.0
        %v1372 = vand.u32 %v884, 4294901760
        %v1373 = vsub.f32 %v884, %v1372
        %v1374 = vand.u32 %v1373, 4294901760
        %1375 = vmatpush1.msra.mxu0 %v1374
        %1376 = vmatprep.subr.mxu0 0.0
        %v1377 = vand.u32 %v885, 4294901760
        %v1378 = vsub.f32 %v885, %v1377
        %v1379 = vand.u32 %v1378, 4294901760
        %1380 = vmatpush1.msra.mxu0 %v1379
        %1381 = vmatprep.subr.mxu0 0.0
        %v1382 = vand.u32 %v886, 4294901760
        %v1383 = vsub.f32 %v886, %v1382
        %v1384 = vand.u32 %v1383, 4294901760
        %1385 = vmatpush1.msra.mxu0 %v1384
        %1386 = vmatprep.subr.mxu0 0.0
        %v1387 = vand.u32 %v887, 4294901760
        %v1388 = vsub.f32 %v887, %v1387
        %v1389 = vand.u32 %v1388, 4294901760
        %1390 = vmatpush1.msra.mxu0 %v1389
        %1391 = vmatprep.subr.mxu0 0.0
        %v1392 = vand.u32 %v888, 4294901760
        %v1393 = vsub.f32 %v888, %v1392
        %v1394 = vand.u32 %v1393, 4294901760
        %1395 = vmatpush1.msra.mxu0 %v1394
        %1396 = vmatprep.subr.mxu0 0.0
        %v1397 = vand.u32 %v889, 4294901760
        %v1398 = vsub.f32 %v889, %v1397
        %v1399 = vand.u32 %v1398, 4294901760
        %1400 = vmatpush1.msra.mxu0 %v1399
        %1401 = vmatprep.subr.mxu0 0.0
        %v1402 = vand.u32 %v890, 4294901760
        %v1403 = vsub.f32 %v890, %v1402
        %v1404 = vand.u32 %v1403, 4294901760
        %1405 = vmatpush1.msra.mxu0 %v1404
        %1406 = vmatprep.subr.mxu0 0.0
        %v1407 = vand.u32 %v891, 4294901760
        %v1408 = vsub.f32 %v891, %v1407
        %v1409 = vand.u32 %v1408, 4294901760
        %1410 = vmatpush1.msra.mxu0 %v1409
        %1411 = vmatprep.subr.mxu0 0.0
        %v1412 = vand.u32 %v892, 4294901760
        %v1413 = vsub.f32 %v892, %v1412
        %v1414 = vand.u32 %v1413, 4294901760
        %1415 = vmatpush1.msra.mxu0 %v1414
        %1416 = vmatprep.subr.mxu0 0.0
        %v1417 = vand.u32 %v893, 4294901760
        %v1418 = vsub.f32 %v893, %v1417
        %v1419 = vand.u32 %v1418, 4294901760
        %1420 = vmatpush1.msra.mxu0 %v1419
        %1421 = vmatprep.subr.mxu0 0.0
        %v1422 = vand.u32 %v894, 4294901760
        %v1423 = vsub.f32 %v894, %v1422
        %v1424 = vand.u32 %v1423, 4294901760
        %1425 = vmatpush1.msra.mxu0 %v1424
        %1426 = vmatprep.subr.mxu0 0.0
        %v1427 = vand.u32 %v895, 4294901760
        %v1428 = vsub.f32 %v895, %v1427
        %v1429 = vand.u32 %v1428, 4294901760
        %1430 = vmatpush1.msra.mxu0 %v1429
        %1431 = vmatprep.subr.mxu0 0.0
        %v1432 = vand.u32 %v896, 4294901760
        %v1433 = vsub.f32 %v896, %v1432
        %v1434 = vand.u32 %v1433, 4294901760
        %1435 = vmatpush1.msra.mxu0 %v1434
        %1436 = vmatprep.subr.mxu0 0.0
        %v1437 = vand.u32 %v897, 4294901760
        %v1438 = vsub.f32 %v897, %v1437
        %v1439 = vand.u32 %v1438, 4294901760
        %1440 = vmatpush1.msra.mxu0 %v1439
        %1441 = vmatprep.subr.mxu0 0.0
        %v1442 = vand.u32 %v898, 4294901760
        %v1443 = vsub.f32 %v898, %v1442
        %v1444 = vand.u32 %v1443, 4294901760
        %1445 = vmatpush1.msra.mxu0 %v1444
        %1446 = vmatprep.subr.mxu0 0.0
        %v1447 = vand.u32 %v899, 4294901760
        %v1448 = vsub.f32 %v899, %v1447
        %v1449 = vand.u32 %v1448, 4294901760
        %1450 = vmatpush1.msra.mxu0 %v1449
        %1451 = vmatprep.subr.mxu0 0.0
        %1452 = vmatpush1.msra.mxu0 0.0
        %1453 = vmatprep.subr.mxu0 0.0
        %1454 = vmatpush1.msra.mxu0 0.0
        %1455 = vmatprep.subr.mxu0 0.0
        %1456 = vmatpush1.msra.mxu0 0.0
        %1457 = vmatprep.subr.mxu0 0.0
        %1458 = vmatpush1.msra.mxu0 0.0
        %1459 = vmatprep.subr.mxu0 0.0
        %1460 = vmatpush1.msra.mxu0 0.0
        %1461 = vmatprep.subr.mxu0 0.0
        %1462 = vmatpush1.msra.mxu0 0.0
        %1463 = vmatprep.subr.mxu0 0.0
        %1464 = vmatpush1.msra.mxu0 0.0
        %1465 = vmatprep.subr.mxu0 0.0
        %1466 = vmatpush1.msra.mxu0 0.0
        %1467 = vmatprep.subr.mxu0 0.0
        %1468 = vmatpush1.msra.mxu0 0.0
        %1469 = vmatprep.subr.mxu0 0.0
        %1470 = vmatpush1.msra.mxu0 0.0
        %1471 = vmatprep.subr.mxu0 0.0
        %1472 = vmatpush1.msra.mxu0 0.0
        %1473 = vmatprep.subr.mxu0 0.0
        %1474 = vmatpush1.msra.mxu0 0.0
        %1475 = vmatprep.subr.mxu0 0.0
        %1476 = vmatpush1.msra.mxu0 0.0
        %1477 = vmatprep.subr.mxu0 0.0
        %1478 = vmatpush1.msra.mxu0 0.0
        %1479 = vmatprep.subr.mxu0 0.0
        %1480 = vmatpush1.msra.mxu0 0.0
        %1481 = vmatprep.subr.mxu0 0.0
        %1482 = vmatpush1.msra.mxu0 0.0
        %1483 = vmatprep.mubr.f32.mxu0 0.0
        %v1484 = vand.u32 %v882, 4294901760
        %1485 = vmatmul.mubr.f32.gmra.mrb[0].mxu0 %v1484
        %v1486 = vpop.f32.mrb[0].mxu0
        %v1487 = vadd.f32 %v1360, %v1486
        %v1488 = vpop.f32.mrb[0].mxu0
        %1489 = vmatprep.mubr.f32.mxu0 0.0
        %v1490 = vand.u32 %v883, 4294901760
        %1491 = vmatmul.mubr.f32.gmra.mrb[0].mxu0 %v1490
        %v1492 = vpop.f32.mrb[0].mxu0
        %v1493 = vadd.f32 %v1368, %v1492
        %v1494 = vpop.f32.mrb[0].mxu0
        %1495 = vdwg.mxu0
        %1496 = vmatprep.subr.mxu0 0.0
        %v1497 = vand.u32 %v884, 4294901760
        %1498 = vmatpush1.msra.mxu0 %v1497
        %1499 = vmatprep.subr.mxu0 0.0
        %v1500 = vand.u32 %v885, 4294901760
        %1501 = vmatpush1.msra.mxu0 %v1500
        %1502 = vmatprep.subr.mxu0 0.0
        %v1503 = vand.u32 %v886, 4294901760
        %1504 = vmatpush1.msra.mxu0 %v1503
        %1505 = vmatprep.subr.mxu0 0.0
        %v1506 = vand.u32 %v887, 4294901760
        %1507 = vmatpush1.msra.mxu0 %v1506
        %1508 = vmatprep.subr.mxu0 0.0
        %v1509 = vand.u32 %v888, 4294901760
        %1510 = vmatpush1.msra.mxu0 %v1509
        %1511 = vmatprep.subr.mxu0 0.0
        %v1512 = vand.u32 %v889, 4294901760
        %1513 = vmatpush1.msra.mxu0 %v1512
        %1514 = vmatprep.subr.mxu0 0.0
        %v1515 = vand.u32 %v890, 4294901760
        %1516 = vmatpush1.msra.mxu0 %v1515
        %1517 = vmatprep.subr.mxu0 0.0
        %v1518 = vand.u32 %v891, 4294901760
        %1519 = vmatpush1.msra.mxu0 %v1518
        %1520 = vmatprep.subr.mxu0 0.0
        %v1521 = vand.u32 %v892, 4294901760
        %1522 = vmatpush1.msra.mxu0 %v1521
        %1523 = vmatprep.subr.mxu0 0.0
        %v1524 = vand.u32 %v893, 4294901760
        %1525 = vmatpush1.msra.mxu0 %v1524
        %1526 = vmatprep.subr.mxu0 0.0
        %v1527 = vand.u32 %v894, 4294901760
        %1528 = vmatpush1.msra.mxu0 %v1527
        %1529 = vmatprep.subr.mxu0 0.0
        %v1530 = vand.u32 %v895, 4294901760
        %1531 = vmatpush1.msra.mxu0 %v1530
        %1532 = vmatprep.subr.mxu0 0.0
        %v1533 = vand.u32 %v896, 4294901760
        %1534 = vmatpush1.msra.mxu0 %v1533
        %1535 = vmatprep.subr.mxu0 0.0
        %v1536 = vand.u32 %v897, 4294901760
        %1537 = vmatpush1.msra.mxu0 %v1536
        %1538 = vmatprep.subr.mxu0 0.0
        %v1539 = vand.u32 %v898, 4294901760
        %1540 = vmatpush1.msra.mxu0 %v1539
        %1541 = vmatprep.subr.mxu0 0.0
        %v1542 = vand.u32 %v899, 4294901760
        %1543 = vmatpush1.msra.mxu0 %v1542
        %1544 = vmatprep.subr.mxu0 0.0
        %1545 = vmatpush1.msra.mxu0 0.0
        %1546 = vmatprep.subr.mxu0 0.0
        %1547 = vmatpush1.msra.mxu0 0.0
        %1548 = vmatprep.subr.mxu0 0.0
        %1549 = vmatpush1.msra.mxu0 0.0
        %1550 = vmatprep.subr.mxu0 0.0
        %1551 = vmatpush1.msra.mxu0 0.0
        %1552 = vmatprep.subr.mxu0 0.0
        %1553 = vmatpush1.msra.mxu0 0.0
        %1554 = vmatprep.subr.mxu0 0.0
        %1555 = vmatpush1.msra.mxu0 0.0
        %1556 = vmatprep.subr.mxu0 0.0
        %1557 = vmatpush1.msra.mxu0 0.0
        %1558 = vmatprep.subr.mxu0 0.0
        %1559 = vmatpush1.msra.mxu0 0.0
        %1560 = vmatprep.subr.mxu0 0.0
        %1561 = vmatpush1.msra.mxu0 0.0
        %1562 = vmatprep.subr.mxu0 0.0
        %1563 = vmatpush1.msra.mxu0 0.0
        %1564 = vmatprep.subr.mxu0 0.0
        %1565 = vmatpush1.msra.mxu0 0.0
        %1566 = vmatprep.subr.mxu0 0.0
        %1567 = vmatpush1.msra.mxu0 0.0
        %1568 = vmatprep.subr.mxu0 0.0
        %1569 = vmatpush1.msra.mxu0 0.0
        %1570 = vmatprep.subr.mxu0 0.0
        %1571 = vmatpush1.msra.mxu0 0.0
        %1572 = vmatprep.subr.mxu0 0.0
        %1573 = vmatpush1.msra.mxu0 0.0
        %1574 = vmatprep.subr.mxu0 0.0
        %1575 = vmatpush1.msra.mxu0 0.0
        %1576 = vmatprep.mubr.f32.mxu0 0.0
        %v1577 = vand.u32 %v882, 4294901760
        %1578 = vmatmul.mubr.f32.gmra.mrb[0].mxu0 %v1577
        %v1579 = vpop.f32.mrb[0].mxu0
        %v1580 = vadd.f32 %v1487, %v1579
        %v1581 = vpop.f32.mrb[0].mxu0
        %1582 = vmatprep.mubr.f32.mxu0 0.0
        %v1583 = vand.u32 %v883, 4294901760
        %1584 = vmatmul.mubr.f32.gmra.mrb[0].mxu0 %v1583
        %v1585 = vpop.f32.mrb[0].mxu0
        %v1586 = vadd.f32 %v1493, %v1585
        %v1587 = vpop.f32.mrb[0].mxu0
        %1588 = vdwg.mxu0
        %v1589 = vlaneseq
        %v1590 = vand.u32 %v1589, 127
        %v1591 = vshra.s32 %v1590, 4
        %vm1592 = vcmp.eq.s32.totalorder %v1591, 0
        %v1593 = vsel %vm1592, %v1580, -inf
        %v1594 = vsel %vm1592, %v1586, -inf
        %1595 = vmax.xlane.f32.xlu0 %v1593
        %v1596 = vpop.xlane.xlu0 %1595
        %1597 = vmax.xlane.f32.xlu0 %v1594
        %v1598 = vpop.xlane.xlu0 %1597
        %vm1599 = vcmp.eq.s32.totalorder %v1590, 0
        %v1600 = vsel %vm1599, %v1596, 0.0
        %v1601 = vsel %vm1599, %v1598, 0.0
        %vm1602 = vcmp.eq.s32.totalorder %v1591, 1
        %v1603 = vsel %vm1602, %v1580, -inf
        %v1604 = vsel %vm1602, %v1586, -inf
        %1605 = vmax.xlane.f32.xlu0 %v1603
        %v1606 = vpop.xlane.xlu0 %1605
        %1607 = vmax.xlane.f32.xlu0 %v1604
        %v1608 = vpop.xlane.xlu0 %1607
        %vm1609 = vcmp.eq.s32.totalorder %v1590, 1
        %v1610 = vsel %vm1609, %v1606, %v1600
        %v1611 = vsel %vm1609, %v1608, %v1601
        %vm1612 = vcmp.eq.s32.totalorder %v1591, 2
        %v1613 = vsel %vm1612, %v1580, -inf
        %v1614 = vsel %vm1612, %v1586, -inf
        %1615 = vmax.xlane.f32.xlu0 %v1613
        %v1616 = vpop.xlane.xlu0 %1615
        %1617 = vmax.xlane.f32.xlu0 %v1614
        %v1618 = vpop.xlane.xlu0 %1617
        %vm1619 = vcmp.eq.s32.totalorder %v1590, 2
        %v1620 = vsel %vm1619, %v1616, %v1610
        %v1621 = vsel %vm1619, %v1618, %v1611
        %vm1622 = vcmp.eq.s32.totalorder %v1591, 3
        %v1623 = vsel %vm1622, %v1580, -inf
        %v1624 = vsel %vm1622, %v1586, -inf
        %1625 = vmax.xlane.f32.xlu0 %v1623
        %v1626 = vpop.xlane.xlu0 %1625
        %1627 = vmax.xlane.f32.xlu0 %v1624
        %v1628 = vpop.xlane.xlu0 %1627
        %vm1629 = vcmp.eq.s32.totalorder %v1590, 3
        %v1630 = vsel %vm1629, %v1626, %v1620
        %v1631 = vsel %vm1629, %v1628, %v1621
        %vm1632 = vcmp.eq.s32.totalorder %v1591, 4
        %v1633 = vsel %vm1632, %v1580, -inf
        %v1634 = vsel %vm1632, %v1586, -inf
        %1635 = vmax.xlane.f32.xlu0 %v1633
        %v1636 = vpop.xlane.xlu0 %1635
        %1637 = vmax.xlane.f32.xlu0 %v1634
        %v1638 = vpop.xlane.xlu0 %1637
        %vm1639 = vcmp.eq.s32.totalorder %v1590, 4
        %v1640 = vsel %vm1639, %v1636, %v1630
        %v1641 = vsel %vm1639, %v1638, %v1631
        %vm1642 = vcmp.eq.s32.totalorder %v1591, 5
        %v1643 = vsel %vm1642, %v1580, -inf
        %v1644 = vsel %vm1642, %v1586, -inf
        %1645 = vmax.xlane.f32.xlu0 %v1643
        %v1646 = vpop.xlane.xlu0 %1645
        %1647 = vmax.xlane.f32.xlu0 %v1644
        %v1648 = vpop.xlane.xlu0 %1647
        %vm1649 = vcmp.eq.s32.totalorder %v1590, 5
        %v1650 = vsel %vm1649, %v1646, %v1640
        %v1651 = vsel %vm1649, %v1648, %v1641
        %vm1652 = vcmp.eq.s32.totalorder %v1591, 6
        %v1653 = vsel %vm1652, %v1580, -inf
        %v1654 = vsel %vm1652, %v1586, -inf
        %1655 = vmax.xlane.f32.xlu0 %v1653
        %v1656 = vpop.xlane.xlu0 %1655
        %1657 = vmax.xlane.f32.xlu0 %v1654
        %v1658 = vpop.xlane.xlu0 %1657
        %vm1659 = vcmp.eq.s32.totalorder %v1590, 6
        %v1660 = vsel %vm1659, %v1656, %v1650
        %v1661 = vsel %vm1659, %v1658, %v1651
        %vm1662 = vcmp.eq.s32.totalorder %v1591, 7
        %v1663 = vsel %vm1662, %v1580, -inf
        %v1664 = vsel %vm1662, %v1586, -inf
        %1665 = vmax.xlane.f32.xlu0 %v1663
        %v1666 = vpop.xlane.xlu0 %1665
        %1667 = vmax.xlane.f32.xlu0 %v1664
        %v1668 = vpop.xlane.xlu0 %1667
        %vm1669 = vcmp.eq.s32.totalorder %v1590, 7
        %v1670 = vsel %vm1669, %v1666, %v1660
        %v1671 = vsel %vm1669, %v1668, %v1661
        %v1672 = vld [vmem:[%s2] sm:$0xff]
        %vm1673 = vcmask 64512
        %v1675 = vsel %vm1673, %v1670, 0
        %v1678 = vsel %vm1673, %v1671, 0
        %1680 = vmatprep.subr.mxu0 0.0
        %v1681 = vand.u32 %v1672, 4294901760
        %1682 = vmatpush1.msra.mxu0 %v1681
        %1683 = vmatprep.subr.mxu0 0.0
        %1684 = vmatpush1.msra.mxu0 0.0
        %1685 = vmatprep.subr.mxu0 0.0
        %1686 = vmatpush1.msra.mxu0 0.0
        %1687 = vmatprep.subr.mxu0 0.0
        %1688 = vmatpush1.msra.mxu0 0.0
        %1689 = vmatprep.subr.mxu0 0.0
        %1690 = vmatpush1.msra.mxu0 0.0
        %1691 = vmatprep.subr.mxu0 0.0
        %1692 = vmatpush1.msra.mxu0 0.0
        %1693 = vmatprep.subr.mxu0 0.0
        %1694 = vmatpush1.msra.mxu0 0.0
        %1695 = vmatprep.subr.mxu0 0.0
        %1696 = vmatpush1.msra.mxu0 0.0
        %1697 = vmatprep.subr.mxu0 0.0
        %1698 = vmatpush1.msra.mxu0 0.0
        %1699 = vmatprep.subr.mxu0 0.0
        %1700 = vmatpush1.msra.mxu0 0.0
        %1701 = vmatprep.subr.mxu0 0.0
        %1702 = vmatpush1.msra.mxu0 0.0
        %1703 = vmatprep.subr.mxu0 0.0
        %1704 = vmatpush1.msra.mxu0 0.0
        %1705 = vmatprep.subr.mxu0 0.0
        %1706 = vmatpush1.msra.mxu0 0.0
        %1707 = vmatprep.subr.mxu0 0.0
        %1708 = vmatpush1.msra.mxu0 0.0
        %1709 = vmatprep.subr.mxu0 0.0
        %1710 = vmatpush1.msra.mxu0 0.0
        %1711 = vmatprep.subr.mxu0 0.0
        %1712 = vmatpush1.msra.mxu0 0.0
        %1713 = vmatprep.subr.mxu0 0.0
        %1714 = vmatpush1.msra.mxu0 0.0
        %1715 = vmatprep.subr.mxu0 0.0
        %1716 = vmatpush1.msra.mxu0 0.0
        %1717 = vmatprep.subr.mxu0 0.0
        %1718 = vmatpush1.msra.mxu0 0.0
        %1719 = vmatprep.subr.mxu0 0.0
        %1720 = vmatpush1.msra.mxu0 0.0
        %1721 = vmatprep.subr.mxu0 0.0
        %1722 = vmatpush1.msra.mxu0 0.0
        %1723 = vmatprep.subr.mxu0 0.0
        %1724 = vmatpush1.msra.mxu0 0.0
        %1725 = vmatprep.subr.mxu0 0.0
        %1726 = vmatpush1.msra.mxu0 0.0
        %1727 = vmatprep.subr.mxu0 0.0
        %1728 = vmatpush1.msra.mxu0 0.0
        %1729 = vmatprep.subr.mxu0 0.0
        %1730 = vmatpush1.msra.mxu0 0.0
        %1731 = vmatprep.subr.mxu0 0.0
        %1732 = vmatpush1.msra.mxu0 0.0
        %1733 = vmatprep.subr.mxu0 0.0
        %1734 = vmatpush1.msra.mxu0 0.0
        %1735 = vmatprep.subr.mxu0 0.0
        %1736 = vmatpush1.msra.mxu0 0.0
        %1737 = vmatprep.subr.mxu0 0.0
        %1738 = vmatpush1.msra.mxu0 0.0
        %1739 = vmatprep.subr.mxu0 0.0
        %1740 = vmatpush1.msra.mxu0 0.0
        %1741 = vmatprep.subr.mxu0 0.0
        %1742 = vmatpush1.msra.mxu0 0.0
        %1743 = vmatprep.subr.mxu0 0.0
        %1744 = vmatpush1.msra.mxu0 0.0
        %1745 = vmatprep.mubr.f32.mxu0 0.0
        %v1746 = vand.u32 %v1675, 4294901760
        %v1747 = vsub.f32 %v1675, %v1746
        %v1748 = vand.u32 %v1747, 4294901760
        %v1749 = vsub.f32 %v1747, %v1748
        %v1750 = vand.u32 %v1749, 4294901760
        %1751 = vmatmul.mubr.f32.gmra.mrb[0].mxu0 %v1750
        %v1752 = vpop.f32.mrb[0].mxu0
        %v1753 = vadd.f32 0.0, %v1752
        %v1754 = vpop.f32.mrb[0].mxu0
        %1755 = vmatprep.mubr.f32.mxu0 0.0
        %v1756 = vand.u32 %v1678, 4294901760
        %v1757 = vsub.f32 %v1678, %v1756
        %v1758 = vand.u32 %v1757, 4294901760
        %v1759 = vsub.f32 %v1757, %v1758
        %v1760 = vand.u32 %v1759, 4294901760
        %1761 = vmatmul.mubr.f32.gmra.mrb[0].mxu0 %v1760
        %v1762 = vpop.f32.mrb[0].mxu0
        %v1763 = vadd.f32 0.0, %v1762
        %v1764 = vpop.f32.mrb[0].mxu0
        %1765 = vdwg.mxu0
        %1766 = vmatprep.subr.mxu0 0.0
        %v1767 = vand.u32 %v1672, 4294901760
        %v1768 = vsub.f32 %v1672, %v1767
        %v1769 = vand.u32 %v1768, 4294901760
        %v1770 = vsub.f32 %v1768, %v1769
        %v1771 = vand.u32 %v1770, 4294901760
        %1772 = vmatpush1.msra.mxu0 %v1771
        %1773 = vmatprep.subr.mxu0 0.0
        %1774 = vmatpush1.msra.mxu0 0.0
        %1775 = vmatprep.subr.mxu0 0.0
        %1776 = vmatpush1.msra.mxu0 0.0
        %1777 = vmatprep.subr.mxu0 0.0
        %1778 = vmatpush1.msra.mxu0 0.0
        %1779 = vmatprep.subr.mxu0 0.0
        %1780 = vmatpush1.msra.mxu0 0.0
        %1781 = vmatprep.subr.mxu0 0.0
        %1782 = vmatpush1.msra.mxu0 0.0
        %1783 = vmatprep.subr.mxu0 0.0
        %1784 = vmatpush1.msra.mxu0 0.0
        %1785 = vmatprep.subr.mxu0 0.0
        %1786 = vmatpush1.msra.mxu0 0.0
        %1787 = vmatprep.subr.mxu0 0.0
        %1788 = vmatpush1.msra.mxu0 0.0
        %1789 = vmatprep.subr.mxu0 0.0
        %1790 = vmatpush1.msra.mxu0 0.0
        %1791 = vmatprep.subr.mxu0 0.0
        %1792 = vmatpush1.msra.mxu0 0.0
        %1793 = vmatprep.subr.mxu0 0.0
        %1794 = vmatpush1.msra.mxu0 0.0
        %1795 = vmatprep.subr.mxu0 0.0
        %1796 = vmatpush1.msra.mxu0 0.0
        %1797 = vmatprep.subr.mxu0 0.0
        %1798 = vmatpush1.msra.mxu0 0.0
        %1799 = vmatprep.subr.mxu0 0.0
        %1800 = vmatpush1.msra.mxu0 0.0
        %1801 = vmatprep.subr.mxu0 0.0
        %1802 = vmatpush1.msra.mxu0 0.0
        %1803 = vmatprep.subr.mxu0 0.0
        %1804 = vmatpush1.msra.mxu0 0.0
        %1805 = vmatprep.subr.mxu0 0.0
        %1806 = vmatpush1.msra.mxu0 0.0
        %1807 = vmatprep.subr.mxu0 0.0
        %1808 = vmatpush1.msra.mxu0 0.0
        %1809 = vmatprep.subr.mxu0 0.0
        %1810 = vmatpush1.msra.mxu0 0.0
        %1811 = vmatprep.subr.mxu0 0.0
        %1812 = vmatpush1.msra.mxu0 0.0
        %1813 = vmatprep.subr.mxu0 0.0
        %1814 = vmatpush1.msra.mxu0 0.0
        %1815 = vmatprep.subr.mxu0 0.0
        %1816 = vmatpush1.msra.mxu0 0.0
        %1817 = vmatprep.subr.mxu0 0.0
        %1818 = vmatpush1.msra.mxu0 0.0
        %1819 = vmatprep.subr.mxu0 0.0
        %1820 = vmatpush1.msra.mxu0 0.0
        %1821 = vmatprep.subr.mxu0 0.0
        %1822 = vmatpush1.msra.mxu0 0.0
        %1823 = vmatprep.subr.mxu0 0.0
        %1824 = vmatpush1.msra.mxu0 0.0
        %1825 = vmatprep.subr.mxu0 0.0
        %1826 = vmatpush1.msra.mxu0 0.0
        %1827 = vmatprep.subr.mxu0 0.0
        %1828 = vmatpush1.msra.mxu0 0.0
        %1829 = vmatprep.subr.mxu0 0.0
        %1830 = vmatpush1.msra.mxu0 0.0
        %1831 = vmatprep.subr.mxu0 0.0
        %1832 = vmatpush1.msra.mxu0 0.0
        %1833 = vmatprep.subr.mxu0 0.0
        %1834 = vmatpush1.msra.mxu0 0.0
        %1835 = vmatprep.mubr.f32.mxu0 0.0
        %v1836 = vand.u32 %v1675, 4294901760
        %1837 = vmatmul.mubr.f32.gmra.mrb[0].mxu0 %v1836
        %v1838 = vpop.f32.mrb[0].mxu0
        %v1839 = vadd.f32 %v1753, %v1838
        %v1840 = vpop.f32.mrb[0].mxu0
        %1841 = vmatprep.mubr.f32.mxu0 0.0
        %v1842 = vand.u32 %v1678, 4294901760
        %1843 = vmatmul.mubr.f32.gmra.mrb[0].mxu0 %v1842
        %v1844 = vpop.f32.mrb[0].mxu0
        %v1845 = vadd.f32 %v1763, %v1844
        %v1846 = vpop.f32.mrb[0].mxu0
        %1847 = vdwg.mxu0
        %1848 = vmatprep.subr.mxu0 0.0
        %v1849 = vand.u32 %v1672, 4294901760
        %v1850 = vsub.f32 %v1672, %v1849
        %1851 = vmatpush1.msra.mxu0 %v1850
        %1852 = vmatprep.subr.mxu0 0.0
        %1853 = vmatpush1.msra.mxu0 0.0
        %1854 = vmatprep.subr.mxu0 0.0
        %1855 = vmatpush1.msra.mxu0 0.0
        %1856 = vmatprep.subr.mxu0 0.0
        %1857 = vmatpush1.msra.mxu0 0.0
        %1858 = vmatprep.subr.mxu0 0.0
        %1859 = vmatpush1.msra.mxu0 0.0
        %1860 = vmatprep.subr.mxu0 0.0
        %1861 = vmatpush1.msra.mxu0 0.0
        %1862 = vmatprep.subr.mxu0 0.0
        %1863 = vmatpush1.msra.mxu0 0.0
        %1864 = vmatprep.subr.mxu0 0.0
        %1865 = vmatpush1.msra.mxu0 0.0
        %1866 = vmatprep.subr.mxu0 0.0
        %1867 = vmatpush1.msra.mxu0 0.0
        %1868 = vmatprep.subr.mxu0 0.0
        %1869 = vmatpush1.msra.mxu0 0.0
        %1870 = vmatprep.subr.mxu0 0.0
        %1871 = vmatpush1.msra.mxu0 0.0
        %1872 = vmatprep.subr.mxu0 0.0
        %1873 = vmatpush1.msra.mxu0 0.0
        %1874 = vmatprep.subr.mxu0 0.0
        %1875 = vmatpush1.msra.mxu0 0.0
        %1876 = vmatprep.subr.mxu0 0.0
        %1877 = vmatpush1.msra.mxu0 0.0
        %1878 = vmatprep.subr.mxu0 0.0
        %1879 = vmatpush1.msra.mxu0 0.0
        %1880 = vmatprep.subr.mxu0 0.0
        %1881 = vmatpush1.msra.mxu0 0.0
        %1882 = vmatprep.subr.mxu0 0.0
        %1883 = vmatpush1.msra.mxu0 0.0
        %1884 = vmatprep.subr.mxu0 0.0
        %1885 = vmatpush1.msra.mxu0 0.0
        %1886 = vmatprep.subr.mxu0 0.0
        %1887 = vmatpush1.msra.mxu0 0.0
        %1888 = vmatprep.subr.mxu0 0.0
        %1889 = vmatpush1.msra.mxu0 0.0
        %1890 = vmatprep.subr.mxu0 0.0
        %1891 = vmatpush1.msra.mxu0 0.0
        %1892 = vmatprep.subr.mxu0 0.0
        %1893 = vmatpush1.msra.mxu0 0.0
        %1894 = vmatprep.subr.mxu0 0.0
        %1895 = vmatpush1.msra.mxu0 0.0
        %1896 = vmatprep.subr.mxu0 0.0
        %1897 = vmatpush1.msra.mxu0 0.0
        %1898 = vmatprep.subr.mxu0 0.0
        %1899 = vmatpush1.msra.mxu0 0.0
        %1900 = vmatprep.subr.mxu0 0.0
        %1901 = vmatpush1.msra.mxu0 0.0
        %1902 = vmatprep.subr.mxu0 0.0
        %1903 = vmatpush1.msra.mxu0 0.0
        %1904 = vmatprep.subr.mxu0 0.0
        %1905 = vmatpush1.msra.mxu0 0.0
        %1906 = vmatprep.subr.mxu0 0.0
        %1907 = vmatpush1.msra.mxu0 0.0
        %1908 = vmatprep.subr.mxu0 0.0
        %1909 = vmatpush1.msra.mxu0 0.0
        %1910 = vmatprep.subr.mxu0 0.0
        %1911 = vmatpush1.msra.mxu0 0.0
        %1912 = vmatprep.subr.mxu0 0.0
        %1913 = vmatpush1.msra.mxu0 0.0
        %1914 = vmatprep.mubr.f32.mxu0 0.0
        %v1915 = vand.u32 %v1675, 4294901760
        %v1916 = vsub.f32 %v1675, %v1915
        %1917 = vmatmul.mubr.f32.gmra.mrb[0].mxu0 %v1916
        %v1918 = vpop.f32.mrb[0].mxu0
        %v1919 = vadd.f32 %v1839, %v1918
        %v1920 = vpop.f32.mrb[0].mxu0
        %1921 = vmatprep.mubr.f32.mxu0 0.0
        %v1922 = vand.u32 %v1678, 4294901760
        %v1923 = vsub.f32 %v1678, %v1922
        %1924 = vmatmul.mubr.f32.gmra.mrb[0].mxu0 %v1923
        %v1925 = vpop.f32.mrb[0].mxu0
        %v1926 = vadd.f32 %v1845, %v1925
        %v1927 = vpop.f32.mrb[0].mxu0
        %1928 = vdwg.mxu0
        %1929 = vmatprep.subr.mxu0 0.0
        %v1930 = vand.u32 %v1672, 4294901760
        %1931 = vmatpush1.msra.mxu0 %v1930
        %1932 = vmatprep.subr.mxu0 0.0
        %1933 = vmatpush1.msra.mxu0 0.0
        %1934 = vmatprep.subr.mxu0 0.0
        %1935 = vmatpush1.msra.mxu0 0.0
        %1936 = vmatprep.subr.mxu0 0.0
        %1937 = vmatpush1.msra.mxu0 0.0
        %1938 = vmatprep.subr.mxu0 0.0
        %1939 = vmatpush1.msra.mxu0 0.0
        %1940 = vmatprep.subr.mxu0 0.0
        %1941 = vmatpush1.msra.mxu0 0.0
        %1942 = vmatprep.subr.mxu0 0.0
        %1943 = vmatpush1.msra.mxu0 0.0
        %1944 = vmatprep.subr.mxu0 0.0
        %1945 = vmatpush1.msra.mxu0 0.0
        %1946 = vmatprep.subr.mxu0 0.0
        %1947 = vmatpush1.msra.mxu0 0.0
        %1948 = vmatprep.subr.mxu0 0.0
        %1949 = vmatpush1.msra.mxu0 0.0
        %1950 = vmatprep.subr.mxu0 0.0
        %1951 = vmatpush1.msra.mxu0 0.0
        %1952 = vmatprep.subr.mxu0 0.0
        %1953 = vmatpush1.msra.mxu0 0.0
        %1954 = vmatprep.subr.mxu0 0.0
        %1955 = vmatpush1.msra.mxu0 0.0
        %1956 = vmatprep.subr.mxu0 0.0
        %1957 = vmatpush1.msra.mxu0 0.0
        %1958 = vmatprep.subr.mxu0 0.0
        %1959 = vmatpush1.msra.mxu0 0.0
        %1960 = vmatprep.subr.mxu0 0.0
        %1961 = vmatpush1.msra.mxu0 0.0
        %1962 = vmatprep.subr.mxu0 0.0
        %1963 = vmatpush1.msra.mxu0 0.0
        %1964 = vmatprep.subr.mxu0 0.0
        %1965 = vmatpush1.msra.mxu0 0.0
        %1966 = vmatprep.subr.mxu0 0.0
        %1967 = vmatpush1.msra.mxu0 0.0
        %1968 = vmatprep.subr.mxu0 0.0
        %1969 = vmatpush1.msra.mxu0 0.0
        %1970 = vmatprep.subr.mxu0 0.0
        %1971 = vmatpush1.msra.mxu0 0.0
        %1972 = vmatprep.subr.mxu0 0.0
        %1973 = vmatpush1.msra.mxu0 0.0
        %1974 = vmatprep.subr.mxu0 0.0
        %1975 = vmatpush1.msra.mxu0 0.0
        %1976 = vmatprep.subr.mxu0 0.0
        %1977 = vmatpush1.msra.mxu0 0.0
        %1978 = vmatprep.subr.mxu0 0.0
        %1979 = vmatpush1.msra.mxu0 0.0
        %1980 = vmatprep.subr.mxu0 0.0
        %1981 = vmatpush1.msra.mxu0 0.0
        %1982 = vmatprep.subr.mxu0 0.0
        %1983 = vmatpush1.msra.mxu0 0.0
        %1984 = vmatprep.subr.mxu0 0.0
        %1985 = vmatpush1.msra.mxu0 0.0
        %1986 = vmatprep.subr.mxu0 0.0
        %1987 = vmatpush1.msra.mxu0 0.0
        %1988 = vmatprep.subr.mxu0 0.0
        %1989 = vmatpush1.msra.mxu0 0.0
        %1990 = vmatprep.subr.mxu0 0.0
        %1991 = vmatpush1.msra.mxu0 0.0
        %1992 = vmatprep.subr.mxu0 0.0
        %1993 = vmatpush1.msra.mxu0 0.0
        %1994 = vmatprep.mubr.f32.mxu0 0.0
        %v1995 = vand.u32 %v1675, 4294901760
        %v1996 = vsub.f32 %v1675, %v1995
        %v1997 = vand.u32 %v1996, 4294901760
        %1998 = vmatmul.mubr.f32.gmra.mrb[0].mxu0 %v1997
        %v1999 = vpop.f32.mrb[0].mxu0
        %v2000 = vadd.f32 %v1919, %v1999
        %v2001 = vpop.f32.mrb[0].mxu0
        %2002 = vmatprep.mubr.f32.mxu0 0.0
        %v2003 = vand.u32 %v1678, 4294901760
        %v2004 = vsub.f32 %v1678, %v2003
        %v2005 = vand.u32 %v2004, 4294901760
        %2006 = vmatmul.mubr.f32.gmra.mrb[0].mxu0 %v2005
        %v2007 = vpop.f32.mrb[0].mxu0
        %v2008 = vadd.f32 %v1926, %v2007
        %v2009 = vpop.f32.mrb[0].mxu0
        %2010 = vdwg.mxu0
        %2011 = vmatprep.subr.mxu0 0.0
        %v2012 = vand.u32 %v1672, 4294901760
        %v2013 = vsub.f32 %v1672, %v2012
        %v2014 = vand.u32 %v2013, 4294901760
        %2015 = vmatpush1.msra.mxu0 %v2014
        %2016 = vmatprep.subr.mxu0 0.0
        %2017 = vmatpush1.msra.mxu0 0.0
        %2018 = vmatprep.subr.mxu0 0.0
        %2019 = vmatpush1.msra.mxu0 0.0
        %2020 = vmatprep.subr.mxu0 0.0
        %2021 = vmatpush1.msra.mxu0 0.0
        %2022 = vmatprep.subr.mxu0 0.0
        %2023 = vmatpush1.msra.mxu0 0.0
        %2024 = vmatprep.subr.mxu0 0.0
        %2025 = vmatpush1.msra.mxu0 0.0
        %2026 = vmatprep.subr.mxu0 0.0
        %2027 = vmatpush1.msra.mxu0 0.0
        %2028 = vmatprep.subr.mxu0 0.0
        %2029 = vmatpush1.msra.mxu0 0.0
        %2030 = vmatprep.subr.mxu0 0.0
        %2031 = vmatpush1.msra.mxu0 0.0
        %2032 = vmatprep.subr.mxu0 0.0
        %2033 = vmatpush1.msra.mxu0 0.0
        %2034 = vmatprep.subr.mxu0 0.0
        %2035 = vmatpush1.msra.mxu0 0.0
        %2036 = vmatprep.subr.mxu0 0.0
        %2037 = vmatpush1.msra.mxu0 0.0
        %2038 = vmatprep.subr.mxu0 0.0
        %2039 = vmatpush1.msra.mxu0 0.0
        %2040 = vmatprep.subr.mxu0 0.0
        %2041 = vmatpush1.msra.mxu0 0.0
        %2042 = vmatprep.subr.mxu0 0.0
        %2043 = vmatpush1.msra.mxu0 0.0
        %2044 = vmatprep.subr.mxu0 0.0
        %2045 = vmatpush1.msra.mxu0 0.0
        %2046 = vmatprep.subr.mxu0 0.0
        %2047 = vmatpush1.msra.mxu0 0.0
        %2048 = vmatprep.subr.mxu0 0.0
        %2049 = vmatpush1.msra.mxu0 0.0
        %2050 = vmatprep.subr.mxu0 0.0
        %2051 = vmatpush1.msra.mxu0 0.0
        %2052 = vmatprep.subr.mxu0 0.0
        %2053 = vmatpush1.msra.mxu0 0.0
        %2054 = vmatprep.subr.mxu0 0.0
        %2055 = vmatpush1.msra.mxu0 0.0
        %2056 = vmatprep.subr.mxu0 0.0
        %2057 = vmatpush1.msra.mxu0 0.0
        %2058 = vmatprep.subr.mxu0 0.0
        %2059 = vmatpush1.msra.mxu0 0.0
        %2060 = vmatprep.subr.mxu0 0.0
        %2061 = vmatpush1.msra.mxu0 0.0
        %2062 = vmatprep.subr.mxu0 0.0
        %2063 = vmatpush1.msra.mxu0 0.0
        %2064 = vmatprep.subr.mxu0 0.0
        %2065 = vmatpush1.msra.mxu0 0.0
        %2066 = vmatprep.subr.mxu0 0.0
        %2067 = vmatpush1.msra.mxu0 0.0
        %2068 = vmatprep.subr.mxu0 0.0
        %2069 = vmatpush1.msra.mxu0 0.0
        %2070 = vmatprep.subr.mxu0 0.0
        %2071 = vmatpush1.msra.mxu0 0.0
        %2072 = vmatprep.subr.mxu0 0.0
        %2073 = vmatpush1.msra.mxu0 0.0
        %2074 = vmatprep.subr.mxu0 0.0
        %2075 = vmatpush1.msra.mxu0 0.0
        %2076 = vmatprep.subr.mxu0 0.0
        %2077 = vmatpush1.msra.mxu0 0.0
        %2078 = vmatprep.mubr.f32.mxu0 0.0
        %v2079 = vand.u32 %v1675, 4294901760
        %2080 = vmatmul.mubr.f32.gmra.mrb[0].mxu0 %v2079
        %v2081 = vpop.f32.mrb[0].mxu0
        %v2082 = vadd.f32 %v2000, %v2081
        %v2083 = vpop.f32.mrb[0].mxu0
        %2084 = vmatprep.mubr.f32.mxu0 0.0
        %v2085 = vand.u32 %v1678, 4294901760
        %2086 = vmatmul.mubr.f32.gmra.mrb[0].mxu0 %v2085
        %v2087 = vpop.f32.mrb[0].mxu0
        %v2088 = vadd.f32 %v2008, %v2087
        %v2089 = vpop.f32.mrb[0].mxu0
        %2090 = vdwg.mxu0
        %2091 = vmatprep.subr.mxu0 0.0
        %v2092 = vand.u32 %v1672, 4294901760
        %2093 = vmatpush1.msra.mxu0 %v2092
        %2094 = vmatprep.subr.mxu0 0.0
        %2095 = vmatpush1.msra.mxu0 0.0
        %2096 = vmatprep.subr.mxu0 0.0
        %2097 = vmatpush1.msra.mxu0 0.0
        %2098 = vmatprep.subr.mxu0 0.0
        %2099 = vmatpush1.msra.mxu0 0.0
        %2100 = vmatprep.subr.mxu0 0.0
        %2101 = vmatpush1.msra.mxu0 0.0
        %2102 = vmatprep.subr.mxu0 0.0
        %2103 = vmatpush1.msra.mxu0 0.0
        %2104 = vmatprep.subr.mxu0 0.0
        %2105 = vmatpush1.msra.mxu0 0.0
        %2106 = vmatprep.subr.mxu0 0.0
        %2107 = vmatpush1.msra.mxu0 0.0
        %2108 = vmatprep.subr.mxu0 0.0
        %2109 = vmatpush1.msra.mxu0 0.0
        %2110 = vmatprep.subr.mxu0 0.0
        %2111 = vmatpush1.msra.mxu0 0.0
        %2112 = vmatprep.subr.mxu0 0.0
        %2113 = vmatpush1.msra.mxu0 0.0
        %2114 = vmatprep.subr.mxu0 0.0
        %2115 = vmatpush1.msra.mxu0 0.0
        %2116 = vmatprep.subr.mxu0 0.0
        %2117 = vmatpush1.msra.mxu0 0.0
        %2118 = vmatprep.subr.mxu0 0.0
        %2119 = vmatpush1.msra.mxu0 0.0
        %2120 = vmatprep.subr.mxu0 0.0
        %2121 = vmatpush1.msra.mxu0 0.0
        %2122 = vmatprep.subr.mxu0 0.0
        %2123 = vmatpush1.msra.mxu0 0.0
        %2124 = vmatprep.subr.mxu0 0.0
        %2125 = vmatpush1.msra.mxu0 0.0
        %2126 = vmatprep.subr.mxu0 0.0
        %2127 = vmatpush1.msra.mxu0 0.0
        %2128 = vmatprep.subr.mxu0 0.0
        %2129 = vmatpush1.msra.mxu0 0.0
        %2130 = vmatprep.subr.mxu0 0.0
        %2131 = vmatpush1.msra.mxu0 0.0
        %2132 = vmatprep.subr.mxu0 0.0
        %2133 = vmatpush1.msra.mxu0 0.0
        %2134 = vmatprep.subr.mxu0 0.0
        %2135 = vmatpush1.msra.mxu0 0.0
        %2136 = vmatprep.subr.mxu0 0.0
        %2137 = vmatpush1.msra.mxu0 0.0
        %2138 = vmatprep.subr.mxu0 0.0
        %2139 = vmatpush1.msra.mxu0 0.0
        %2140 = vmatprep.subr.mxu0 0.0
        %2141 = vmatpush1.msra.mxu0 0.0
        %2142 = vmatprep.subr.mxu0 0.0
        %2143 = vmatpush1.msra.mxu0 0.0
        %2144 = vmatprep.subr.mxu0 0.0
        %2145 = vmatpush1.msra.mxu0 0.0
        %2146 = vmatprep.subr.mxu0 0.0
        %2147 = vmatpush1.msra.mxu0 0.0
        %2148 = vmatprep.subr.mxu0 0.0
        %2149 = vmatpush1.msra.mxu0 0.0
        %2150 = vmatprep.subr.mxu0 0.0
        %2151 = vmatpush1.msra.mxu0 0.0
        %2152 = vmatprep.subr.mxu0 0.0
        %2153 = vmatpush1.msra.mxu0 0.0
        %2154 = vmatprep.subr.mxu0 0.0
        %2155 = vmatpush1.msra.mxu0 0.0
        %2156 = vmatprep.mubr.f32.mxu0 0.0
        %v2157 = vand.u32 %v1675, 4294901760
        %2158 = vmatmul.mubr.f32.gmra.mrb[0].mxu0 %v2157
        %v2159 = vpop.f32.mrb[0].mxu0
        %v2160 = vadd.f32 %v2082, %v2159
        %v2161 = vpop.f32.mrb[0].mxu0
        %2162 = vmatprep.mubr.f32.mxu0 0.0
        %v2163 = vand.u32 %v1678, 4294901760
        %2164 = vmatmul.mubr.f32.gmra.mrb[0].mxu0 %v2163
        %v2165 = vpop.f32.mrb[0].mxu0
        %v2166 = vadd.f32 %v2088, %v2165
        %v2167 = vpop.f32.mrb[0].mxu0
        %2168 = vdwg.mxu0
        %v2169 = vsub.f32 %v1580, %v2160
        %v2170 = vsub.f32 %v1586, %v2166
        %v2171 = vmul.f32 %v2169, 1.442695
        %v2172 = vpow.pop %v2171
        %v2173 = vmul.f32 %v2170, 1.442695
        %v2174 = vpow.pop %v2173
        %v2175 = vld [vmem:[%s1] sm:$0xff]
        %v2176 = vld [vmem:[%s1 + $0x8] sm:$0xff]
        %v2177 = vld [vmem:[%s1 + $0x10] sm:$0xff]
        %v2178 = vld [vmem:[%s1 + $0x18] sm:$0xff]
        %v2179 = vld [vmem:[%s1 + $0x20] sm:$0xff]
        %v2180 = vld [vmem:[%s1 + $0x28] sm:$0xff]
        %v2181 = vld [vmem:[%s1 + $0x30] sm:$0xff]
        %v2182 = vld [vmem:[%s1 + $0x38] sm:$0xff]
        %v2183 = vld [vmem:[%s1 + $0x40] sm:$0xff]
        %v2184 = vld [vmem:[%s1 + $0x48] sm:$0xff]
        %v2185 = vld [vmem:[%s1 + $0x50] sm:$0xff]
        %v2186 = vld [vmem:[%s1 + $0x58] sm:$0xff]
        %v2187 = vld [vmem:[%s1 + $0x60] sm:$0xff]
        %v2188 = vld [vmem:[%s1 + $0x68] sm:$0xff]
        %v2189 = vld [vmem:[%s1 + $0x70] sm:$0xff]
        %v2190 = vld [vmem:[%s1 + $0x78] sm:$0xff]
        %2191 = vmatprep.subr.mxu0 0.0
        %v2192 = vand.u32 %v2175, 4294901760
        %2193 = vmatpush1.msra.mxu0 %v2192
        %2194 = vmatprep.subr.mxu0 0.0
        %v2195 = vand.u32 %v2176, 4294901760
        %2196 = vmatpush1.msra.mxu0 %v2195
        %2197 = vmatprep.subr.mxu0 0.0
        %v2198 = vand.u32 %v2177, 4294901760
        %2199 = vmatpush1.msra.mxu0 %v2198
        %2200 = vmatprep.subr.mxu0 0.0
        %v2201 = vand.u32 %v2178, 4294901760
        %2202 = vmatpush1.msra.mxu0 %v2201
        %2203 = vmatprep.subr.mxu0 0.0
        %v2204 = vand.u32 %v2179, 4294901760
        %2205 = vmatpush1.msra.mxu0 %v2204
        %2206 = vmatprep.subr.mxu0 0.0
        %v2207 = vand.u32 %v2180, 4294901760
        %2208 = vmatpush1.msra.mxu0 %v2207
        %2209 = vmatprep.subr.mxu0 0.0
        %v2210 = vand.u32 %v2181, 4294901760
        %2211 = vmatpush1.msra.mxu0 %v2210
        %2212 = vmatprep.subr.mxu0 0.0
        %v2213 = vand.u32 %v2182, 4294901760
        %2214 = vmatpush1.msra.mxu0 %v2213
        %2215 = vmatprep.subr.mxu0 0.0
        %v2216 = vand.u32 %v2183, 4294901760
        %2217 = vmatpush1.msra.mxu0 %v2216
        %2218 = vmatprep.subr.mxu0 0.0
        %v2219 = vand.u32 %v2184, 4294901760
        %2220 = vmatpush1.msra.mxu0 %v2219
        %2221 = vmatprep.subr.mxu0 0.0
        %v2222 = vand.u32 %v2185, 4294901760
        %2223 = vmatpush1.msra.mxu0 %v2222
        %2224 = vmatprep.subr.mxu0 0.0
        %v2225 = vand.u32 %v2186, 4294901760
        %2226 = vmatpush1.msra.mxu0 %v2225
        %2227 = vmatprep.subr.mxu0 0.0
        %v2228 = vand.u32 %v2187, 4294901760
        %2229 = vmatpush1.msra.mxu0 %v2228
        %2230 = vmatprep.subr.mxu0 0.0
        %v2231 = vand.u32 %v2188, 4294901760
        %2232 = vmatpush1.msra.mxu0 %v2231
        %2233 = vmatprep.subr.mxu0 0.0
        %v2234 = vand.u32 %v2189, 4294901760
        %2235 = vmatpush1.msra.mxu0 %v2234
        %2236 = vmatprep.subr.mxu0 0.0
        %v2237 = vand.u32 %v2190, 4294901760
        %2238 = vmatpush1.msra.mxu0 %v2237
        %2239 = vmatprep.subr.mxu0 0.0
        %2240 = vmatpush1.msra.mxu0 0.0
        %2241 = vmatprep.subr.mxu0 0.0
        %2242 = vmatpush1.msra.mxu0 0.0
        %2243 = vmatprep.subr.mxu0 0.0
        %2244 = vmatpush1.msra.mxu0 0.0
        %2245 = vmatprep.subr.mxu0 0.0
        %2246 = vmatpush1.msra.mxu0 0.0
        %2247 = vmatprep.subr.mxu0 0.0
        %2248 = vmatpush1.msra.mxu0 0.0
        %2249 = vmatprep.subr.mxu0 0.0
        %2250 = vmatpush1.msra.mxu0 0.0
        %2251 = vmatprep.subr.mxu0 0.0
        %2252 = vmatpush1.msra.mxu0 0.0
        %2253 = vmatprep.subr.mxu0 0.0
        %2254 = vmatpush1.msra.mxu0 0.0
        %2255 = vmatprep.subr.mxu0 0.0
        %2256 = vmatpush1.msra.mxu0 0.0
        %2257 = vmatprep.subr.mxu0 0.0
        %2258 = vmatpush1.msra.mxu0 0.0
        %2259 = vmatprep.subr.mxu0 0.0
        %2260 = vmatpush1.msra.mxu0 0.0
        %2261 = vmatprep.subr.mxu0 0.0
        %2262 = vmatpush1.msra.mxu0 0.0
        %2263 = vmatprep.subr.mxu0 0.0
        %2264 = vmatpush1.msra.mxu0 0.0
        %2265 = vmatprep.subr.mxu0 0.0
        %2266 = vmatpush1.msra.mxu0 0.0
        %2267 = vmatprep.subr.mxu0 0.0
        %2268 = vmatpush1.msra.mxu0 0.0
        %2269 = vmatprep.subr.mxu0 0.0
        %2270 = vmatpush1.msra.mxu0 0.0
        %2271 = vmatprep.mubr.f32.mxu0 0.0
        %v2272 = vand.u32 %v2172, 4294901760
        %v2273 = vsub.f32 %v2172, %v2272
        %v2274 = vand.u32 %v2273, 4294901760
        %v2275 = vsub.f32 %v2273, %v2274
        %v2276 = vand.u32 %v2275, 4294901760
        %2277 = vmatmul.mubr.f32.gmra.mrb[0].mxu0 %v2276
        %v2278 = vpop.f32.mrb[0].mxu0
        %v2279 = vadd.f32 0.0, %v2278
        %v2280 = vpop.f32.mrb[0].mxu0
        %2281 = vmatprep.mubr.f32.mxu0 0.0
        %v2282 = vand.u32 %v2174, 4294901760
        %v2283 = vsub.f32 %v2174, %v2282
        %v2284 = vand.u32 %v2283, 4294901760
        %v2285 = vsub.f32 %v2283, %v2284
        %v2286 = vand.u32 %v2285, 4294901760
        %2287 = vmatmul.mubr.f32.gmra.mrb[0].mxu0 %v2286
        %v2288 = vpop.f32.mrb[0].mxu0
        %v2289 = vadd.f32 0.0, %v2288
        %v2290 = vpop.f32.mrb[0].mxu0
        %2291 = vdwg.mxu0
        %2292 = vmatprep.subr.mxu0 0.0
        %v2293 = vand.u32 %v2175, 4294901760
        %v2294 = vsub.f32 %v2175, %v2293
        %v2295 = vand.u32 %v2294, 4294901760
        %v2296 = vsub.f32 %v2294, %v2295
        %v2297 = vand.u32 %v2296, 4294901760
        %2298 = vmatpush1.msra.mxu0 %v2297
        %2299 = vmatprep.subr.mxu0 0.0
        %v2300 = vand.u32 %v2176, 4294901760
        %v2301 = vsub.f32 %v2176, %v2300
        %v2302 = vand.u32 %v2301, 4294901760
        %v2303 = vsub.f32 %v2301, %v2302
        %v2304 = vand.u32 %v2303, 4294901760
        %2305 = vmatpush1.msra.mxu0 %v2304
        %2306 = vmatprep.subr.mxu0 0.0
        %v2307 = vand.u32 %v2177, 4294901760
        %v2308 = vsub.f32 %v2177, %v2307
        %v2309 = vand.u32 %v2308, 4294901760
        %v2310 = vsub.f32 %v2308, %v2309
        %v2311 = vand.u32 %v2310, 4294901760
        %2312 = vmatpush1.msra.mxu0 %v2311
        %2313 = vmatprep.subr.mxu0 0.0
        %v2314 = vand.u32 %v2178, 4294901760
        %v2315 = vsub.f32 %v2178, %v2314
        %v2316 = vand.u32 %v2315, 4294901760
        %v2317 = vsub.f32 %v2315, %v2316
        %v2318 = vand.u32 %v2317, 4294901760
        %2319 = vmatpush1.msra.mxu0 %v2318
        %2320 = vmatprep.subr.mxu0 0.0
        %v2321 = vand.u32 %v2179, 4294901760
        %v2322 = vsub.f32 %v2179, %v2321
        %v2323 = vand.u32 %v2322, 4294901760
        %v2324 = vsub.f32 %v2322, %v2323
        %v2325 = vand.u32 %v2324, 4294901760
        %2326 = vmatpush1.msra.mxu0 %v2325
        %2327 = vmatprep.subr.mxu0 0.0
        %v2328 = vand.u32 %v2180, 4294901760
        %v2329 = vsub.f32 %v2180, %v2328
        %v2330 = vand.u32 %v2329, 4294901760
        %v2331 = vsub.f32 %v2329, %v2330
        %v2332 = vand.u32 %v2331, 4294901760
        %2333 = vmatpush1.msra.mxu0 %v2332
        %2334 = vmatprep.subr.mxu0 0.0
        %v2335 = vand.u32 %v2181, 4294901760
        %v2336 = vsub.f32 %v2181, %v2335
        %v2337 = vand.u32 %v2336, 4294901760
        %v2338 = vsub.f32 %v2336, %v2337
        %v2339 = vand.u32 %v2338, 4294901760
        %2340 = vmatpush1.msra.mxu0 %v2339
        %2341 = vmatprep.subr.mxu0 0.0
        %v2342 = vand.u32 %v2182, 4294901760
        %v2343 = vsub.f32 %v2182, %v2342
        %v2344 = vand.u32 %v2343, 4294901760
        %v2345 = vsub.f32 %v2343, %v2344
        %v2346 = vand.u32 %v2345, 4294901760
        %2347 = vmatpush1.msra.mxu0 %v2346
        %2348 = vmatprep.subr.mxu0 0.0
        %v2349 = vand.u32 %v2183, 4294901760
        %v2350 = vsub.f32 %v2183, %v2349
        %v2351 = vand.u32 %v2350, 4294901760
        %v2352 = vsub.f32 %v2350, %v2351
        %v2353 = vand.u32 %v2352, 4294901760
        %2354 = vmatpush1.msra.mxu0 %v2353
        %2355 = vmatprep.subr.mxu0 0.0
        %v2356 = vand.u32 %v2184, 4294901760
        %v2357 = vsub.f32 %v2184, %v2356
        %v2358 = vand.u32 %v2357, 4294901760
        %v2359 = vsub.f32 %v2357, %v2358
        %v2360 = vand.u32 %v2359, 4294901760
        %2361 = vmatpush1.msra.mxu0 %v2360
        %2362 = vmatprep.subr.mxu0 0.0
        %v2363 = vand.u32 %v2185, 4294901760
        %v2364 = vsub.f32 %v2185, %v2363
        %v2365 = vand.u32 %v2364, 4294901760
        %v2366 = vsub.f32 %v2364, %v2365
        %v2367 = vand.u32 %v2366, 4294901760
        %2368 = vmatpush1.msra.mxu0 %v2367
        %2369 = vmatprep.subr.mxu0 0.0
        %v2370 = vand.u32 %v2186, 4294901760
        %v2371 = vsub.f32 %v2186, %v2370
        %v2372 = vand.u32 %v2371, 4294901760
        %v2373 = vsub.f32 %v2371, %v2372
        %v2374 = vand.u32 %v2373, 4294901760
        %2375 = vmatpush1.msra.mxu0 %v2374
        %2376 = vmatprep.subr.mxu0 0.0
        %v2377 = vand.u32 %v2187, 4294901760
        %v2378 = vsub.f32 %v2187, %v2377
        %v2379 = vand.u32 %v2378, 4294901760
        %v2380 = vsub.f32 %v2378, %v2379
        %v2381 = vand.u32 %v2380, 4294901760
        %2382 = vmatpush1.msra.mxu0 %v2381
        %2383 = vmatprep.subr.mxu0 0.0
        %v2384 = vand.u32 %v2188, 4294901760
        %v2385 = vsub.f32 %v2188, %v2384
        %v2386 = vand.u32 %v2385, 4294901760
        %v2387 = vsub.f32 %v2385, %v2386
        %v2388 = vand.u32 %v2387, 4294901760
        %2389 = vmatpush1.msra.mxu0 %v2388
        %2390 = vmatprep.subr.mxu0 0.0
        %v2391 = vand.u32 %v2189, 4294901760
        %v2392 = vsub.f32 %v2189, %v2391
        %v2393 = vand.u32 %v2392, 4294901760
        %v2394 = vsub.f32 %v2392, %v2393
        %v2395 = vand.u32 %v2394, 4294901760
        %2396 = vmatpush1.msra.mxu0 %v2395
        %2397 = vmatprep.subr.mxu0 0.0
        %v2398 = vand.u32 %v2190, 4294901760
        %v2399 = vsub.f32 %v2190, %v2398
        %v2400 = vand.u32 %v2399, 4294901760
        %v2401 = vsub.f32 %v2399, %v2400
        %v2402 = vand.u32 %v2401, 4294901760
        %2403 = vmatpush1.msra.mxu0 %v2402
        %2404 = vmatprep.subr.mxu0 0.0
        %2405 = vmatpush1.msra.mxu0 0.0
        %2406 = vmatprep.subr.mxu0 0.0
        %2407 = vmatpush1.msra.mxu0 0.0
        %2408 = vmatprep.subr.mxu0 0.0
        %2409 = vmatpush1.msra.mxu0 0.0
        %2410 = vmatprep.subr.mxu0 0.0
        %2411 = vmatpush1.msra.mxu0 0.0
        %2412 = vmatprep.subr.mxu0 0.0
        %2413 = vmatpush1.msra.mxu0 0.0
        %2414 = vmatprep.subr.mxu0 0.0
        %2415 = vmatpush1.msra.mxu0 0.0
        %2416 = vmatprep.subr.mxu0 0.0
        %2417 = vmatpush1.msra.mxu0 0.0
        %2418 = vmatprep.subr.mxu0 0.0
        %2419 = vmatpush1.msra.mxu0 0.0
        %2420 = vmatprep.subr.mxu0 0.0
        %2421 = vmatpush1.msra.mxu0 0.0
        %2422 = vmatprep.subr.mxu0 0.0
        %2423 = vmatpush1.msra.mxu0 0.0
        %2424 = vmatprep.subr.mxu0 0.0
        %2425 = vmatpush1.msra.mxu0 0.0
        %2426 = vmatprep.subr.mxu0 0.0
        %2427 = vmatpush1.msra.mxu0 0.0
        %2428 = vmatprep.subr.mxu0 0.0
        %2429 = vmatpush1.msra.mxu0 0.0
        %2430 = vmatprep.subr.mxu0 0.0
        %2431 = vmatpush1.msra.mxu0 0.0
        %2432 = vmatprep.subr.mxu0 0.0
        %2433 = vmatpush1.msra.mxu0 0.0
        %2434 = vmatprep.subr.mxu0 0.0
        %2435 = vmatpush1.msra.mxu0 0.0
        %2436 = vmatprep.mubr.f32.mxu0 0.0
        %v2437 = vand.u32 %v2172, 4294901760
        %2438 = vmatmul.mubr.f32.gmra.mrb[0].mxu0 %v2437
        %v2439 = vpop.f32.mrb[0].mxu0
        %v2440 = vadd.f32 %v2279, %v2439
        %v2441 = vpop.f32.mrb[0].mxu0
        %2442 = vmatprep.mubr.f32.mxu0 0.0
        %v2443 = vand.u32 %v2174, 4294901760
        %2444 = vmatmul.mubr.f32.gmra.mrb[0].mxu0 %v2443
        %v2445 = vpop.f32.mrb[0].mxu0
        %v2446 = vadd.f32 %v2289, %v2445
        %v2447 = vpop.f32.mrb[0].mxu0
        %2448 = vdwg.mxu0
        %2449 = vmatprep.subr.mxu0 0.0
        %v2450 = vand.u32 %v2175, 4294901760
        %v2451 = vsub.f32 %v2175, %v2450
        %2452 = vmatpush1.msra.mxu0 %v2451
        %2453 = vmatprep.subr.mxu0 0.0
        %v2454 = vand.u32 %v2176, 4294901760
        %v2455 = vsub.f32 %v2176, %v2454
        %2456 = vmatpush1.msra.mxu0 %v2455
        %2457 = vmatprep.subr.mxu0 0.0
        %v2458 = vand.u32 %v2177, 4294901760
        %v2459 = vsub.f32 %v2177, %v2458
        %2460 = vmatpush1.msra.mxu0 %v2459
        %2461 = vmatprep.subr.mxu0 0.0
        %v2462 = vand.u32 %v2178, 4294901760
        %v2463 = vsub.f32 %v2178, %v2462
        %2464 = vmatpush1.msra.mxu0 %v2463
        %2465 = vmatprep.subr.mxu0 0.0
        %v2466 = vand.u32 %v2179, 4294901760
        %v2467 = vsub.f32 %v2179, %v2466
        %2468 = vmatpush1.msra.mxu0 %v2467
        %2469 = vmatprep.subr.mxu0 0.0
        %v2470 = vand.u32 %v2180, 4294901760
        %v2471 = vsub.f32 %v2180, %v2470
        %2472 = vmatpush1.msra.mxu0 %v2471
        %2473 = vmatprep.subr.mxu0 0.0
        %v2474 = vand.u32 %v2181, 4294901760
        %v2475 = vsub.f32 %v2181, %v2474
        %2476 = vmatpush1.msra.mxu0 %v2475
        %2477 = vmatprep.subr.mxu0 0.0
        %v2478 = vand.u32 %v2182, 4294901760
        %v2479 = vsub.f32 %v2182, %v2478
        %2480 = vmatpush1.msra.mxu0 %v2479
        %2481 = vmatprep.subr.mxu0 0.0
        %v2482 = vand.u32 %v2183, 4294901760
        %v2483 = vsub.f32 %v2183, %v2482
        %2484 = vmatpush1.msra.mxu0 %v2483
        %2485 = vmatprep.subr.mxu0 0.0
        %v2486 = vand.u32 %v2184, 4294901760
        %v2487 = vsub.f32 %v2184, %v2486
        %2488 = vmatpush1.msra.mxu0 %v2487
        %2489 = vmatprep.subr.mxu0 0.0
        %v2490 = vand.u32 %v2185, 4294901760
        %v2491 = vsub.f32 %v2185, %v2490
        %2492 = vmatpush1.msra.mxu0 %v2491
        %2493 = vmatprep.subr.mxu0 0.0
        %v2494 = vand.u32 %v2186, 4294901760
        %v2495 = vsub.f32 %v2186, %v2494
        %2496 = vmatpush1.msra.mxu0 %v2495
        %2497 = vmatprep.subr.mxu0 0.0
        %v2498 = vand.u32 %v2187, 4294901760
        %v2499 = vsub.f32 %v2187, %v2498
        %2500 = vmatpush1.msra.mxu0 %v2499
        %2501 = vmatprep.subr.mxu0 0.0
        %v2502 = vand.u32 %v2188, 4294901760
        %v2503 = vsub.f32 %v2188, %v2502
        %2504 = vmatpush1.msra.mxu0 %v2503
        %2505 = vmatprep.subr.mxu0 0.0
        %v2506 = vand.u32 %v2189, 4294901760
        %v2507 = vsub.f32 %v2189, %v2506
        %2508 = vmatpush1.msra.mxu0 %v2507
        %2509 = vmatprep.subr.mxu0 0.0
        %v2510 = vand.u32 %v2190, 4294901760
        %v2511 = vsub.f32 %v2190, %v2510
        %2512 = vmatpush1.msra.mxu0 %v2511
        %2513 = vmatprep.subr.mxu0 0.0
        %2514 = vmatpush1.msra.mxu0 0.0
        %2515 = vmatprep.subr.mxu0 0.0
        %2516 = vmatpush1.msra.mxu0 0.0
        %2517 = vmatprep.subr.mxu0 0.0
        %2518 = vmatpush1.msra.mxu0 0.0
        %2519 = vmatprep.subr.mxu0 0.0
        %2520 = vmatpush1.msra.mxu0 0.0
        %2521 = vmatprep.subr.mxu0 0.0
        %2522 = vmatpush1.msra.mxu0 0.0
        %2523 = vmatprep.subr.mxu0 0.0
        %2524 = vmatpush1.msra.mxu0 0.0
        %2525 = vmatprep.subr.mxu0 0.0
        %2526 = vmatpush1.msra.mxu0 0.0
        %2527 = vmatprep.subr.mxu0 0.0
        %2528 = vmatpush1.msra.mxu0 0.0
        %2529 = vmatprep.subr.mxu0 0.0
        %2530 = vmatpush1.msra.mxu0 0.0
        %2531 = vmatprep.subr.mxu0 0.0
        %2532 = vmatpush1.msra.mxu0 0.0
        %2533 = vmatprep.subr.mxu0 0.0
        %2534 = vmatpush1.msra.mxu0 0.0
        %2535 = vmatprep.subr.mxu0 0.0
        %2536 = vmatpush1.msra.mxu0 0.0
        %2537 = vmatprep.subr.mxu0 0.0
        %2538 = vmatpush1.msra.mxu0 0.0
        %2539 = vmatprep.subr.mxu0 0.0
        %2540 = vmatpush1.msra.mxu0 0.0
        %2541 = vmatprep.subr.mxu0 0.0
        %2542 = vmatpush1.msra.mxu0 0.0
        %2543 = vmatprep.subr.mxu0 0.0
        %2544 = vmatpush1.msra.mxu0 0.0
        %2545 = vmatprep.mubr.f32.mxu0 0.0
        %v2546 = vand.u32 %v2172, 4294901760
        %v2547 = vsub.f32 %v2172, %v2546
        %2548 = vmatmul.mubr.f32.gmra.mrb[0].mxu0 %v2547
        %v2549 = vpop.f32.mrb[0].mxu0
        %v2550 = vadd.f32 %v2440, %v2549
        %v2551 = vpop.f32.mrb[0].mxu0
        %2552 = vmatprep.mubr.f32.mxu0 0.0
        %v2553 = vand.u32 %v2174, 4294901760
        %v2554 = vsub.f32 %v2174, %v2553
        %2555 = vmatmul.mubr.f32.gmra.mrb[0].mxu0 %v2554
        %v2556 = vpop.f32.mrb[0].mxu0
        %v2557 = vadd.f32 %v2446, %v2556
        %v2558 = vpop.f32.mrb[0].mxu0
        %2559 = vdwg.mxu0
        %2560 = vmatprep.subr.mxu0 0.0
        %v2561 = vand.u32 %v2175, 4294901760
        %2562 = vmatpush1.msra.mxu0 %v2561
        %2563 = vmatprep.subr.mxu0 0.0
        %v2564 = vand.u32 %v2176, 4294901760
        %2565 = vmatpush1.msra.mxu0 %v2564
        %2566 = vmatprep.subr.mxu0 0.0
        %v2567 = vand.u32 %v2177, 4294901760
        %2568 = vmatpush1.msra.mxu0 %v2567
        %2569 = vmatprep.subr.mxu0 0.0
        %v2570 = vand.u32 %v2178, 4294901760
        %2571 = vmatpush1.msra.mxu0 %v2570
        %2572 = vmatprep.subr.mxu0 0.0
        %v2573 = vand.u32 %v2179, 4294901760
        %2574 = vmatpush1.msra.mxu0 %v2573
        %2575 = vmatprep.subr.mxu0 0.0
        %v2576 = vand.u32 %v2180, 4294901760
        %2577 = vmatpush1.msra.mxu0 %v2576
        %2578 = vmatprep.subr.mxu0 0.0
        %v2579 = vand.u32 %v2181, 4294901760
        %2580 = vmatpush1.msra.mxu0 %v2579
        %2581 = vmatprep.subr.mxu0 0.0
        %v2582 = vand.u32 %v2182, 4294901760
        %2583 = vmatpush1.msra.mxu0 %v2582
        %2584 = vmatprep.subr.mxu0 0.0
        %v2585 = vand.u32 %v2183, 4294901760
        %2586 = vmatpush1.msra.mxu0 %v2585
        %2587 = vmatprep.subr.mxu0 0.0
        %v2588 = vand.u32 %v2184, 4294901760
        %2589 = vmatpush1.msra.mxu0 %v2588
        %2590 = vmatprep.subr.mxu0 0.0
        %v2591 = vand.u32 %v2185, 4294901760
        %2592 = vmatpush1.msra.mxu0 %v2591
        %2593 = vmatprep.subr.mxu0 0.0
        %v2594 = vand.u32 %v2186, 4294901760
        %2595 = vmatpush1.msra.mxu0 %v2594
        %2596 = vmatprep.subr.mxu0 0.0
        %v2597 = vand.u32 %v2187, 4294901760
        %2598 = vmatpush1.msra.mxu0 %v2597
        %2599 = vmatprep.subr.mxu0 0.0
        %v2600 = vand.u32 %v2188, 4294901760
        %2601 = vmatpush1.msra.mxu0 %v2600
        %2602 = vmatprep.subr.mxu0 0.0
        %v2603 = vand.u32 %v2189, 4294901760
        %2604 = vmatpush1.msra.mxu0 %v2603
        %2605 = vmatprep.subr.mxu0 0.0
        %v2606 = vand.u32 %v2190, 4294901760
        %2607 = vmatpush1.msra.mxu0 %v2606
        %2608 = vmatprep.subr.mxu0 0.0
        %2609 = vmatpush1.msra.mxu0 0.0
        %2610 = vmatprep.subr.mxu0 0.0
        %2611 = vmatpush1.msra.mxu0 0.0
        %2612 = vmatprep.subr.mxu0 0.0
        %2613 = vmatpush1.msra.mxu0 0.0
        %2614 = vmatprep.subr.mxu0 0.0
        %2615 = vmatpush1.msra.mxu0 0.0
        %2616 = vmatprep.subr.mxu0 0.0
        %2617 = vmatpush1.msra.mxu0 0.0
        %2618 = vmatprep.subr.mxu0 0.0
        %2619 = vmatpush1.msra.mxu0 0.0
        %2620 = vmatprep.subr.mxu0 0.0
        %2621 = vmatpush1.msra.mxu0 0.0
        %2622 = vmatprep.subr.mxu0 0.0
        %2623 = vmatpush1.msra.mxu0 0.0
        %2624 = vmatprep.subr.mxu0 0.0
        %2625 = vmatpush1.msra.mxu0 0.0
        %2626 = vmatprep.subr.mxu0 0.0
        %2627 = vmatpush1.msra.mxu0 0.0
        %2628 = vmatprep.subr.mxu0 0.0
        %2629 = vmatpush1.msra.mxu0 0.0
        %2630 = vmatprep.subr.mxu0 0.0
        %2631 = vmatpush1.msra.mxu0 0.0
        %2632 = vmatprep.subr.mxu0 0.0
        %2633 = vmatpush1.msra.mxu0 0.0
        %2634 = vmatprep.subr.mxu0 0.0
        %2635 = vmatpush1.msra.mxu0 0.0
        %2636 = vmatprep.subr.mxu0 0.0
        %2637 = vmatpush1.msra.mxu0 0.0
        %2638 = vmatprep.subr.mxu0 0.0
        %2639 = vmatpush1.msra.mxu0 0.0
        %2640 = vmatprep.mubr.f32.mxu0 0.0
        %v2641 = vand.u32 %v2172, 4294901760
        %v2642 = vsub.f32 %v2172, %v2641
        %v2643 = vand.u32 %v2642, 4294901760
        %2644 = vmatmul.mubr.f32.gmra.mrb[0].mxu0 %v2643
        %v2645 = vpop.f32.mrb[0].mxu0
        %v2646 = vadd.f32 %v2550, %v2645
        %v2647 = vpop.f32.mrb[0].mxu0
        %2648 = vmatprep.mubr.f32.mxu0 0.0
        %v2649 = vand.u32 %v2174, 4294901760
        %v2650 = vsub.f32 %v2174, %v2649
        %v2651 = vand.u32 %v2650, 4294901760
        %2652 = vmatmul.mubr.f32.gmra.mrb[0].mxu0 %v2651
        %v2653 = vpop.f32.mrb[0].mxu0
        %v2654 = vadd.f32 %v2557, %v2653
        %v2655 = vpop.f32.mrb[0].mxu0
        %2656 = vdwg.mxu0
        %2657 = vmatprep.subr.mxu0 0.0
        %v2658 = vand.u32 %v2175, 4294901760
        %v2659 = vsub.f32 %v2175, %v2658
        %v2660 = vand.u32 %v2659, 4294901760
        %2661 = vmatpush1.msra.mxu0 %v2660
        %2662 = vmatprep.subr.mxu0 0.0
        %v2663 = vand.u32 %v2176, 4294901760
        %v2664 = vsub.f32 %v2176, %v2663
        %v2665 = vand.u32 %v2664, 4294901760
        %2666 = vmatpush1.msra.mxu0 %v2665
        %2667 = vmatprep.subr.mxu0 0.0
        %v2668 = vand.u32 %v2177, 4294901760
        %v2669 = vsub.f32 %v2177, %v2668
        %v2670 = vand.u32 %v2669, 4294901760
        %2671 = vmatpush1.msra.mxu0 %v2670
        %2672 = vmatprep.subr.mxu0 0.0
        %v2673 = vand.u32 %v2178, 4294901760
        %v2674 = vsub.f32 %v2178, %v2673
        %v2675 = vand.u32 %v2674, 4294901760
        %2676 = vmatpush1.msra.mxu0 %v2675
        %2677 = vmatprep.subr.mxu0 0.0
        %v2678 = vand.u32 %v2179, 4294901760
        %v2679 = vsub.f32 %v2179, %v2678
        %v2680 = vand.u32 %v2679, 4294901760
        %2681 = vmatpush1.msra.mxu0 %v2680
        %2682 = vmatprep.subr.mxu0 0.0
        %v2683 = vand.u32 %v2180, 4294901760
        %v2684 = vsub.f32 %v2180, %v2683
        %v2685 = vand.u32 %v2684, 4294901760
        %2686 = vmatpush1.msra.mxu0 %v2685
        %2687 = vmatprep.subr.mxu0 0.0
        %v2688 = vand.u32 %v2181, 4294901760
        %v2689 = vsub.f32 %v2181, %v2688
        %v2690 = vand.u32 %v2689, 4294901760
        %2691 = vmatpush1.msra.mxu0 %v2690
        %2692 = vmatprep.subr.mxu0 0.0
        %v2693 = vand.u32 %v2182, 4294901760
        %v2694 = vsub.f32 %v2182, %v2693
        %v2695 = vand.u32 %v2694, 4294901760
        %2696 = vmatpush1.msra.mxu0 %v2695
        %2697 = vmatprep.subr.mxu0 0.0
        %v2698 = vand.u32 %v2183, 4294901760
        %v2699 = vsub.f32 %v2183, %v2698
        %v2700 = vand.u32 %v2699, 4294901760
        %2701 = vmatpush1.msra.mxu0 %v2700
        %2702 = vmatprep.subr.mxu0 0.0
        %v2703 = vand.u32 %v2184, 4294901760
        %v2704 = vsub.f32 %v2184, %v2703
        %v2705 = vand.u32 %v2704, 4294901760
        %2706 = vmatpush1.msra.mxu0 %v2705
        %2707 = vmatprep.subr.mxu0 0.0
        %v2708 = vand.u32 %v2185, 4294901760
        %v2709 = vsub.f32 %v2185, %v2708
        %v2710 = vand.u32 %v2709, 4294901760
        %2711 = vmatpush1.msra.mxu0 %v2710
        %2712 = vmatprep.subr.mxu0 0.0
        %v2713 = vand.u32 %v2186, 4294901760
        %v2714 = vsub.f32 %v2186, %v2713
        %v2715 = vand.u32 %v2714, 4294901760
        %2716 = vmatpush1.msra.mxu0 %v2715
        %2717 = vmatprep.subr.mxu0 0.0
        %v2718 = vand.u32 %v2187, 4294901760
        %v2719 = vsub.f32 %v2187, %v2718
        %v2720 = vand.u32 %v2719, 4294901760
        %2721 = vmatpush1.msra.mxu0 %v2720
        %2722 = vmatprep.subr.mxu0 0.0
        %v2723 = vand.u32 %v2188, 4294901760
        %v2724 = vsub.f32 %v2188, %v2723
        %v2725 = vand.u32 %v2724, 4294901760
        %2726 = vmatpush1.msra.mxu0 %v2725
        %2727 = vmatprep.subr.mxu0 0.0
        %v2728 = vand.u32 %v2189, 4294901760
        %v2729 = vsub.f32 %v2189, %v2728
        %v2730 = vand.u32 %v2729, 4294901760
        %2731 = vmatpush1.msra.mxu0 %v2730
        %2732 = vmatprep.subr.mxu0 0.0
        %v2733 = vand.u32 %v2190, 4294901760
        %v2734 = vsub.f32 %v2190, %v2733
        %v2735 = vand.u32 %v2734, 4294901760
        %2736 = vmatpush1.msra.mxu0 %v2735
        %2737 = vmatprep.subr.mxu0 0.0
        %2738 = vmatpush1.msra.mxu0 0.0
        %2739 = vmatprep.subr.mxu0 0.0
        %2740 = vmatpush1.msra.mxu0 0.0
        %2741 = vmatprep.subr.mxu0 0.0
        %2742 = vmatpush1.msra.mxu0 0.0
        %2743 = vmatprep.subr.mxu0 0.0
        %2744 = vmatpush1.msra.mxu0 0.0
        %2745 = vmatprep.subr.mxu0 0.0
        %2746 = vmatpush1.msra.mxu0 0.0
        %2747 = vmatprep.subr.mxu0 0.0
        %2748 = vmatpush1.msra.mxu0 0.0
        %2749 = vmatprep.subr.mxu0 0.0
        %2750 = vmatpush1.msra.mxu0 0.0
        %2751 = vmatprep.subr.mxu0 0.0
        %2752 = vmatpush1.msra.mxu0 0.0
        %2753 = vmatprep.subr.mxu0 0.0
        %2754 = vmatpush1.msra.mxu0 0.0
        %2755 = vmatprep.subr.mxu0 0.0
        %2756 = vmatpush1.msra.mxu0 0.0
        %2757 = vmatprep.subr.mxu0 0.0
        %2758 = vmatpush1.msra.mxu0 0.0
        %2759 = vmatprep.subr.mxu0 0.0
        %2760 = vmatpush1.msra.mxu0 0.0
        %2761 = vmatprep.subr.mxu0 0.0
        %2762 = vmatpush1.msra.mxu0 0.0
        %2763 = vmatprep.subr.mxu0 0.0
        %2764 = vmatpush1.msra.mxu0 0.0
        %2765 = vmatprep.subr.mxu0 0.0
        %2766 = vmatpush1.msra.mxu0 0.0
        %2767 = vmatprep.subr.mxu0 0.0
        %2768 = vmatpush1.msra.mxu0 0.0
        %2769 = vmatprep.mubr.f32.mxu0 0.0
        %v2770 = vand.u32 %v2172, 4294901760
        %2771 = vmatmul.mubr.f32.gmra.mrb[0].mxu0 %v2770
        %v2772 = vpop.f32.mrb[0].mxu0
        %v2773 = vadd.f32 %v2646, %v2772
        %v2774 = vpop.f32.mrb[0].mxu0
        %2775 = vmatprep.mubr.f32.mxu0 0.0
        %v2776 = vand.u32 %v2174, 4294901760
        %2777 = vmatmul.mubr.f32.gmra.mrb[0].mxu0 %v2776
        %v2778 = vpop.f32.mrb[0].mxu0
        %v2779 = vadd.f32 %v2654, %v2778
        %v2780 = vpop.f32.mrb[0].mxu0
        %2781 = vdwg.mxu0
        %2782 = vmatprep.subr.mxu0 0.0
        %v2783 = vand.u32 %v2175, 4294901760
        %2784 = vmatpush1.msra.mxu0 %v2783
        %2785 = vmatprep.subr.mxu0 0.0
        %v2786 = vand.u32 %v2176, 4294901760
        %2787 = vmatpush1.msra.mxu0 %v2786
        %2788 = vmatprep.subr.mxu0 0.0
        %v2789 = vand.u32 %v2177, 4294901760
        %2790 = vmatpush1.msra.mxu0 %v2789
        %2791 = vmatprep.subr.mxu0 0.0
        %v2792 = vand.u32 %v2178, 4294901760
        %2793 = vmatpush1.msra.mxu0 %v2792
        %2794 = vmatprep.subr.mxu0 0.0
        %v2795 = vand.u32 %v2179, 4294901760
        %2796 = vmatpush1.msra.mxu0 %v2795
        %2797 = vmatprep.subr.mxu0 0.0
        %v2798 = vand.u32 %v2180, 4294901760
        %2799 = vmatpush1.msra.mxu0 %v2798
        %2800 = vmatprep.subr.mxu0 0.0
        %v2801 = vand.u32 %v2181, 4294901760
        %2802 = vmatpush1.msra.mxu0 %v2801
        %2803 = vmatprep.subr.mxu0 0.0
        %v2804 = vand.u32 %v2182, 4294901760
        %2805 = vmatpush1.msra.mxu0 %v2804
        %2806 = vmatprep.subr.mxu0 0.0
        %v2807 = vand.u32 %v2183, 4294901760
        %2808 = vmatpush1.msra.mxu0 %v2807
        %2809 = vmatprep.subr.mxu0 0.0
        %v2810 = vand.u32 %v2184, 4294901760
        %2811 = vmatpush1.msra.mxu0 %v2810
        %2812 = vmatprep.subr.mxu0 0.0
        %v2813 = vand.u32 %v2185, 4294901760
        %2814 = vmatpush1.msra.mxu0 %v2813
        %2815 = vmatprep.subr.mxu0 0.0
        %v2816 = vand.u32 %v2186, 4294901760
        %2817 = vmatpush1.msra.mxu0 %v2816
        %2818 = vmatprep.subr.mxu0 0.0
        %v2819 = vand.u32 %v2187, 4294901760
        %2820 = vmatpush1.msra.mxu0 %v2819
        %2821 = vmatprep.subr.mxu0 0.0
        %v2822 = vand.u32 %v2188, 4294901760
        %2823 = vmatpush1.msra.mxu0 %v2822
        %2824 = vmatprep.subr.mxu0 0.0
        %v2825 = vand.u32 %v2189, 4294901760
        %2826 = vmatpush1.msra.mxu0 %v2825
        %2827 = vmatprep.subr.mxu0 0.0
        %v2828 = vand.u32 %v2190, 4294901760
        %2829 = vmatpush1.msra.mxu0 %v2828
        %2830 = vmatprep.subr.mxu0 0.0
        %2831 = vmatpush1.msra.mxu0 0.0
        %2832 = vmatprep.subr.mxu0 0.0
        %2833 = vmatpush1.msra.mxu0 0.0
        %2834 = vmatprep.subr.mxu0 0.0
        %2835 = vmatpush1.msra.mxu0 0.0
        %2836 = vmatprep.subr.mxu0 0.0
        %2837 = vmatpush1.msra.mxu0 0.0
        %2838 = vmatprep.subr.mxu0 0.0
        %2839 = vmatpush1.msra.mxu0 0.0
        %2840 = vmatprep.subr.mxu0 0.0
        %2841 = vmatpush1.msra.mxu0 0.0
        %2842 = vmatprep.subr.mxu0 0.0
        %2843 = vmatpush1.msra.mxu0 0.0
        %2844 = vmatprep.subr.mxu0 0.0
        %2845 = vmatpush1.msra.mxu0 0.0
        %2846 = vmatprep.subr.mxu0 0.0
        %2847 = vmatpush1.msra.mxu0 0.0
        %2848 = vmatprep.subr.mxu0 0.0
        %2849 = vmatpush1.msra.mxu0 0.0
        %2850 = vmatprep.subr.mxu0 0.0
        %2851 = vmatpush1.msra.mxu0 0.0
        %2852 = vmatprep.subr.mxu0 0.0
        %2853 = vmatpush1.msra.mxu0 0.0
        %2854 = vmatprep.subr.mxu0 0.0
        %2855 = vmatpush1.msra.mxu0 0.0
        %2856 = vmatprep.subr.mxu0 0.0
        %2857 = vmatpush1.msra.mxu0 0.0
        %2858 = vmatprep.subr.mxu0 0.0
        %2859 = vmatpush1.msra.mxu0 0.0
        %2860 = vmatprep.subr.mxu0 0.0
        %2861 = vmatpush1.msra.mxu0 0.0
        %2862 = vmatprep.mubr.f32.mxu0 0.0
        %v2863 = vand.u32 %v2172, 4294901760
        %2864 = vmatmul.mubr.f32.gmra.mrb[0].mxu0 %v2863
        %v2865 = vpop.f32.mrb[0].mxu0
        %v2866 = vadd.f32 %v2773, %v2865
        %v2867 = vpop.f32.mrb[0].mxu0
        %2868 = vmatprep.mubr.f32.mxu0 0.0
        %v2869 = vand.u32 %v2174, 4294901760
        %2870 = vmatmul.mubr.f32.gmra.mrb[0].mxu0 %v2869
        %v2871 = vpop.f32.mrb[0].mxu0
        %v2872 = vadd.f32 %v2779, %v2871
        %v2873 = vpop.f32.mrb[0].mxu0
        %2874 = vdwg.mxu0
        %v2875 = vlog2.pop %v2866
        %v2876 = vmul.f32 %v2875, 0.6931472
        %v2877 = vlog2.pop %v2872
        %v2878 = vmul.f32 %v2877, 0.6931472
        %v2880 = vsel %vm1673, %v2876, 0
        %v2883 = vsel %vm1673, %v2878, 0
        %2885 = vmatprep.subr.mxu0 0.0
        %v2886 = vand.u32 %v1672, 4294901760
        %2887 = vmatpush1.msra.mxu0 %v2886
        %2888 = vmatprep.subr.mxu0 0.0
        %2889 = vmatpush1.msra.mxu0 0.0
        %2890 = vmatprep.subr.mxu0 0.0
        %2891 = vmatpush1.msra.mxu0 0.0
        %2892 = vmatprep.subr.mxu0 0.0
        %2893 = vmatpush1.msra.mxu0 0.0
        %2894 = vmatprep.subr.mxu0 0.0
        %2895 = vmatpush1.msra.mxu0 0.0
        %2896 = vmatprep.subr.mxu0 0.0
        %2897 = vmatpush1.msra.mxu0 0.0
        %2898 = vmatprep.subr.mxu0 0.0
        %2899 = vmatpush1.msra.mxu0 0.0
        %2900 = vmatprep.subr.mxu0 0.0
        %2901 = vmatpush1.msra.mxu0 0.0
        %2902 = vmatprep.subr.mxu0 0.0
        %2903 = vmatpush1.msra.mxu0 0.0
        %2904 = vmatprep.subr.mxu0 0.0
        %2905 = vmatpush1.msra.mxu0 0.0
        %2906 = vmatprep.subr.mxu0 0.0
        %2907 = vmatpush1.msra.mxu0 0.0
        %2908 = vmatprep.subr.mxu0 0.0
        %2909 = vmatpush1.msra.mxu0 0.0
        %2910 = vmatprep.subr.mxu0 0.0
        %2911 = vmatpush1.msra.mxu0 0.0
        %2912 = vmatprep.subr.mxu0 0.0
        %2913 = vmatpush1.msra.mxu0 0.0
        %2914 = vmatprep.subr.mxu0 0.0
        %2915 = vmatpush1.msra.mxu0 0.0
        %2916 = vmatprep.subr.mxu0 0.0
        %2917 = vmatpush1.msra.mxu0 0.0
        %2918 = vmatprep.subr.mxu0 0.0
        %2919 = vmatpush1.msra.mxu0 0.0
        %2920 = vmatprep.subr.mxu0 0.0
        %2921 = vmatpush1.msra.mxu0 0.0
        %2922 = vmatprep.subr.mxu0 0.0
        %2923 = vmatpush1.msra.mxu0 0.0
        %2924 = vmatprep.subr.mxu0 0.0
        %2925 = vmatpush1.msra.mxu0 0.0
        %2926 = vmatprep.subr.mxu0 0.0
        %2927 = vmatpush1.msra.mxu0 0.0
        %2928 = vmatprep.subr.mxu0 0.0
        %2929 = vmatpush1.msra.mxu0 0.0
        %2930 = vmatprep.subr.mxu0 0.0
        %2931 = vmatpush1.msra.mxu0 0.0
        %2932 = vmatprep.subr.mxu0 0.0
        %2933 = vmatpush1.msra.mxu0 0.0
        %2934 = vmatprep.subr.mxu0 0.0
        %2935 = vmatpush1.msra.mxu0 0.0
        %2936 = vmatprep.subr.mxu0 0.0
        %2937 = vmatpush1.msra.mxu0 0.0
        %2938 = vmatprep.subr.mxu0 0.0
        %2939 = vmatpush1.msra.mxu0 0.0
        %2940 = vmatprep.subr.mxu0 0.0
        %2941 = vmatpush1.msra.mxu0 0.0
        %2942 = vmatprep.subr.mxu0 0.0
        %2943 = vmatpush1.msra.mxu0 0.0
        %2944 = vmatprep.subr.mxu0 0.0
        %2945 = vmatpush1.msra.mxu0 0.0
        %2946 = vmatprep.subr.mxu0 0.0
        %2947 = vmatpush1.msra.mxu0 0.0
        %2948 = vmatprep.subr.mxu0 0.0
        %2949 = vmatpush1.msra.mxu0 0.0
        %2950 = vmatprep.mubr.f32.mxu0 0.0
        %v2951 = vand.u32 %v2880, 4294901760
        %v2952 = vsub.f32 %v2880, %v2951
        %v2953 = vand.u32 %v2952, 4294901760
        %v2954 = vsub.f32 %v2952, %v2953
        %v2955 = vand.u32 %v2954, 4294901760
        %2956 = vmatmul.mubr.f32.gmra.mrb[0].mxu0 %v2955
        %v2957 = vpop.f32.mrb[0].mxu0
        %v2958 = vadd.f32 0.0, %v2957
        %v2959 = vpop.f32.mrb[0].mxu0
        %2960 = vmatprep.mubr.f32.mxu0 0.0
        %v2961 = vand.u32 %v2883, 4294901760
        %v2962 = vsub.f32 %v2883, %v2961
        %v2963 = vand.u32 %v2962, 4294901760
        %v2964 = vsub.f32 %v2962, %v2963
        %v2965 = vand.u32 %v2964, 4294901760
        %2966 = vmatmul.mubr.f32.gmra.mrb[0].mxu0 %v2965
        %v2967 = vpop.f32.mrb[0].mxu0
        %v2968 = vadd.f32 0.0, %v2967
        %v2969 = vpop.f32.mrb[0].mxu0
        %2970 = vdwg.mxu0
        %2971 = vmatprep.subr.mxu0 0.0
        %v2972 = vand.u32 %v1672, 4294901760
        %v2973 = vsub.f32 %v1672, %v2972
        %v2974 = vand.u32 %v2973, 4294901760
        %v2975 = vsub.f32 %v2973, %v2974
        %v2976 = vand.u32 %v2975, 4294901760
        %2977 = vmatpush1.msra.mxu0 %v2976
        %2978 = vmatprep.subr.mxu0 0.0
        %2979 = vmatpush1.msra.mxu0 0.0
        %2980 = vmatprep.subr.mxu0 0.0
        %2981 = vmatpush1.msra.mxu0 0.0
        %2982 = vmatprep.subr.mxu0 0.0
        %2983 = vmatpush1.msra.mxu0 0.0
        %2984 = vmatprep.subr.mxu0 0.0
        %2985 = vmatpush1.msra.mxu0 0.0
        %2986 = vmatprep.subr.mxu0 0.0
        %2987 = vmatpush1.msra.mxu0 0.0
        %2988 = vmatprep.subr.mxu0 0.0
        %2989 = vmatpush1.msra.mxu0 0.0
        %2990 = vmatprep.subr.mxu0 0.0
        %2991 = vmatpush1.msra.mxu0 0.0
        %2992 = vmatprep.subr.mxu0 0.0
        %2993 = vmatpush1.msra.mxu0 0.0
        %2994 = vmatprep.subr.mxu0 0.0
        %2995 = vmatpush1.msra.mxu0 0.0
        %2996 = vmatprep.subr.mxu0 0.0
        %2997 = vmatpush1.msra.mxu0 0.0
        %2998 = vmatprep.subr.mxu0 0.0
        %2999 = vmatpush1.msra.mxu0 0.0
        %3000 = vmatprep.subr.mxu0 0.0
        %3001 = vmatpush1.msra.mxu0 0.0
        %3002 = vmatprep.subr.mxu0 0.0
        %3003 = vmatpush1.msra.mxu0 0.0
        %3004 = vmatprep.subr.mxu0 0.0
        %3005 = vmatpush1.msra.mxu0 0.0
        %3006 = vmatprep.subr.mxu0 0.0
        %3007 = vmatpush1.msra.mxu0 0.0
        %3008 = vmatprep.subr.mxu0 0.0
        %3009 = vmatpush1.msra.mxu0 0.0
        %3010 = vmatprep.subr.mxu0 0.0
        %3011 = vmatpush1.msra.mxu0 0.0
        %3012 = vmatprep.subr.mxu0 0.0
        %3013 = vmatpush1.msra.mxu0 0.0
        %3014 = vmatprep.subr.mxu0 0.0
        %3015 = vmatpush1.msra.mxu0 0.0
        %3016 = vmatprep.subr.mxu0 0.0
        %3017 = vmatpush1.msra.mxu0 0.0
        %3018 = vmatprep.subr.mxu0 0.0
        %3019 = vmatpush1.msra.mxu0 0.0
        %3020 = vmatprep.subr.mxu0 0.0
        %3021 = vmatpush1.msra.mxu0 0.0
        %3022 = vmatprep.subr.mxu0 0.0
        %3023 = vmatpush1.msra.mxu0 0.0
        %3024 = vmatprep.subr.mxu0 0.0
        %3025 = vmatpush1.msra.mxu0 0.0
        %3026 = vmatprep.subr.mxu0 0.0
        %3027 = vmatpush1.msra.mxu0 0.0
        %3028 = vmatprep.subr.mxu0 0.0
        %3029 = vmatpush1.msra.mxu0 0.0
        %3030 = vmatprep.subr.mxu0 0.0
        %3031 = vmatpush1.msra.mxu0 0.0
        %3032 = vmatprep.subr.mxu0 0.0
        %3033 = vmatpush1.msra.mxu0 0.0
        %3034 = vmatprep.subr.mxu0 0.0
        %3035 = vmatpush1.msra.mxu0 0.0
        %3036 = vmatprep.subr.mxu0 0.0
        %3037 = vmatpush1.msra.mxu0 0.0
        %3038 = vmatprep.subr.mxu0 0.0
        %3039 = vmatpush1.msra.mxu0 0.0
        %3040 = vmatprep.mubr.f32.mxu0 0.0
        %v3041 = vand.u32 %v2880, 4294901760
        %3042 = vmatmul.mubr.f32.gmra.mrb[0].mxu0 %v3041
        %v3043 = vpop.f32.mrb[0].mxu0
        %v3044 = vadd.f32 %v2958, %v3043
        %v3045 = vpop.f32.mrb[0].mxu0
        %3046 = vmatprep.mubr.f32.mxu0 0.0
        %v3047 = vand.u32 %v2883, 4294901760
        %3048 = vmatmul.mubr.f32.gmra.mrb[0].mxu0 %v3047
        %v3049 = vpop.f32.mrb[0].mxu0
        %v3050 = vadd.f32 %v2968, %v3049
        %v3051 = vpop.f32.mrb[0].mxu0
        %3052 = vdwg.mxu0
        %3053 = vmatprep.subr.mxu0 0.0
        %v3054 = vand.u32 %v1672, 4294901760
        %v3055 = vsub.f32 %v1672, %v3054
        %3056 = vmatpush1.msra.mxu0 %v3055
        %3057 = vmatprep.subr.mxu0 0.0
        %3058 = vmatpush1.msra.mxu0 0.0
        %3059 = vmatprep.subr.mxu0 0.0
        %3060 = vmatpush1.msra.mxu0 0.0
        %3061 = vmatprep.subr.mxu0 0.0
        %3062 = vmatpush1.msra.mxu0 0.0
        %3063 = vmatprep.subr.mxu0 0.0
        %3064 = vmatpush1.msra.mxu0 0.0
        %3065 = vmatprep.subr.mxu0 0.0
        %3066 = vmatpush1.msra.mxu0 0.0
        %3067 = vmatprep.subr.mxu0 0.0
        %3068 = vmatpush1.msra.mxu0 0.0
        %3069 = vmatprep.subr.mxu0 0.0
        %3070 = vmatpush1.msra.mxu0 0.0
        %3071 = vmatprep.subr.mxu0 0.0
        %3072 = vmatpush1.msra.mxu0 0.0
        %3073 = vmatprep.subr.mxu0 0.0
        %3074 = vmatpush1.msra.mxu0 0.0
        %3075 = vmatprep.subr.mxu0 0.0
        %3076 = vmatpush1.msra.mxu0 0.0
        %3077 = vmatprep.subr.mxu0 0.0
        %3078 = vmatpush1.msra.mxu0 0.0
        %3079 = vmatprep.subr.mxu0 0.0
        %3080 = vmatpush1.msra.mxu0 0.0
        %3081 = vmatprep.subr.mxu0 0.0
        %3082 = vmatpush1.msra.mxu0 0.0
        %3083 = vmatprep.subr.mxu0 0.0
        %3084 = vmatpush1.msra.mxu0 0.0
        %3085 = vmatprep.subr.mxu0 0.0
        %3086 = vmatpush1.msra.mxu0 0.0
        %3087 = vmatprep.subr.mxu0 0.0
        %3088 = vmatpush1.msra.mxu0 0.0
        %3089 = vmatprep.subr.mxu0 0.0
        %3090 = vmatpush1.msra.mxu0 0.0
        %3091 = vmatprep.subr.mxu0 0.0
        %3092 = vmatpush1.msra.mxu0 0.0
        %3093 = vmatprep.subr.mxu0 0.0
        %3094 = vmatpush1.msra.mxu0 0.0
        %3095 = vmatprep.subr.mxu0 0.0
        %3096 = vmatpush1.msra.mxu0 0.0
        %3097 = vmatprep.subr.mxu0 0.0
        %3098 = vmatpush1.msra.mxu0 0.0
        %3099 = vmatprep.subr.mxu0 0.0
        %3100 = vmatpush1.msra.mxu0 0.0
        %3101 = vmatprep.subr.mxu0 0.0
        %3102 = vmatpush1.msra.mxu0 0.0
        %3103 = vmatprep.subr.mxu0 0.0
        %3104 = vmatpush1.msra.mxu0 0.0
        %3105 = vmatprep.subr.mxu0 0.0
        %3106 = vmatpush1.msra.mxu0 0.0
        %3107 = vmatprep.subr.mxu0 0.0
        %3108 = vmatpush1.msra.mxu0 0.0
        %3109 = vmatprep.subr.mxu0 0.0
        %3110 = vmatpush1.msra.mxu0 0.0
        %3111 = vmatprep.subr.mxu0 0.0
        %3112 = vmatpush1.msra.mxu0 0.0
        %3113 = vmatprep.subr.mxu0 0.0
        %3114 = vmatpush1.msra.mxu0 0.0
        %3115 = vmatprep.subr.mxu0 0.0
        %3116 = vmatpush1.msra.mxu0 0.0
        %3117 = vmatprep.subr.mxu0 0.0
        %3118 = vmatpush1.msra.mxu0 0.0
        %3119 = vmatprep.mubr.f32.mxu0 0.0
        %v3120 = vand.u32 %v2880, 4294901760
        %v3121 = vsub.f32 %v2880, %v3120
        %3122 = vmatmul.mubr.f32.gmra.mrb[0].mxu0 %v3121
        %v3123 = vpop.f32.mrb[0].mxu0
        %v3124 = vadd.f32 %v3044, %v3123
        %v3125 = vpop.f32.mrb[0].mxu0
        %3126 = vmatprep.mubr.f32.mxu0 0.0
        %v3127 = vand.u32 %v2883, 4294901760
        %v3128 = vsub.f32 %v2883, %v3127
        %3129 = vmatmul.mubr.f32.gmra.mrb[0].mxu0 %v3128
        %v3130 = vpop.f32.mrb[0].mxu0
        %v3131 = vadd.f32 %v3050, %v3130
        %v3132 = vpop.f32.mrb[0].mxu0
        %3133 = vdwg.mxu0
        %3134 = vmatprep.subr.mxu0 0.0
        %v3135 = vand.u32 %v1672, 4294901760
        %3136 = vmatpush1.msra.mxu0 %v3135
        %3137 = vmatprep.subr.mxu0 0.0
        %3138 = vmatpush1.msra.mxu0 0.0
        %3139 = vmatprep.subr.mxu0 0.0
        %3140 = vmatpush1.msra.mxu0 0.0
        %3141 = vmatprep.subr.mxu0 0.0
        %3142 = vmatpush1.msra.mxu0 0.0
        %3143 = vmatprep.subr.mxu0 0.0
        %3144 = vmatpush1.msra.mxu0 0.0
        %3145 = vmatprep.subr.mxu0 0.0
        %3146 = vmatpush1.msra.mxu0 0.0
        %3147 = vmatprep.subr.mxu0 0.0
        %3148 = vmatpush1.msra.mxu0 0.0
        %3149 = vmatprep.subr.mxu0 0.0
        %3150 = vmatpush1.msra.mxu0 0.0
        %3151 = vmatprep.subr.mxu0 0.0
        %3152 = vmatpush1.msra.mxu0 0.0
        %3153 = vmatprep.subr.mxu0 0.0
        %3154 = vmatpush1.msra.mxu0 0.0
        %3155 = vmatprep.subr.mxu0 0.0
        %3156 = vmatpush1.msra.mxu0 0.0
        %3157 = vmatprep.subr.mxu0 0.0
        %3158 = vmatpush1.msra.mxu0 0.0
        %3159 = vmatprep.subr.mxu0 0.0
        %3160 = vmatpush1.msra.mxu0 0.0
        %3161 = vmatprep.subr.mxu0 0.0
        %3162 = vmatpush1.msra.mxu0 0.0
        %3163 = vmatprep.subr.mxu0 0.0
        %3164 = vmatpush1.msra.mxu0 0.0
        %3165 = vmatprep.subr.mxu0 0.0
        %3166 = vmatpush1.msra.mxu0 0.0
        %3167 = vmatprep.subr.mxu0 0.0
        %3168 = vmatpush1.msra.mxu0 0.0
        %3169 = vmatprep.subr.mxu0 0.0
        %3170 = vmatpush1.msra.mxu0 0.0
        %3171 = vmatprep.subr.mxu0 0.0
        %3172 = vmatpush1.msra.mxu0 0.0
        %3173 = vmatprep.subr.mxu0 0.0
        %3174 = vmatpush1.msra.mxu0 0.0
        %3175 = vmatprep.subr.mxu0 0.0
        %3176 = vmatpush1.msra.mxu0 0.0
        %3177 = vmatprep.subr.mxu0 0.0
        %3178 = vmatpush1.msra.mxu0 0.0
        %3179 = vmatprep.subr.mxu0 0.0
        %3180 = vmatpush1.msra.mxu0 0.0
        %3181 = vmatprep.subr.mxu0 0.0
        %3182 = vmatpush1.msra.mxu0 0.0
        %3183 = vmatprep.subr.mxu0 0.0
        %3184 = vmatpush1.msra.mxu0 0.0
        %3185 = vmatprep.subr.mxu0 0.0
        %3186 = vmatpush1.msra.mxu0 0.0
        %3187 = vmatprep.subr.mxu0 0.0
        %3188 = vmatpush1.msra.mxu0 0.0
        %3189 = vmatprep.subr.mxu0 0.0
        %3190 = vmatpush1.msra.mxu0 0.0
        %3191 = vmatprep.subr.mxu0 0.0
        %3192 = vmatpush1.msra.mxu0 0.0
        %3193 = vmatprep.subr.mxu0 0.0
        %3194 = vmatpush1.msra.mxu0 0.0
        %3195 = vmatprep.subr.mxu0 0.0
        %3196 = vmatpush1.msra.mxu0 0.0
        %3197 = vmatprep.subr.mxu0 0.0
        %3198 = vmatpush1.msra.mxu0 0.0
        %3199 = vmatprep.mubr.f32.mxu0 0.0
        %v3200 = vand.u32 %v2880, 4294901760
        %v3201 = vsub.f32 %v2880, %v3200
        %v3202 = vand.u32 %v3201, 4294901760
        %3203 = vmatmul.mubr.f32.gmra.mrb[0].mxu0 %v3202
        %v3204 = vpop.f32.mrb[0].mxu0
        %v3205 = vadd.f32 %v3124, %v3204
        %v3206 = vpop.f32.mrb[0].mxu0
        %3207 = vmatprep.mubr.f32.mxu0 0.0
        %v3208 = vand.u32 %v2883, 4294901760
        %v3209 = vsub.f32 %v2883, %v3208
        %v3210 = vand.u32 %v3209, 4294901760
        %3211 = vmatmul.mubr.f32.gmra.mrb[0].mxu0 %v3210
        %v3212 = vpop.f32.mrb[0].mxu0
        %v3213 = vadd.f32 %v3131, %v3212
        %v3214 = vpop.f32.mrb[0].mxu0
        %3215 = vdwg.mxu0
        %3216 = vmatprep.subr.mxu0 0.0
        %v3217 = vand.u32 %v1672, 4294901760
        %v3218 = vsub.f32 %v1672, %v3217
        %v3219 = vand.u32 %v3218, 4294901760
        %3220 = vmatpush1.msra.mxu0 %v3219
        %3221 = vmatprep.subr.mxu0 0.0
        %3222 = vmatpush1.msra.mxu0 0.0
        %3223 = vmatprep.subr.mxu0 0.0
        %3224 = vmatpush1.msra.mxu0 0.0
        %3225 = vmatprep.subr.mxu0 0.0
        %3226 = vmatpush1.msra.mxu0 0.0
        %3227 = vmatprep.subr.mxu0 0.0
        %3228 = vmatpush1.msra.mxu0 0.0
        %3229 = vmatprep.subr.mxu0 0.0
        %3230 = vmatpush1.msra.mxu0 0.0
        %3231 = vmatprep.subr.mxu0 0.0
        %3232 = vmatpush1.msra.mxu0 0.0
        %3233 = vmatprep.subr.mxu0 0.0
        %3234 = vmatpush1.msra.mxu0 0.0
        %3235 = vmatprep.subr.mxu0 0.0
        %3236 = vmatpush1.msra.mxu0 0.0
        %3237 = vmatprep.subr.mxu0 0.0
        %3238 = vmatpush1.msra.mxu0 0.0
        %3239 = vmatprep.subr.mxu0 0.0
        %3240 = vmatpush1.msra.mxu0 0.0
        %3241 = vmatprep.subr.mxu0 0.0
        %3242 = vmatpush1.msra.mxu0 0.0
        %3243 = vmatprep.subr.mxu0 0.0
        %3244 = vmatpush1.msra.mxu0 0.0
        %3245 = vmatprep.subr.mxu0 0.0
        %3246 = vmatpush1.msra.mxu0 0.0
        %3247 = vmatprep.subr.mxu0 0.0
        %3248 = vmatpush1.msra.mxu0 0.0
        %3249 = vmatprep.subr.mxu0 0.0
        %3250 = vmatpush1.msra.mxu0 0.0
        %3251 = vmatprep.subr.mxu0 0.0
        %3252 = vmatpush1.msra.mxu0 0.0
        %3253 = vmatprep.subr.mxu0 0.0
        %3254 = vmatpush1.msra.mxu0 0.0
        %3255 = vmatprep.subr.mxu0 0.0
        %3256 = vmatpush1.msra.mxu0 0.0
        %3257 = vmatprep.subr.mxu0 0.0
        %3258 = vmatpush1.msra.mxu0 0.0
        %3259 = vmatprep.subr.mxu0 0.0
        %3260 = vmatpush1.msra.mxu0 0.0
        %3261 = vmatprep.subr.mxu0 0.0
        %3262 = vmatpush1.msra.mxu0 0.0
        %3263 = vmatprep.subr.mxu0 0.0
        %3264 = vmatpush1.msra.mxu0 0.0
        %3265 = vmatprep.subr.mxu0 0.0
        %3266 = vmatpush1.msra.mxu0 0.0
        %3267 = vmatprep.subr.mxu0 0.0
        %3268 = vmatpush1.msra.mxu0 0.0
        %3269 = vmatprep.subr.mxu0 0.0
        %3270 = vmatpush1.msra.mxu0 0.0
        %3271 = vmatprep.subr.mxu0 0.0
        %3272 = vmatpush1.msra.mxu0 0.0
        %3273 = vmatprep.subr.mxu0 0.0
        %3274 = vmatpush1.msra.mxu0 0.0
        %3275 = vmatprep.subr.mxu0 0.0
        %3276 = vmatpush1.msra.mxu0 0.0
        %3277 = vmatprep.subr.mxu0 0.0
        %3278 = vmatpush1.msra.mxu0 0.0
        %3279 = vmatprep.subr.mxu0 0.0
        %3280 = vmatpush1.msra.mxu0 0.0
        %3281 = vmatprep.subr.mxu0 0.0
        %3282 = vmatpush1.msra.mxu0 0.0
        %3283 = vmatprep.mubr.f32.mxu0 0.0
        %v3284 = vand.u32 %v2880, 4294901760
        %3285 = vmatmul.mubr.f32.gmra.mrb[0].mxu0 %v3284
        %v3286 = vpop.f32.mrb[0].mxu0
        %v3287 = vadd.f32 %v3205, %v3286
        %v3288 = vpop.f32.mrb[0].mxu0
        %3289 = vmatprep.mubr.f32.mxu0 0.0
        %v3290 = vand.u32 %v2883, 4294901760
        %3291 = vmatmul.mubr.f32.gmra.mrb[0].mxu0 %v3290
        %v3292 = vpop.f32.mrb[0].mxu0
        %v3293 = vadd.f32 %v3213, %v3292
        %v3294 = vpop.f32.mrb[0].mxu0
        %3295 = vdwg.mxu0
        %3296 = vmatprep.subr.mxu0 0.0
        %v3297 = vand.u32 %v1672, 4294901760
        %3298 = vmatpush1.msra.mxu0 %v3297
        %3299 = vmatprep.subr.mxu0 0.0
        %3300 = vmatpush1.msra.mxu0 0.0
        %3301 = vmatprep.subr.mxu0 0.0
        %3302 = vmatpush1.msra.mxu0 0.0
        %3303 = vmatprep.subr.mxu0 0.0
        %3304 = vmatpush1.msra.mxu0 0.0
        %3305 = vmatprep.subr.mxu0 0.0
        %3306 = vmatpush1.msra.mxu0 0.0
        %3307 = vmatprep.subr.mxu0 0.0
        %3308 = vmatpush1.msra.mxu0 0.0
        %3309 = vmatprep.subr.mxu0 0.0
        %3310 = vmatpush1.msra.mxu0 0.0
        %3311 = vmatprep.subr.mxu0 0.0
        %3312 = vmatpush1.msra.mxu0 0.0
        %3313 = vmatprep.subr.mxu0 0.0
        %3314 = vmatpush1.msra.mxu0 0.0
        %3315 = vmatprep.subr.mxu0 0.0
        %3316 = vmatpush1.msra.mxu0 0.0
        %3317 = vmatprep.subr.mxu0 0.0
        %3318 = vmatpush1.msra.mxu0 0.0
        %3319 = vmatprep.subr.mxu0 0.0
        %3320 = vmatpush1.msra.mxu0 0.0
        %3321 = vmatprep.subr.mxu0 0.0
        %3322 = vmatpush1.msra.mxu0 0.0
        %3323 = vmatprep.subr.mxu0 0.0
        %3324 = vmatpush1.msra.mxu0 0.0
        %3325 = vmatprep.subr.mxu0 0.0
        %3326 = vmatpush1.msra.mxu0 0.0
        %3327 = vmatprep.subr.mxu0 0.0
        %3328 = vmatpush1.msra.mxu0 0.0
        %3329 = vmatprep.subr.mxu0 0.0
        %3330 = vmatpush1.msra.mxu0 0.0
        %3331 = vmatprep.subr.mxu0 0.0
        %3332 = vmatpush1.msra.mxu0 0.0
        %3333 = vmatprep.subr.mxu0 0.0
        %3334 = vmatpush1.msra.mxu0 0.0
        %3335 = vmatprep.subr.mxu0 0.0
        %3336 = vmatpush1.msra.mxu0 0.0
        %3337 = vmatprep.subr.mxu0 0.0
        %3338 = vmatpush1.msra.mxu0 0.0
        %3339 = vmatprep.subr.mxu0 0.0
        %3340 = vmatpush1.msra.mxu0 0.0
        %3341 = vmatprep.subr.mxu0 0.0
        %3342 = vmatpush1.msra.mxu0 0.0
        %3343 = vmatprep.subr.mxu0 0.0
        %3344 = vmatpush1.msra.mxu0 0.0
        %3345 = vmatprep.subr.mxu0 0.0
        %3346 = vmatpush1.msra.mxu0 0.0
        %3347 = vmatprep.subr.mxu0 0.0
        %3348 = vmatpush1.msra.mxu0 0.0
        %3349 = vmatprep.subr.mxu0 0.0
        %3350 = vmatpush1.msra.mxu0 0.0
        %3351 = vmatprep.subr.mxu0 0.0
        %3352 = vmatpush1.msra.mxu0 0.0
        %3353 = vmatprep.subr.mxu0 0.0
        %3354 = vmatpush1.msra.mxu0 0.0
        %3355 = vmatprep.subr.mxu0 0.0
        %3356 = vmatpush1.msra.mxu0 0.0
        %3357 = vmatprep.subr.mxu0 0.0
        %3358 = vmatpush1.msra.mxu0 0.0
        %3359 = vmatprep.subr.mxu0 0.0
        %3360 = vmatpush1.msra.mxu0 0.0
        %3361 = vmatprep.mubr.f32.mxu0 0.0
        %v3362 = vand.u32 %v2880, 4294901760
        %3363 = vmatmul.mubr.f32.gmra.mrb[0].mxu0 %v3362
        %v3364 = vpop.f32.mrb[0].mxu0
        %v3365 = vadd.f32 %v3287, %v3364
        %v3366 = vpop.f32.mrb[0].mxu0
        %3367 = vmatprep.mubr.f32.mxu0 0.0
        %v3368 = vand.u32 %v2883, 4294901760
        %3369 = vmatmul.mubr.f32.gmra.mrb[0].mxu0 %v3368
        %v3370 = vpop.f32.mrb[0].mxu0
        %v3371 = vadd.f32 %v3293, %v3370
        %v3372 = vpop.f32.mrb[0].mxu0
        %3373 = vdwg.mxu0
        %v3374 = vsub.f32 %v2169, %v3365
        %v3375 = vsub.f32 %v2170, %v3371
        %3376 = vst [vmem:[%s284] sm:$0xff] %v3374
        %3377 = vst [vmem:[%s284 + $0x8] sm:$0xff] %v3375
        %s3378 = sand.u32 %s163, 1
        %s3379 = scalar_lea.sflag [#allocation4], %s3378
        %s3380 = sand.u32 %s163, 1
        %s3381 = smul.addr %s3380, 16
        %s3382 = scalar_lea.vmem [#allocation7], %s3381
        // Predicated region
        $region53: #{tpu_custom_call.1} parent=43 // pred_check
          %p3383 = pneg %p173
        $region54: #{tpu_custom_call.1} parent=43 // pred_check_branch
          %3385 = sbr.rel (%p3383) target = $region56
        $region55: #{tpu_custom_call.1} parent=43 // pred_region
          %s3386 = smul.u32 2, %s24
          %s3388 = ssub.s32 256, 256
          %3389 = vsyncadd %s3379, %s3388
          %s3390 = smul.addr %s3386, 128
          %s3391 = scalar_lea.hbm %s6, %s3390
          %s3392 = sshll.u32 %s3382, 4
          %s3393 = int_to_ptr.vmem [resolvable:$true] %s3392
          %3398 = dma.vmem_to_hbm [thread:$0]  %s3393, 256, %s3391, %s3379, 128, 128, 8
        $region56: #{tpu_custom_call.1} parent=43 // pred_fallthru
          _
      $region44: #{tpu_custom_call.1} parent=5 // pred_fallthru
        _
      %p3399 = scmp.le.s32.totalorder 2, %s19
      // Predicated region
      $region57: #{tpu_custom_call.1} parent=5 // pred_check
        %p3400 = pneg %p3399
      $region58: #{tpu_custom_call.1} parent=5 // pred_check_branch
        %3402 = sbr.rel (%p3400) target = $region60
      $region59: #{tpu_custom_call.1} parent=5 // pred_region
        %s3403 = ssub.s32 %s19, 2
        // Predicated region
        $region61: #{tpu_custom_call.1} parent=59 // pred_check
          %p3404 = pneg %p179
        $region62: #{tpu_custom_call.1} parent=59 // pred_check_branch
          %3406 = sbr.rel (%p3404) target = $region64
        $region63: #{tpu_custom_call.1} parent=59 // pred_region
          %s3407 = sand.u32 %s164, 1
          %s3408 = scalar_lea.sflag [#allocation4], %s3407
          %s3409 = sand.u32 %s164, 1
          %s3410 = smul.addr %s3409, 16
          %s3411 = scalar_lea.vmem [#allocation7], %s3410
          %3412 = dma.done %s3408, 256
        $region64: #{tpu_custom_call.1} parent=59 // pred_fallthru
          _
      $region60: #{tpu_custom_call.1} parent=5 // pred_fallthru
        _
    $region6: #{tpu_custom_call.1} parent=1 // loop_footer
      %s23 = sadd.s32 1, %s19
    $region7: #{tpu_custom_call.1} parent=1 // loop_footer_branch
      %18 = sbr.rel target = $region3
    $region8: #{tpu_custom_call.1} parent=1 // loop_exit
      _
    %3413 = vsyncpa [#allocation3], 1
    %s3414 = scalar_lea.sflag [#allocation3], 1
    %3415 = vsyncpa %s3414, 1
    %3416 = vsyncpa [#allocation6], 1
    %3417 = vsyncpa [#allocation4], 1
    %s3418 = scalar_lea.sflag [#allocation4], 1
    %3419 = vsyncpa %s3418, 1

// kernel: tpu_custom_call.1
$region0: #{tpu_custom_call.1}
  #allocation0 [shape = 'u32[]', space=smem, size = 0x4, offset = 0x4, fixed_abs, tag = 'smem constant byte address 0x4 - core index']
  #allocation1 [shape = 'u32[144,128]{1,0:T(1,128)}', space=vmem, size = 0x12000, scoped, tag = 'internal scratch']
  %s0 = inlined_call_operand.hbm [shape: f32[32,32], index: 0, kind: input, shape index: {}]
  %s1 = inlined_call_operand.vmem [shape: f32[128,8], index: 1, kind: input, shape index: {}]
  %s2 = inlined_call_operand.vmem [shape: f32[8,128], index: 2, kind: input, shape index: {}]
  %s3 = inlined_call_operand.vmem [shape: f32[4,128], index: 3, kind: input, shape index: {}]
  %s4 = inlined_call_operand.hbm [shape: f32[32,128], index: 4, kind: input, shape index: {}]
  %s5 = inlined_call_operand.vmem [shape: f32[128,128], index: 5, kind: input, shape index: {}]
  %s6 = inlined_call_operand.hbm [shape: f32[32,128], index: 6, kind: output, shape index: {}]
  %s7 = sld [smem:[#allocation0]]
  $region65: #{tpu_custom_call.1} parent=0
    _
  %s9 = ssub.s32 1, %s7
  %s10 = scalar_select 0, %s9, %s7
  $region1: #{tpu_custom_call.1} parent=0
    #allocation2 [shape = 'u8[16384]{0}', space=vmem, size = 0x4000, scoped, tag = 'input window, operand 0']
    #allocation3 [shape = 's32[2]{0}', space=sflag, size = 0x8, scoped, tag = 'scoped memory for tpu_custom_call.1']
    #allocation4 [shape = 's32[2]{0}', space=sflag, size = 0x8, scoped, tag = 'scoped memory for tpu_custom_call.1']
    #allocation5 [shape = 'u8[16384]{0}', space=vmem, size = 0x4000, scoped, tag = 'input window, operand 4, single buffered']
    #allocation6 [shape = 's32[1]{0}', space=sflag, size = 0x4, scoped, tag = 'scoped memory for tpu_custom_call.1']
    #allocation7 [shape = 'u8[16384]{0}', space=vmem, size = 0x4000, scoped, tag = 'output window, operand 0']
    %11 = vsyncpa [#allocation3], 0
    %s12 = scalar_lea.sflag [#allocation3], 1
    %13 = vsyncpa %s12, 0
    %14 = vsyncpa [#allocation6], 0
    %15 = vsyncpa [#allocation4], 0
    %s16 = scalar_lea.sflag [#allocation4], 1
    %17 = vsyncpa %s16, 0
    loop: start=0, step=1, limit=4
    $region2: #{tpu_custom_call.1} parent=1 // loop_pre_header
      _
    $region3: #{tpu_custom_call.1} parent=1 // loop_header
      %s19 = sphi 0, %s23
      %p20 = scmp.ge.s32.totalorder %s19, 4
      %s29 = sphi 0, %s31
      %s32 = sphi 0, %s29
      %s33 = sphi 0, %s32
      %s49 = sphi 0, %s33
      %s53 = sphi 0, %s53
      %s55 = sphi 0, %s53
      %s56 = sphi 0, %s55
      %s70 = sphi 0, %s56
      %s74 = sphi 0, %s74
      %s76 = sphi 0, %s74
      %s77 = sphi 0, %s76
      %s91 = sphi 0, %s77
      %s95 = sphi 0, %s95
      %s97 = sphi 0, %s95
      %s98 = sphi 0, %s97
      %s112 = sphi 0, %s98
      %s116 = sphi 0, %s116
      %s118 = sphi 0, %s116
      %s119 = sphi 0, %s118
      %s133 = sphi 0, %s119
      %s137 = sphi 0, %s137
      %s139 = sphi 0, %s137
      %s140 = sphi 0, %s139
      %s154 = sphi 0, %s140
      %s160 = sphi 0, %s162
      %s163 = sphi 0, %s160
      %s164 = sphi 0, %s163
      %s180 = sphi 0, %s164
    $region4: #{tpu_custom_call.1} parent=1 // loop_header_branch
      %22 = sbr.rel (%p20) target = $region8
    $region5: #{tpu_custom_call.1} parent=1 // loop_body
      %s24 = ssub.s32 %s19, 1
      %s25 = ssub.s32 %s19, 2
      %s26 = sadd.s32 %s19, 1
      %s27 = ssub.s32 %s19, %s26
      %p28 = scmp.eq.s32.totalorder %s27, 0
      %s30 = sadd.s32 %s29, 1
      %s31 = scalar_select %p28, %s29, %s30
      %p34 = pneg %p28
      %p35 = scmp.eq.s32.totalorder %s19, 1
      %p36 = por %p34, %p35
      %p37 = scmp.ne.s32.totalorder %s29, %s32
      %p38 = scmp.eq.s32.totalorder %s19, 0
      %p39 = por %p37, %p38
      %p40 = scmp.ne.s32.totalorder %s29, %s32
      %p41 = scmp.eq.s32.totalorder %s24, 1
      %p42 = por %p40, %p41
      %p43 = scmp.ne.s32.totalorder %s32, %s33
      %p44 = scmp.eq.s32.totalorder %s24, 0
      %p45 = por %p43, %p44
      %p46 = scmp.ne.s32.totalorder %s32, %s33
      %p47 = scmp.eq.s32.totalorder %s25, 1
      %p48 = por %p46, %p47
      %p50 = scmp.ne.s32.totalorder %s33, %s49
      %p51 = scmp.eq.s32.totalorder %s25, 0
      %p52 = por %p50, %p51
      %s54 = sadd.s32 %s53, 1
      %p57 = scmp.eq.s32.totalorder %s19, 1
      %p58 = scmp.ne.s32.totalorder %s53, %s55
      %p59 = scmp.eq.s32.totalorder %s19, 0
      %p60 = por %p58, %p59
      %p61 = scmp.ne.s32.totalorder %s53, %s55
      %p62 = scmp.eq.s32.totalorder %s24, 1
      %p63 = por %p61, %p62
      %p64 = scmp.ne.s32.totalorder %s55, %s56
      %p65 = scmp.eq.s32.totalorder %s24, 0
      %p66 = por %p64, %p65
      %p67 = scmp.ne.s32.totalorder %s55, %s56
      %p68 = scmp.eq.s32.totalorder %s25, 1
      %p69 = por %p67, %p68
      %p71 = scmp.ne.s32.totalorder %s56, %s70
      %p72 = scmp.eq.s32.totalorder %s25, 0
      %p73 = por %p71, %p72
      %s75 = sadd.s32 %s74, 1
      %p78 = scmp.eq.s32.totalorder %s19, 1
      %p79 = scmp.ne.s32.totalorder %s74, %s76
      %p80 = scmp.eq.s32.totalorder %s19, 0
      %p81 = por %p79, %p80
      %p82 = scmp.ne.s32.totalorder %s74, %s76
      %p83 = scmp.eq.s32.totalorder %s24, 1
      %p84 = por %p82, %p83
      %p85 = scmp.ne.s32.totalorder %s76, %s77
      %p86 = scmp.eq.s32.totalorder %s24, 0
      %p87 = por %p85, %p86
      %p88 = scmp.ne.s32.totalorder %s76, %s77
      %p89 = scmp.eq.s32.totalorder %s25, 1
      %p90 = por %p88, %p89
      %p92 = scmp.ne.s32.totalorder %s77, %s91
      %p93 = scmp.eq.s32.totalorder %s25, 0
      %p94 = por %p92, %p93
      %s96 = sadd.s32 %s95, 1
      %p99 = scmp.eq.s32.totalorder %s19, 1
      %p100 = scmp.ne.s32.totalorder %s95, %s97
      %p101 = scmp.eq.s32.totalorder %s19, 0
      %p102 = por %p100, %p101
      %p103 = scmp.ne.s32.totalorder %s95, %s97
      %p104 = scmp.eq.s32.totalorder %s24, 1
      %p105 = por %p103, %p104
      %p106 = scmp.ne.s32.totalorder %s97, %s98
      %p107 = scmp.eq.s32.totalorder %s24, 0
      %p108 = por %p106, %p107
      %p109 = scmp.ne.s32.totalorder %s97, %s98
      %p110 = scmp.eq.s32.totalorder %s25, 1
      %p111 = por %p109, %p110
      %p113 = scmp.ne.s32.totalorder %s98, %s112
      %p114 = scmp.eq.s32.totalorder %s25, 0
      %p115 = por %p113, %p114
      %s117 = sadd.s32 %s116, 1
      %p120 = scmp.eq.s32.totalorder %s19, 1
      %p121 = scmp.ne.s32.totalorder %s116, %s118
      %p122 = scmp.eq.s32.totalorder %s19, 0
      %p123 = por %p121, %p122
      %p124 = scmp.ne.s32.totalorder %s116, %s118
      %p125 = scmp.eq.s32.totalorder %s24, 1
      %p126 = por %p124, %p125
      %p127 = scmp.ne.s32.totalorder %s118, %s119
      %p128 = scmp.eq.s32.totalorder %s24, 0
      %p129 = por %p127, %p128
      %p130 = scmp.ne.s32.totalorder %s118, %s119
      %p131 = scmp.eq.s32.totalorder %s25, 1
      %p132 = por %p130, %p131
      %p134 = scmp.ne.s32.totalorder %s119, %s133
      %p135 = scmp.eq.s32.totalorder %s25, 0
      %p136 = por %p134, %p135
      %s138 = sadd.s32 %s137, 1
      %p141 = scmp.eq.s32.totalorder %s19, 1
      %p142 = scmp.ne.s32.totalorder %s137, %s139
      %p143 = scmp.eq.s32.totalorder %s19, 0
      %p144 = por %p142, %p143
      %p145 = scmp.ne.s32.totalorder %s137, %s139
      %p146 = scmp.eq.s32.totalorder %s24, 1
      %p147 = por %p145, %p146
      %p148 = scmp.ne.s32.totalorder %s139, %s140
      %p149 = scmp.eq.s32.totalorder %s24, 0
      %p150 = por %p148, %p149
      %p151 = scmp.ne.s32.totalorder %s139, %s140
      %p152 = scmp.eq.s32.totalorder %s25, 1
      %p153 = por %p151, %p152
      %p155 = scmp.ne.s32.totalorder %s140, %s154
      %p156 = scmp.eq.s32.totalorder %s25, 0
      %p157 = por %p155, %p156
      %s158 = ssub.s32 %s19, %s26
      %p159 = scmp.eq.s32.totalorder %s158, 0
      %s161 = sadd.s32 %s160, 1
      %s162 = scalar_select %p159, %s160, %s161
      %p165 = pneg %p159
      %p166 = scmp.eq.s32.totalorder %s19, 1
      %p167 = por %p165, %p166
      %p168 = scmp.ne.s32.totalorder %s160, %s163
      %p169 = scmp.eq.s32.totalorder %s19, 0
      %p170 = por %p168, %p169
      %p171 = scmp.ne.s32.totalorder %s160, %s163
      %p172 = scmp.eq.s32.totalorder %s24, 1
      %p173 = por %p171, %p172
      %p174 = scmp.ne.s32.totalorder %s163, %s164
      %p175 = scmp.eq.s32.totalorder %s24, 0
      %p176 = por %p174, %p175
      %p177 = scmp.ne.s32.totalorder %s163, %s164
      %p178 = scmp.eq.s32.totalorder %s25, 1
      %p179 = por %p177, %p178
      %p181 = scmp.ne.s32.totalorder %s164, %s180
      %p182 = scmp.eq.s32.totalorder %s25, 0
      %p183 = por %p181, %p182
      %p184 = scmp.le.s32.totalorder 1, %s19
      %p185 = scmp.lt.s32.totalorder %s19, 3
      %p186 = pnand %p184, %p185
      %p187 = pneg %p186
      // Predicated region
      $region9: #{tpu_custom_call.1} parent=5 // pred_check
        _
      $region10: #{tpu_custom_call.1} parent=5 // pred_check_branch
        %189 = sbr.rel (%p186) target = $region12
      $region11: #{tpu_custom_call.1} parent=5 // pred_region
        %s190 = ssub.s32 %s19, 1
        // Predicated region
        $region13: #{tpu_custom_call.1} parent=11 // pred_check
          %p191 = pneg %p66
        $region14: #{tpu_custom_call.1} parent=11 // pred_check_branch
          %193 = sbr.rel (%p191) target = $region16
        $region15: #{tpu_custom_call.1} parent=11 // pred_region
          _
        $region16: #{tpu_custom_call.1} parent=11 // pred_fallthru
          _
        // Predicated region
        $region17: #{tpu_custom_call.1} parent=11 // pred_check
          %p194 = pneg %p87
        $region18: #{tpu_custom_call.1} parent=11 // pred_check_branch
          %196 = sbr.rel (%p194) target = $region20
        $region19: #{tpu_custom_call.1} parent=11 // pred_region
          _
        $region20: #{tpu_custom_call.1} parent=11 // pred_fallthru
          _
        // Predicated region
        $region21: #{tpu_custom_call.1} parent=11 // pred_check
          %p197 = pneg %p108
        $region22: #{tpu_custom_call.1} parent=11 // pred_check_branch
          %199 = sbr.rel (%p197) target = $region24
        $region23: #{tpu_custom_call.1} parent=11 // pred_region
          _
        $region24: #{tpu_custom_call.1} parent=11 // pred_fallthru
          _
        // Predicated region
        $region25: #{tpu_custom_call.1} parent=11 // pred_check
          %p200 = pneg %p129
        $region26: #{tpu_custom_call.1} parent=11 // pred_check_branch
          %202 = sbr.rel (%p200) target = $region28
        $region27: #{tpu_custom_call.1} parent=11 // pred_region
          %s204 = ssub.s32 512, 512
          %205 = vsyncadd [#allocation6], %s204
          %s206 = sshll.u32 [#allocation5], 4
          %s207 = int_to_ptr.vmem [resolvable:$true] %s206
          %212 = dma.hbm_to_vmem [thread:$0]  %s4, 512, %s207, [#allocation6], 128, 128, 8
        $region28: #{tpu_custom_call.1} parent=11 // pred_fallthru
          _
        // Predicated region
        $region29: #{tpu_custom_call.1} parent=11 // pred_check
          %p213 = pneg %p150
        $region30: #{tpu_custom_call.1} parent=11 // pred_check_branch
          %215 = sbr.rel (%p213) target = $region32
        $region31: #{tpu_custom_call.1} parent=11 // pred_region
          _
        $region32: #{tpu_custom_call.1} parent=11 // pred_fallthru
          _
      $region12: #{tpu_custom_call.1} parent=5 // pred_fallthru
        _
      %p216 = scmp.lt.s32.totalorder %s19, 2
      // Predicated region
      $region33: #{tpu_custom_call.1} parent=5 // pred_check
        %p217 = pneg %p216
      $region34: #{tpu_custom_call.1} parent=5 // pred_check_branch
        %219 = sbr.rel (%p217) target = $region36
      $region35: #{tpu_custom_call.1} parent=5 // pred_region
        // Predicated region
        $region37: #{tpu_custom_call.1} parent=35 // pred_check
          %p220 = pneg %p39
        $region38: #{tpu_custom_call.1} parent=35 // pred_check_branch
          %222 = sbr.rel (%p220) target = $region40
        $region39: #{tpu_custom_call.1} parent=35 // pred_region
          %s223 = sand.u32 %s29, 1
          %s224 = scalar_lea.sflag [#allocation3], %s223
          %s225 = sand.u32 %s29, 1
          %s226 = smul.addr %s225, 16
          %s227 = scalar_lea.vmem [#allocation2], %s226
          %s228 = smul.u32 2, %s19
          %s230 = ssub.s32 256, 256
          %231 = vsyncadd %s224, %s230
          %s232 = smul.addr %s228, 128
          %s233 = scalar_lea.hbm %s0, %s232
          %s234 = sshll.u32 %s227, 4
          %s235 = int_to_ptr.vmem [resolvable:$true] %s234
          %240 = dma.hbm_to_vmem [thread:$0]  %s233, 256, %s235, %s224, 128, 128, 8
        $region40: #{tpu_custom_call.1} parent=35 // pred_fallthru
          _
      $region36: #{tpu_custom_call.1} parent=5 // pred_fallthru
        _
      %p241 = scmp.le.s32.totalorder 1, %s19
      %p242 = scmp.lt.s32.totalorder %s19, 3
      %p243 = pnand %p241, %p242
      %p244 = pneg %p243
      // Predicated region
      $region41: #{tpu_custom_call.1} parent=5 // pred_check
        _
      $region42: #{tpu_custom_call.1} parent=5 // pred_check_branch
        %246 = sbr.rel (%p243) target = $region44
      $region43: #{tpu_custom_call.1} parent=5 // pred_region
        %s247 = ssub.s32 %s19, 1
        %s248 = sand.u32 %s32, 1
        %s249 = scalar_lea.sflag [#allocation3], %s248
        %s250 = sand.u32 %s32, 1
        %s251 = smul.addr %s250, 16
        %s252 = scalar_lea.vmem [#allocation2], %s251
        // Predicated region
        $region45: #{tpu_custom_call.1} parent=43 // pred_check
          %p253 = pneg %p45
        $region46: #{tpu_custom_call.1} parent=43 // pred_check_branch
          %255 = sbr.rel (%p253) target = $region48
        $region47: #{tpu_custom_call.1} parent=43 // pred_region
          %256 = dma.done %s249, 256
        $region48: #{tpu_custom_call.1} parent=43 // pred_fallthru
          _
        // Predicated region
        $region49: #{tpu_custom_call.1} parent=43 // pred_check
          %p257 = pneg %p129
        $region50: #{tpu_custom_call.1} parent=43 // pred_check_branch
          %259 = sbr.rel (%p257) target = $region52
        $region51: #{tpu_custom_call.1} parent=43 // pred_region
          %260 = dma.done [#allocation6], 512
        $region52: #{tpu_custom_call.1} parent=43 // pred_fallthru
          _
        %s261 = sand.u32 %s32, 1
        %s262 = scalar_lea.sflag [#allocation3], %s261
        %s263 = sand.u32 %s32, 1
        %s264 = smul.addr %s263, 16
        %s265 = scalar_lea.vmem [#allocation2], %s264
        %p266 = pneg %p45
        %p267 = pneg %p42
        %p268 = pneg %p66
        %p269 = pneg %p63
        %p270 = pneg %p87
        %p271 = pneg %p84
        %p272 = pneg %p108
        %p273 = pneg %p105
        %p274 = pneg %p129
        %p275 = pneg %p126
        %p276 = pneg %p150
        %p277 = pneg %p147
        %p278 = pneg %p176
        %p279 = pneg %p173
        %s280 = sand.u32 %s163, 1
        %s281 = scalar_lea.sflag [#allocation4], %s280
        %s282 = sand.u32 %s163, 1
        %s283 = smul.addr %s282, 16
        %s284 = scalar_lea.vmem [#allocation7], %s283
        %s285 = smul.u32 2, %s24
        %s286 = smul.u32 2, %s24
        %v287 = vld [vmem:[%s252] sm:$0xff]
        %v288 = vld [vmem:[%s252 + $0x8] sm:$0xff]
        %v289 = vld [vmem:[#allocation5] sm:$0xff]
        %v290 = vld [vmem:[#allocation5 + $0x8] sm:$0xff]
        %v291 = vld [vmem:[#allocation5 + $0x10] sm:$0xff]
        %v292 = vld [vmem:[#allocation5 + $0x18] sm:$0xff]
        %v293 = vld [vmem:[%s3] sm:$0x1]
        %v294 = vlaneseq
        %v295 = vshrl.u32 %v294, 7
        %v296 = vsub.s32 0, %v295
        %v297 = vrot.slane %v293, %v296
        %vm298 = vcmask 261120
        %v300 = vsel %vm298, %v287, 0
        %v303 = vsel %vm298, %v288, 0
        %305 = vmatprep.subr.mxu0 0.0
        %306 = vmatpush1.msra.mxu0 %v289
        %307 = vmatprep.subr.mxu0 0.0
        %308 = vmatpush1.msra.mxu0 %v290
        %309 = vmatprep.subr.mxu0 0.0
        %310 = vmatpush1.msra.mxu0 %v291
        %311 = vmatprep.subr.mxu0 0.0
        %312 = vmatpush1.msra.mxu0 %v292
        %313 = vmatprep.subr.mxu0 0.0
        %314 = vmatpush1.msra.mxu0 0.0
        %315 = vmatprep.subr.mxu0 0.0
        %316 = vmatpush1.msra.mxu0 0.0
        %317 = vmatprep.subr.mxu0 0.0
        %318 = vmatpush1.msra.mxu0 0.0
        %319 = vmatprep.subr.mxu0 0.0
        %320 = vmatpush1.msra.mxu0 0.0
        %321 = vmatprep.subr.mxu0 0.0
        %322 = vmatpush1.msra.mxu0 0.0
        %323 = vmatprep.subr.mxu0 0.0
        %324 = vmatpush1.msra.mxu0 0.0
        %325 = vmatprep.subr.mxu0 0.0
        %326 = vmatpush1.msra.mxu0 0.0
        %327 = vmatprep.subr.mxu0 0.0
        %328 = vmatpush1.msra.mxu0 0.0
        %329 = vmatprep.subr.mxu0 0.0
        %330 = vmatpush1.msra.mxu0 0.0
        %331 = vmatprep.subr.mxu0 0.0
        %332 = vmatpush1.msra.mxu0 0.0
        %333 = vmatprep.subr.mxu0 0.0
        %334 = vmatpush1.msra.mxu0 0.0
        %335 = vmatprep.subr.mxu0 0.0
        %336 = vmatpush1.msra.mxu0 0.0
        %337 = vmatprep.subr.mxu0 0.0
        %338 = vmatpush1.msra.mxu0 0.0
        %339 = vmatprep.subr.mxu0 0.0
        %340 = vmatpush1.msra.mxu0 0.0
        %341 = vmatprep.subr.mxu0 0.0
        %342 = vmatpush1.msra.mxu0 0.0
        %343 = vmatprep.subr.mxu0 0.0
        %344 = vmatpush1.msra.mxu0 0.0
        %345 = vmatprep.subr.mxu0 0.0
        %346 = vmatpush1.msra.mxu0 0.0
        %347 = vmatprep.subr.mxu0 0.0
        %348 = vmatpush1.msra.mxu0 0.0
        %349 = vmatprep.subr.mxu0 0.0
        %350 = vmatpush1.msra.mxu0 0.0
        %351 = vmatprep.subr.mxu0 0.0
        %352 = vmatpush1.msra.mxu0 0.0
        %353 = vmatprep.subr.mxu0 0.0
        %354 = vmatpush1.msra.mxu0 0.0
        %355 = vmatprep.subr.mxu0 0.0
        %356 = vmatpush1.msra.mxu0 0.0
        %357 = vmatprep.subr.mxu0 0.0
        %358 = vmatpush1.msra.mxu0 0.0
        %359 = vmatprep.subr.mxu0 0.0
        %360 = vmatpush1.msra.mxu0 0.0
        %361 = vmatprep.subr.mxu0 0.0
        %362 = vmatpush1.msra.mxu0 0.0
        %363 = vmatprep.subr.mxu0 0.0
        %364 = vmatpush1.msra.mxu0 0.0
        %365 = vmatprep.subr.mxu0 0.0
        %366 = vmatpush1.msra.mxu0 0.0
        %367 = vmatprep.subr.mxu0 0.0
        %368 = vmatpush1.msra.mxu0 0.0
        %369 = vmatprep.mubr.f32.mxu0 0.0
        %370 = vmatmul.mubr.f32.gmra.mrb[0].mxu0 %v300
        %v371 = vpop.f32.mrb[0].mxu0
        %v372 = vadd.f32 %v297, %v371
        %v373 = vpop.f32.mrb[0].mxu0
        %374 = vmatprep.mubr.f32.mxu0 0.0
        %375 = vmatmul.mubr.f32.gmra.mrb[0].mxu0 %v303
        %v376 = vpop.f32.mrb[0].mxu0
        %v377 = vadd.f32 %v297, %v376
        %v378 = vpop.f32.mrb[0].mxu0
        %379 = vdwg.mxu0
        %v380 = vld [vmem:[%s3 + $0x2] sm:$0x1]
        %v381 = vld [vmem:[%s3 + $0x3] sm:$0x1]
        %382 = vadd.xlane.f32.xlu0 %v372
        %v383 = vpop.xlane.xlu0 %382
        %384 = vadd.xlane.f32.xlu0 %v377
        %v385 = vpop.xlane.xlu0 %384
        %v386 = vrcp.pop 128.0
        %v387 = vmul.f32 %v383, %v386
        %v388 = vmul.f32 %v385, %v386
        %v389 = vsub.f32 %v372, %v387
        %v390 = vsub.f32 %v377, %v388
        %v391 = vmul.f32 %v389, %v389
        %v392 = vmul.f32 %v390, %v390
        %393 = vadd.xlane.f32.xlu0 %v391
        %v394 = vpop.xlane.xlu0 %393
        %395 = vadd.xlane.f32.xlu0 %v392
        %v396 = vpop.xlane.xlu0 %395
        %v397 = vmul.f32 %v394, %v386
        %v398 = vmul.f32 %v396, %v386
        %v399 = vadd.f32 %v397, 0.001
        %v400 = vadd.f32 %v398, 0.001
        %v401 = vrsqrt.pop %v399
        %v402 = vrsqrt.pop %v400
        %v403 = vmul.f32 %v389, %v401
        %v404 = vmul.f32 %v390, %v402
        %v405 = vlaneseq
        %v406 = vshrl.u32 %v405, 7
        %v407 = vsub.s32 0, %v406
        %v408 = vrot.slane %v380, %v407
        %v409 = vmul.f32 %v403, %v408
        %v410 = vmul.f32 %v404, %v408
        %v411 = vlaneseq
        %v412 = vshrl.u32 %v411, 7
        %v413 = vsub.s32 0, %v412
        %v414 = vrot.slane %v381, %v413
        %v415 = vadd.f32 %v409, %v414
        %v416 = vadd.f32 %v410, %v414
        %v417 = vxor.u32 %v415, 2147483648
        %v418 = vxor.u32 %v416, 2147483648
        %v419 = vmul.f32 %v417, 1.442695
        %v420 = vpow.pop %v419
        %v421 = vmul.f32 %v418, 1.442695
        %v422 = vpow.pop %v421
        %v423 = vadd.f32 %v420, 1.0
        %v424 = vadd.f32 %v422, 1.0
        %v425 = vrcp.pop %v423
        %v426 = vmul.f32 1.0, %v425
        %v427 = vrcp.pop %v424
        %v428 = vmul.f32 1.0, %v427
        %v429 = vmul.f32 %v415, %v426
        %v430 = vmul.f32 %v416, %v428
        %v431 = vld [vmem:[%s5] sm:$0xff]
        %v432 = vld [vmem:[%s5 + $0x8] sm:$0xff]
        %v433 = vld [vmem:[%s5 + $0x10] sm:$0xff]
        %v434 = vld [vmem:[%s5 + $0x18] sm:$0xff]
        %v435 = vld [vmem:[%s5 + $0x20] sm:$0xff]
        %v436 = vld [vmem:[%s5 + $0x28] sm:$0xff]
        %v437 = vld [vmem:[%s5 + $0x30] sm:$0xff]
        %v438 = vld [vmem:[%s5 + $0x38] sm:$0xff]
        %v439 = vld [vmem:[%s5 + $0x40] sm:$0xff]
        %v440 = vld [vmem:[%s5 + $0x48] sm:$0xff]
        %v441 = vld [vmem:[%s5 + $0x50] sm:$0xff]
        %v442 = vld [vmem:[%s5 + $0x58] sm:$0xff]
        %v443 = vld [vmem:[%s5 + $0x60] sm:$0xff]
        %v444 = vld [vmem:[%s5 + $0x68] sm:$0xff]
        %v445 = vld [vmem:[%s5 + $0x70] sm:$0xff]
        %v446 = vld [vmem:[%s5 + $0x78] sm:$0xff]
        %v447 = vld [vmem:[%s3 + $0x1] sm:$0x1]
        %v448 = vlaneseq
        %v449 = vshrl.u32 %v448, 7
        %v450 = vsub.s32 0, %v449
        %v451 = vrot.slane %v447, %v450
        %452 = vmatprep.subr.mxu0 0.0
        %453 = vmatpush1.msra.mxu0 %v431
        %454 = vmatprep.subr.mxu0 0.0
        %455 = vmatpush1.msra.mxu0 %v432
        %456 = vmatprep.subr.mxu0 0.0
        %457 = vmatpush1.msra.mxu0 %v433
        %458 = vmatprep.subr.mxu0 0.0
        %459 = vmatpush1.msra.mxu0 %v434
        %460 = vmatprep.subr.mxu0 0.0
        %461 = vmatpush1.msra.mxu0 %v435
        %462 = vmatprep.subr.mxu0 0.0
        %463 = vmatpush1.msra.mxu0 %v436
        %464 = vmatprep.subr.mxu0 0.0
        %465 = vmatpush1.msra.mxu0 %v437
        %466 = vmatprep.subr.mxu0 0.0
        %467 = vmatpush1.msra.mxu0 %v438
        %468 = vmatprep.subr.mxu0 0.0
        %469 = vmatpush1.msra.mxu0 %v439
        %470 = vmatprep.subr.mxu0 0.0
        %471 = vmatpush1.msra.mxu0 %v440
        %472 = vmatprep.subr.mxu0 0.0
        %473 = vmatpush1.msra.mxu0 %v441
        %474 = vmatprep.subr.mxu0 0.0
        %475 = vmatpush1.msra.mxu0 %v442
        %476 = vmatprep.subr.mxu0 0.0
        %477 = vmatpush1.msra.mxu0 %v443
        %478 = vmatprep.subr.mxu0 0.0
        %479 = vmatpush1.msra.mxu0 %v444
        %480 = vmatprep.subr.mxu0 0.0
        %481 = vmatpush1.msra.mxu0 %v445
        %482 = vmatprep.subr.mxu0 0.0
        %483 = vmatpush1.msra.mxu0 %v446
        %484 = vmatprep.subr.mxu0 0.0
        %485 = vmatpush1.msra.mxu0 0.0
        %486 = vmatprep.subr.mxu0 0.0
        %487 = vmatpush1.msra.mxu0 0.0
        %488 = vmatprep.subr.mxu0 0.0
        %489 = vmatpush1.msra.mxu0 0.0
        %490 = vmatprep.subr.mxu0 0.0
        %491 = vmatpush1.msra.mxu0 0.0
        %492 = vmatprep.subr.mxu0 0.0
        %493 = vmatpush1.msra.mxu0 0.0
        %494 = vmatprep.subr.mxu0 0.0
        %495 = vmatpush1.msra.mxu0 0.0
        %496 = vmatprep.subr.mxu0 0.0
        %497 = vmatpush1.msra.mxu0 0.0
        %498 = vmatprep.subr.mxu0 0.0
        %499 = vmatpush1.msra.mxu0 0.0
        %500 = vmatprep.subr.mxu0 0.0
        %501 = vmatpush1.msra.mxu0 0.0
        %502 = vmatprep.subr.mxu0 0.0
        %503 = vmatpush1.msra.mxu0 0.0
        %504 = vmatprep.subr.mxu0 0.0
        %505 = vmatpush1.msra.mxu0 0.0
        %506 = vmatprep.subr.mxu0 0.0
        %507 = vmatpush1.msra.mxu0 0.0
        %508 = vmatprep.subr.mxu0 0.0
        %509 = vmatpush1.msra.mxu0 0.0
        %510 = vmatprep.subr.mxu0 0.0
        %511 = vmatpush1.msra.mxu0 0.0
        %512 = vmatprep.subr.mxu0 0.0
        %513 = vmatpush1.msra.mxu0 0.0
        %514 = vmatprep.subr.mxu0 0.0
        %515 = vmatpush1.msra.mxu0 0.0
        %516 = vmatprep.mubr.f32.mxu0 0.0
        %517 = vmatmul.mubr.f32.gmra.mrb[0].mxu0 %v429
        %v518 = vpop.f32.mrb[0].mxu0
        %v519 = vadd.f32 %v451, %v518
        %v520 = vpop.f32.mrb[0].mxu0
        %521 = vmatprep.mubr.f32.mxu0 0.0
        %522 = vmatmul.mubr.f32.gmra.mrb[0].mxu0 %v430
        %v523 = vpop.f32.mrb[0].mxu0
        %v524 = vadd.f32 %v451, %v523
        %v525 = vpop.f32.mrb[0].mxu0
        %526 = vdwg.mxu0
        %v527 = vlaneseq
        %v528 = vand.u32 %v527, 127
        %v529 = vshra.s32 %v528, 4
        %vm530 = vcmp.eq.s32.totalorder %v529, 0
        %v531 = vsel %vm530, %v519, -inf
        %v532 = vsel %vm530, %v524, -inf
        %533 = vmax.xlane.f32.xlu0 %v531
        %v534 = vpop.xlane.xlu0 %533
        %535 = vmax.xlane.f32.xlu0 %v532
        %v536 = vpop.xlane.xlu0 %535
        %vm537 = vcmp.eq.s32.totalorder %v528, 0
        %v538 = vsel %vm537, %v534, 0.0
        %v539 = vsel %vm537, %v536, 0.0
        %vm540 = vcmp.eq.s32.totalorder %v529, 1
        %v541 = vsel %vm540, %v519, -inf
        %v542 = vsel %vm540, %v524, -inf
        %543 = vmax.xlane.f32.xlu0 %v541
        %v544 = vpop.xlane.xlu0 %543
        %545 = vmax.xlane.f32.xlu0 %v542
        %v546 = vpop.xlane.xlu0 %545
        %vm547 = vcmp.eq.s32.totalorder %v528, 1
        %v548 = vsel %vm547, %v544, %v538
        %v549 = vsel %vm547, %v546, %v539
        %vm550 = vcmp.eq.s32.totalorder %v529, 2
        %v551 = vsel %vm550, %v519, -inf
        %v552 = vsel %vm550, %v524, -inf
        %553 = vmax.xlane.f32.xlu0 %v551
        %v554 = vpop.xlane.xlu0 %553
        %555 = vmax.xlane.f32.xlu0 %v552
        %v556 = vpop.xlane.xlu0 %555
        %vm557 = vcmp.eq.s32.totalorder %v528, 2
        %v558 = vsel %vm557, %v554, %v548
        %v559 = vsel %vm557, %v556, %v549
        %vm560 = vcmp.eq.s32.totalorder %v529, 3
        %v561 = vsel %vm560, %v519, -inf
        %v562 = vsel %vm560, %v524, -inf
        %563 = vmax.xlane.f32.xlu0 %v561
        %v564 = vpop.xlane.xlu0 %563
        %565 = vmax.xlane.f32.xlu0 %v562
        %v566 = vpop.xlane.xlu0 %565
        %vm567 = vcmp.eq.s32.totalorder %v528, 3
        %v568 = vsel %vm567, %v564, %v558
        %v569 = vsel %vm567, %v566, %v559
        %vm570 = vcmp.eq.s32.totalorder %v529, 4
        %v571 = vsel %vm570, %v519, -inf
        %v572 = vsel %vm570, %v524, -inf
        %573 = vmax.xlane.f32.xlu0 %v571
        %v574 = vpop.xlane.xlu0 %573
        %575 = vmax.xlane.f32.xlu0 %v572
        %v576 = vpop.xlane.xlu0 %575
        %vm577 = vcmp.eq.s32.totalorder %v528, 4
        %v578 = vsel %vm577, %v574, %v568
        %v579 = vsel %vm577, %v576, %v569
        %vm580 = vcmp.eq.s32.totalorder %v529, 5
        %v581 = vsel %vm580, %v519, -inf
        %v582 = vsel %vm580, %v524, -inf
        %583 = vmax.xlane.f32.xlu0 %v581
        %v584 = vpop.xlane.xlu0 %583
        %585 = vmax.xlane.f32.xlu0 %v582
        %v586 = vpop.xlane.xlu0 %585
        %vm587 = vcmp.eq.s32.totalorder %v528, 5
        %v588 = vsel %vm587, %v584, %v578
        %v589 = vsel %vm587, %v586, %v579
        %vm590 = vcmp.eq.s32.totalorder %v529, 6
        %v591 = vsel %vm590, %v519, -inf
        %v592 = vsel %vm590, %v524, -inf
        %593 = vmax.xlane.f32.xlu0 %v591
        %v594 = vpop.xlane.xlu0 %593
        %595 = vmax.xlane.f32.xlu0 %v592
        %v596 = vpop.xlane.xlu0 %595
        %vm597 = vcmp.eq.s32.totalorder %v528, 6
        %v598 = vsel %vm597, %v594, %v588
        %v599 = vsel %vm597, %v596, %v589
        %vm600 = vcmp.eq.s32.totalorder %v529, 7
        %v601 = vsel %vm600, %v519, -inf
        %v602 = vsel %vm600, %v524, -inf
        %603 = vmax.xlane.f32.xlu0 %v601
        %v604 = vpop.xlane.xlu0 %603
        %605 = vmax.xlane.f32.xlu0 %v602
        %v606 = vpop.xlane.xlu0 %605
        %vm607 = vcmp.eq.s32.totalorder %v528, 7
        %v608 = vsel %vm607, %v604, %v598
        %v609 = vsel %vm607, %v606, %v599
        %v610 = vld [vmem:[%s2] sm:$0xff]
        %vm611 = vcmask 64512
        %v613 = vsel %vm611, %v608, 0
        %v616 = vsel %vm611, %v609, 0
        %618 = vmatprep.subr.mxu0 0.0
        %619 = vmatpush1.msra.mxu0 %v610
        %620 = vmatprep.subr.mxu0 0.0
        %621 = vmatpush1.msra.mxu0 0.0
        %622 = vmatprep.subr.mxu0 0.0
        %623 = vmatpush1.msra.mxu0 0.0
        %624 = vmatprep.subr.mxu0 0.0
        %625 = vmatpush1.msra.mxu0 0.0
        %626 = vmatprep.subr.mxu0 0.0
        %627 = vmatpush1.msra.mxu0 0.0
        %628 = vmatprep.subr.mxu0 0.0
        %629 = vmatpush1.msra.mxu0 0.0
        %630 = vmatprep.subr.mxu0 0.0
        %631 = vmatpush1.msra.mxu0 0.0
        %632 = vmatprep.subr.mxu0 0.0
        %633 = vmatpush1.msra.mxu0 0.0
        %634 = vmatprep.subr.mxu0 0.0
        %635 = vmatpush1.msra.mxu0 0.0
        %636 = vmatprep.subr.mxu0 0.0
        %637 = vmatpush1.msra.mxu0 0.0
        %638 = vmatprep.subr.mxu0 0.0
        %639 = vmatpush1.msra.mxu0 0.0
        %640 = vmatprep.subr.mxu0 0.0
        %641 = vmatpush1.msra.mxu0 0.0
        %642 = vmatprep.subr.mxu0 0.0
        %643 = vmatpush1.msra.mxu0 0.0
        %644 = vmatprep.subr.mxu0 0.0
        %645 = vmatpush1.msra.mxu0 0.0
        %646 = vmatprep.subr.mxu0 0.0
        %647 = vmatpush1.msra.mxu0 0.0
        %648 = vmatprep.subr.mxu0 0.0
        %649 = vmatpush1.msra.mxu0 0.0
        %650 = vmatprep.subr.mxu0 0.0
        %651 = vmatpush1.msra.mxu0 0.0
        %652 = vmatprep.subr.mxu0 0.0
        %653 = vmatpush1.msra.mxu0 0.0
        %654 = vmatprep.subr.mxu0 0.0
        %655 = vmatpush1.msra.mxu0 0.0
        %656 = vmatprep.subr.mxu0 0.0
        %657 = vmatpush1.msra.mxu0 0.0
        %658 = vmatprep.subr.mxu0 0.0
        %659 = vmatpush1.msra.mxu0 0.0
        %660 = vmatprep.subr.mxu0 0.0
        %661 = vmatpush1.msra.mxu0 0.0
        %662 = vmatprep.subr.mxu0 0.0
        %663 = vmatpush1.msra.mxu0 0.0
        %664 = vmatprep.subr.mxu0 0.0
        %665 = vmatpush1.msra.mxu0 0.0
        %666 = vmatprep.subr.mxu0 0.0
        %667 = vmatpush1.msra.mxu0 0.0
        %668 = vmatprep.subr.mxu0 0.0
        %669 = vmatpush1.msra.mxu0 0.0
        %670 = vmatprep.subr.mxu0 0.0
        %671 = vmatpush1.msra.mxu0 0.0
        %672 = vmatprep.subr.mxu0 0.0
        %673 = vmatpush1.msra.mxu0 0.0
        %674 = vmatprep.subr.mxu0 0.0
        %675 = vmatpush1.msra.mxu0 0.0
        %676 = vmatprep.subr.mxu0 0.0
        %677 = vmatpush1.msra.mxu0 0.0
        %678 = vmatprep.subr.mxu0 0.0
        %679 = vmatpush1.msra.mxu0 0.0
        %680 = vmatprep.subr.mxu0 0.0
        %681 = vmatpush1.msra.mxu0 0.0
        %682 = vmatprep.mubr.f32.mxu0 0.0
        %683 = vmatmul.mubr.f32.gmra.mrb[0].mxu0 %v613
        %v684 = vpop.f32.mrb[0].mxu0
        %v685 = vadd.f32 0.0, %v684
        %v686 = vpop.f32.mrb[0].mxu0
        %687 = vmatprep.mubr.f32.mxu0 0.0
        %688 = vmatmul.mubr.f32.gmra.mrb[0].mxu0 %v616
        %v689 = vpop.f32.mrb[0].mxu0
        %v690 = vadd.f32 0.0, %v689
        %v691 = vpop.f32.mrb[0].mxu0
        %692 = vdwg.mxu0
        %v693 = vsub.f32 %v519, %v685
        %v694 = vsub.f32 %v524, %v690
        %v695 = vmul.f32 %v693, 1.442695
        %v696 = vpow.pop %v695
        %v697 = vmul.f32 %v694, 1.442695
        %v698 = vpow.pop %v697
        %v699 = vld [vmem:[%s1] sm:$0xff]
        %v700 = vld [vmem:[%s1 + $0x8] sm:$0xff]
        %v701 = vld [vmem:[%s1 + $0x10] sm:$0xff]
        %v702 = vld [vmem:[%s1 + $0x18] sm:$0xff]
        %v703 = vld [vmem:[%s1 + $0x20] sm:$0xff]
        %v704 = vld [vmem:[%s1 + $0x28] sm:$0xff]
        %v705 = vld [vmem:[%s1 + $0x30] sm:$0xff]
        %v706 = vld [vmem:[%s1 + $0x38] sm:$0xff]
        %v707 = vld [vmem:[%s1 + $0x40] sm:$0xff]
        %v708 = vld [vmem:[%s1 + $0x48] sm:$0xff]
        %v709 = vld [vmem:[%s1 + $0x50] sm:$0xff]
        %v710 = vld [vmem:[%s1 + $0x58] sm:$0xff]
        %v711 = vld [vmem:[%s1 + $0x60] sm:$0xff]
        %v712 = vld [vmem:[%s1 + $0x68] sm:$0xff]
        %v713 = vld [vmem:[%s1 + $0x70] sm:$0xff]
        %v714 = vld [vmem:[%s1 + $0x78] sm:$0xff]
        %715 = vmatprep.subr.mxu0 0.0
        %716 = vmatpush1.msra.mxu0 %v699
        %717 = vmatprep.subr.mxu0 0.0
        %718 = vmatpush1.msra.mxu0 %v700
        %719 = vmatprep.subr.mxu0 0.0
        %720 = vmatpush1.msra.mxu0 %v701
        %721 = vmatprep.subr.mxu0 0.0
        %722 = vmatpush1.msra.mxu0 %v702
        %723 = vmatprep.subr.mxu0 0.0
        %724 = vmatpush1.msra.mxu0 %v703
        %725 = vmatprep.subr.mxu0 0.0
        %726 = vmatpush1.msra.mxu0 %v704
        %727 = vmatprep.subr.mxu0 0.0
        %728 = vmatpush1.msra.mxu0 %v705
        %729 = vmatprep.subr.mxu0 0.0
        %730 = vmatpush1.msra.mxu0 %v706
        %731 = vmatprep.subr.mxu0 0.0
        %732 = vmatpush1.msra.mxu0 %v707
        %733 = vmatprep.subr.mxu0 0.0
        %734 = vmatpush1.msra.mxu0 %v708
        %735 = vmatprep.subr.mxu0 0.0
        %736 = vmatpush1.msra.mxu0 %v709
        %737 = vmatprep.subr.mxu0 0.0
        %738 = vmatpush1.msra.mxu0 %v710
        %739 = vmatprep.subr.mxu0 0.0
        %740 = vmatpush1.msra.mxu0 %v711
        %741 = vmatprep.subr.mxu0 0.0
        %742 = vmatpush1.msra.mxu0 %v712
        %743 = vmatprep.subr.mxu0 0.0
        %744 = vmatpush1.msra.mxu0 %v713
        %745 = vmatprep.subr.mxu0 0.0
        %746 = vmatpush1.msra.mxu0 %v714
        %747 = vmatprep.subr.mxu0 0.0
        %748 = vmatpush1.msra.mxu0 0.0
        %749 = vmatprep.subr.mxu0 0.0
        %750 = vmatpush1.msra.mxu0 0.0
        %751 = vmatprep.subr.mxu0 0.0
        %752 = vmatpush1.msra.mxu0 0.0
        %753 = vmatprep.subr.mxu0 0.0
        %754 = vmatpush1.msra.mxu0 0.0
        %755 = vmatprep.subr.mxu0 0.0
        %756 = vmatpush1.msra.mxu0 0.0
        %757 = vmatprep.subr.mxu0 0.0
        %758 = vmatpush1.msra.mxu0 0.0
        %759 = vmatprep.subr.mxu0 0.0
        %760 = vmatpush1.msra.mxu0 0.0
        %761 = vmatprep.subr.mxu0 0.0
        %762 = vmatpush1.msra.mxu0 0.0
        %763 = vmatprep.subr.mxu0 0.0
        %764 = vmatpush1.msra.mxu0 0.0
        %765 = vmatprep.subr.mxu0 0.0
        %766 = vmatpush1.msra.mxu0 0.0
        %767 = vmatprep.subr.mxu0 0.0
        %768 = vmatpush1.msra.mxu0 0.0
        %769 = vmatprep.subr.mxu0 0.0
        %770 = vmatpush1.msra.mxu0 0.0
        %771 = vmatprep.subr.mxu0 0.0
        %772 = vmatpush1.msra.mxu0 0.0
        %773 = vmatprep.subr.mxu0 0.0
        %774 = vmatpush1.msra.mxu0 0.0
        %775 = vmatprep.subr.mxu0 0.0
        %776 = vmatpush1.msra.mxu0 0.0
        %777 = vmatprep.subr.mxu0 0.0
        %778 = vmatpush1.msra.mxu0 0.0
        %779 = vmatprep.mubr.f32.mxu0 0.0
        %780 = vmatmul.mubr.f32.gmra.mrb[0].mxu0 %v696
        %v781 = vpop.f32.mrb[0].mxu0
        %v782 = vadd.f32 0.0, %v781
        %v783 = vpop.f32.mrb[0].mxu0
        %784 = vmatprep.mubr.f32.mxu0 0.0
        %785 = vmatmul.mubr.f32.gmra.mrb[0].mxu0 %v698
        %v786 = vpop.f32.mrb[0].mxu0
        %v787 = vadd.f32 0.0, %v786
        %v788 = vpop.f32.mrb[0].mxu0
        %789 = vdwg.mxu0
        %v790 = vlog2.pop %v782
        %v791 = vmul.f32 %v790, 0.6931472
        %v792 = vlog2.pop %v787
        %v793 = vmul.f32 %v792, 0.6931472
        %v795 = vsel %vm611, %v791, 0
        %v798 = vsel %vm611, %v793, 0
        %800 = vmatprep.subr.mxu0 0.0
        %801 = vmatpush1.msra.mxu0 %v610
        %802 = vmatprep.subr.mxu0 0.0
        %803 = vmatpush1.msra.mxu0 0.0
        %804 = vmatprep.subr.mxu0 0.0
        %805 = vmatpush1.msra.mxu0 0.0
        %806 = vmatprep.subr.mxu0 0.0
        %807 = vmatpush1.msra.mxu0 0.0
        %808 = vmatprep.subr.mxu0 0.0
        %809 = vmatpush1.msra.mxu0 0.0
        %810 = vmatprep.subr.mxu0 0.0
        %811 = vmatpush1.msra.mxu0 0.0
        %812 = vmatprep.subr.mxu0 0.0
        %813 = vmatpush1.msra.mxu0 0.0
        %814 = vmatprep.subr.mxu0 0.0
        %815 = vmatpush1.msra.mxu0 0.0
        %816 = vmatprep.subr.mxu0 0.0
        %817 = vmatpush1.msra.mxu0 0.0
        %818 = vmatprep.subr.mxu0 0.0
        %819 = vmatpush1.msra.mxu0 0.0
        %820 = vmatprep.subr.mxu0 0.0
        %821 = vmatpush1.msra.mxu0 0.0
        %822 = vmatprep.subr.mxu0 0.0
        %823 = vmatpush1.msra.mxu0 0.0
        %824 = vmatprep.subr.mxu0 0.0
        %825 = vmatpush1.msra.mxu0 0.0
        %826 = vmatprep.subr.mxu0 0.0
        %827 = vmatpush1.msra.mxu0 0.0
        %828 = vmatprep.subr.mxu0 0.0
        %829 = vmatpush1.msra.mxu0 0.0
        %830 = vmatprep.subr.mxu0 0.0
        %831 = vmatpush1.msra.mxu0 0.0
        %832 = vmatprep.subr.mxu0 0.0
        %833 = vmatpush1.msra.mxu0 0.0
        %834 = vmatprep.subr.mxu0 0.0
        %835 = vmatpush1.msra.mxu0 0.0
        %836 = vmatprep.subr.mxu0 0.0
        %837 = vmatpush1.msra.mxu0 0.0
        %838 = vmatprep.subr.mxu0 0.0
        %839 = vmatpush1.msra.mxu0 0.0
        %840 = vmatprep.subr.mxu0 0.0
        %841 = vmatpush1.msra.mxu0 0.0
        %842 = vmatprep.subr.mxu0 0.0
        %843 = vmatpush1.msra.mxu0 0.0
        %844 = vmatprep.subr.mxu0 0.0
        %845 = vmatpush1.msra.mxu0 0.0
        %846 = vmatprep.subr.mxu0 0.0
        %847 = vmatpush1.msra.mxu0 0.0
        %848 = vmatprep.subr.mxu0 0.0
        %849 = vmatpush1.msra.mxu0 0.0
        %850 = vmatprep.subr.mxu0 0.0
        %851 = vmatpush1.msra.mxu0 0.0
        %852 = vmatprep.subr.mxu0 0.0
        %853 = vmatpush1.msra.mxu0 0.0
        %854 = vmatprep.subr.mxu0 0.0
        %855 = vmatpush1.msra.mxu0 0.0
        %856 = vmatprep.subr.mxu0 0.0
        %857 = vmatpush1.msra.mxu0 0.0
        %858 = vmatprep.subr.mxu0 0.0
        %859 = vmatpush1.msra.mxu0 0.0
        %860 = vmatprep.subr.mxu0 0.0
        %861 = vmatpush1.msra.mxu0 0.0
        %862 = vmatprep.subr.mxu0 0.0
        %863 = vmatpush1.msra.mxu0 0.0
        %864 = vmatprep.mubr.f32.mxu0 0.0
        %865 = vmatmul.mubr.f32.gmra.mrb[0].mxu0 %v795
        %v866 = vpop.f32.mrb[0].mxu0
        %v867 = vadd.f32 0.0, %v866
        %v868 = vpop.f32.mrb[0].mxu0
        %869 = vmatprep.mubr.f32.mxu0 0.0
        %870 = vmatmul.mubr.f32.gmra.mrb[0].mxu0 %v798
        %v871 = vpop.f32.mrb[0].mxu0
        %v872 = vadd.f32 0.0, %v871
        %v873 = vpop.f32.mrb[0].mxu0
        %874 = vdwg.mxu0
        %v875 = vsub.f32 %v693, %v867
        %v876 = vsub.f32 %v694, %v872
        %877 = vst [vmem:[%s284] sm:$0xff] %v875
        %878 = vst [vmem:[%s284 + $0x8] sm:$0xff] %v876
        %s879 = sand.u32 %s163, 1
        %s880 = scalar_lea.sflag [#allocation4], %s879
        %s881 = sand.u32 %s163, 1
        %s882 = smul.addr %s881, 16
        %s883 = scalar_lea.vmem [#allocation7], %s882
        // Predicated region
        $region53: #{tpu_custom_call.1} parent=43 // pred_check
          %p884 = pneg %p173
        $region54: #{tpu_custom_call.1} parent=43 // pred_check_branch
          %886 = sbr.rel (%p884) target = $region56
        $region55: #{tpu_custom_call.1} parent=43 // pred_region
          %s887 = smul.u32 2, %s24
          %s889 = ssub.s32 256, 256
          %890 = vsyncadd %s880, %s889
          %s891 = smul.addr %s887, 128
          %s892 = scalar_lea.hbm %s6, %s891
          %s893 = sshll.u32 %s883, 4
          %s894 = int_to_ptr.vmem [resolvable:$true] %s893
          %899 = dma.vmem_to_hbm [thread:$0]  %s894, 256, %s892, %s880, 128, 128, 8
        $region56: #{tpu_custom_call.1} parent=43 // pred_fallthru
          _
      $region44: #{tpu_custom_call.1} parent=5 // pred_fallthru
        _
      %p900 = scmp.le.s32.totalorder 2, %s19
      // Predicated region
      $region57: #{tpu_custom_call.1} parent=5 // pred_check
        %p901 = pneg %p900
      $region58: #{tpu_custom_call.1} parent=5 // pred_check_branch
        %903 = sbr.rel (%p901) target = $region60
      $region59: #{tpu_custom_call.1} parent=5 // pred_region
        %s904 = ssub.s32 %s19, 2
        // Predicated region
        $region61: #{tpu_custom_call.1} parent=59 // pred_check
          %p905 = pneg %p179
        $region62: #{tpu_custom_call.1} parent=59 // pred_check_branch
          %907 = sbr.rel (%p905) target = $region64
        $region63: #{tpu_custom_call.1} parent=59 // pred_region
          %s908 = sand.u32 %s164, 1
          %s909 = scalar_lea.sflag [#allocation4], %s908
          %s910 = sand.u32 %s164, 1
          %s911 = smul.addr %s910, 16
          %s912 = scalar_lea.vmem [#allocation7], %s911
          %913 = dma.done %s909, 256
        $region64: #{tpu_custom_call.1} parent=59 // pred_fallthru
          _
      $region60: #{tpu_custom_call.1} parent=5 // pred_fallthru
        _
    $region6: #{tpu_custom_call.1} parent=1 // loop_footer
      %s23 = sadd.s32 1, %s19
    $region7: #{tpu_custom_call.1} parent=1 // loop_footer_branch
      %18 = sbr.rel target = $region3
    $region8: #{tpu_custom_call.1} parent=1 // loop_exit
      _
    %914 = vsyncpa [#allocation3], 1
    %s915 = scalar_lea.sflag [#allocation3], 1
    %916 = vsyncpa %s915, 1
    %917 = vsyncpa [#allocation6], 1
    %918 = vsyncpa [#allocation4], 1
    %s919 = scalar_lea.sflag [#allocation4], 1
    %920 = vsyncpa %s919, 1

</llo_original>
